<compile_context>
chip_gen: v6e
topology: v6e:2x2x1
jax: 0.10.0
libtpu: 0.0.40
codegen_flags: <defaults>
</compile_context>

<pallas_src>
import functools

import jax
import jax.numpy as jnp
from jax.experimental import pallas as pl
from jax.experimental.pallas import tpu as pltpu

CPAD = 128          # lane-dense padded channel width carried through the backbone
NUM_CLASSES = 5


def _roundup(n, m):
    return ((n + m - 1) // m) * m


def _pick_tile(m):
    """Largest 8-aligned row tile that still gives >=2 grid blocks."""
    for t in (512, 256, 128, 64, 32, 16, 8):
        if t < m and m % t == 0:
            return t
    return m


def _silu(x):
    return x * jax.nn.sigmoid(x)


# ----------------------------------------------------------------------------
# Kernels
# ----------------------------------------------------------------------------
def _conv3x3_taps(src_ref, w_ref, H, W, lead=None):
    """Stride-1 3x3 conv as 9 accumulated taps read from a VMEM ref.

    src_ref: [Hp, Wp, Cin] (or [1, Hp, Wp, Cin] with lead=0), spatially
    zero-padded.  w_ref: [9, Cin, Cout] (bf16).  Returns [H*W, Cout] f32.
    """
    cout = w_ref.shape[-1]
    acc = jnp.zeros((H * W, cout), jnp.float32)
    for t in range(9):
        di, dj = t // 3, t % 3
        if lead is None:
            win = src_ref[di:di + H, dj:dj + W, :]
        else:
            win = src_ref[lead, di:di + H, dj:dj + W, :]
        win = win.reshape(H * W, win.shape[-1]).astype(jnp.bfloat16)
        acc = acc + jnp.dot(win, w_ref[t], preferred_element_type=jnp.float32)
    return acc


def stem_kernel(x_ref, w_ref, s_ref, b_ref, o_ref, *, H, W):
    """conv_stem 3x3 (stride handled by caller via subsample) + bn1 + SiLU."""
    y = _conv3x3_taps(x_ref, w_ref, H, W, lead=0)
    y = y * s_ref[...] + b_ref[...]
    o_ref[...] = _silu(y).astype(o_ref.dtype)


def mbconv_kernel(x_ref, we_ref, es_ref, eb_ref, wc_ref, cs_ref, cb_ref,
                  pw_ref, ps_ref, pb_ref, o_ref, h_ref, *, H, W, residual):
    """One fused MBConv block: expand 1x1 -> 3x3 conv (9 taps) -> project (+res).

    All intermediates stay in VMEM; the 3x3 conv is computed at stride 1 and,
    for strided blocks, subsampled by the caller.
    """
    Hp, Wp, cin = x_ref.shape[1], x_ref.shape[2], x_ref.shape[3]

    # ---- expand 1x1 + BN + SiLU over the spatially padded map ----
    x2 = x_ref[0].reshape(Hp * Wp, cin).astype(jnp.bfloat16)
    h = jnp.dot(x2, we_ref[...], preferred_element_type=jnp.float32)
    h = _silu(h * es_ref[...] + eb_ref[...])
    # Zero the padding border so the 3x3 conv sees proper zero padding.
    r = jax.lax.broadcasted_iota(jnp.int32, (Hp * Wp, 1), 0)
    row = r // Wp
    col = r % Wp
    interior = (row >= 1) & (row <= H) & (col >= 1) & (col <= W)
    h = jnp.where(interior, h, 0.0)
    h_ref[...] = h.reshape(Hp, Wp, h.shape[-1])

    # ---- 3x3 conv via 9-tap accumulation + BN + SiLU ----
    c = _conv3x3_taps(h_ref, wc_ref, H, W)
    c = _silu(c * cs_ref[...] + cb_ref[...])

    # ---- project 1x1 + BN (no activation) [+ residual] ----
    p = jnp.dot(c.astype(jnp.bfloat16), pw_ref[...],
                preferred_element_type=jnp.float32)
    p = p * ps_ref[...] + pb_ref[...]
    if residual:
        xres = x_ref[0, 1:H + 1, 1:W + 1, :]        # unpadded block input
        p = p + xres.reshape(H * W, cin)
    o_ref[...] = p.astype(o_ref.dtype)


def mixup_kernel(lam_ref, x_ref, xp_ref, o_ref):
    lam = lam_ref[...]
    o_ref[...] = x_ref[...] * lam + xp_ref[...] * (1.0 - lam)


def head_kernel(x_ref, wh_ref, hs_ref, hb_ref, wc_ref, cb_ref,
                feats_ref, logits_ref, *, batch):
    """conv_head 1x1 + bn2 + SiLU + AdaptiveAvgPool2d((1,1)) + classifier."""
    x = x_ref[...].astype(jnp.bfloat16)                           # [B*HW, C]
    h = jnp.dot(x, wh_ref[...], preferred_element_type=jnp.float32)
    feats = _silu(h * hs_ref[...] + hb_ref[...])
    feats_ref[...] = feats.astype(feats_ref.dtype)
    hw = x_ref.shape[0] // batch
    pooled = jnp.mean(feats.reshape(batch, hw, feats.shape[-1]), axis=1)
    logits = jnp.dot(pooled.astype(jnp.bfloat16), wc_ref[...],
                     preferred_element_type=jnp.float32) + cb_ref[...]
    logits_ref[...] = logits.astype(logits_ref.dtype)


# ----------------------------------------------------------------------------
# pallas_call wrappers
# ----------------------------------------------------------------------------
def stem_conv(xpad, w_taps, scale, shift, *, H, W):
    B, Hp, Wp, Cin = xpad.shape
    cout = w_taps.shape[-1]
    kernel = functools.partial(stem_kernel, H=H, W=W)
    return pl.pallas_call(
        kernel,
        out_shape=jax.ShapeDtypeStruct((B * H * W, cout), jnp.float32),
        grid=(B,),
        in_specs=[
            pl.BlockSpec((1, Hp, Wp, Cin), lambda b: (b, 0, 0, 0)),
            pl.BlockSpec((9, Cin, cout), lambda b: (0, 0, 0)),
            pl.BlockSpec((1, cout), lambda b: (0, 0)),
            pl.BlockSpec((1, cout), lambda b: (0, 0)),
        ],
        out_specs=pl.BlockSpec((H * W, cout), lambda b: (b, 0)),
        compiler_params=pltpu.CompilerParams(
            dimension_semantics=("parallel",)),
    )(xpad, w_taps, scale, shift)


def mbconv_block(x, blk):
    """One fused pallas_call per MBConv block (expand + 3x3 + project + res)."""
    B, H, W, C = x.shape
    wp = _roundup(W + 2, 8)                      # keep sublane dim 8-aligned
    xp = jnp.pad(x, ((0, 0), (1, 1), (1, wp - W - 1), (0, 0)))
    kernel = functools.partial(mbconv_kernel, H=H, W=W,
                               residual=blk["residual"])
    out = pl.pallas_call(
        kernel,
        out_shape=jax.ShapeDtypeStruct((B * H * W, C), jnp.float32),
        grid=(B,),
        in_specs=[
            pl.BlockSpec((1, H + 2, wp, C), lambda b: (b, 0, 0, 0)),
            pl.BlockSpec((C, C), lambda b: (0, 0)),            # expand w
            pl.BlockSpec((1, C), lambda b: (0, 0)),            # expand scale
            pl.BlockSpec((1, C), lambda b: (0, 0)),            # expand shift
            pl.BlockSpec((9, C, C), lambda b: (0, 0, 0)),      # 3x3 taps
            pl.BlockSpec((1, C), lambda b: (0, 0)),
            pl.BlockSpec((1, C), lambda b: (0, 0)),
            pl.BlockSpec((C, C), lambda b: (0, 0)),            # project w
            pl.BlockSpec((1, C), lambda b: (0, 0)),
            pl.BlockSpec((1, C), lambda b: (0, 0)),
        ],
        out_specs=pl.BlockSpec((H * W, C), lambda b: (b, 0)),
        scratch_shapes=[pltpu.VMEM((H + 2, wp, C), jnp.float32)],
        compiler_params=pltpu.CompilerParams(
            dimension_semantics=("parallel",)),
    )(xp, blk["expand_w"], blk["expand_bn"][0], blk["expand_bn"][1],
      blk["conv_w"], blk["conv_bn"][0], blk["conv_bn"][1],
      blk["project_w"], blk["project_bn"][0], blk["project_bn"][1])
    out = out.reshape(B, H, W, C)
    if blk["stride"] == 2:
        out = out[:, ::2, ::2, :]   # stride-2 conv == stride-1 conv, subsampled
    return out


def mixup_blend(x, x_perm, lam):
    """out = x * lam + x_perm * (1 - lam), tiled over lane-dense row blocks."""
    B, H, W, C = x.shape
    M = B * H * W
    tm = _pick_tile(M)
    lam_row = lam.astype(jnp.float32) * jnp.ones((1, C), jnp.float32)
    out = pl.pallas_call(
        mixup_kernel,
        out_shape=jax.ShapeDtypeStruct((M, C), jnp.float32),
        grid=(M // tm,),
        in_specs=[
            pl.BlockSpec((1, C), lambda i: (0, 0)),
            pl.BlockSpec((tm, C), lambda i: (i, 0)),
            pl.BlockSpec((tm, C), lambda i: (i, 0)),
        ],
        out_specs=pl.BlockSpec((tm, C), lambda i: (i, 0)),
        compiler_params=pltpu.CompilerParams(
            dimension_semantics=("parallel",)),
    )(lam_row, x.reshape(M, C), x_perm.reshape(M, C))
    return out.reshape(B, H, W, C)


def head_and_classify(x, w_head, bn2, cls_w, cls_b):
    """conv_head + bn2 + SiLU + avg-pool + Linear(n_features, 5), one kernel."""
    B, H, W, C = x.shape
    kernel = functools.partial(head_kernel, batch=B)
    feats2d, logits = pl.pallas_call(
        kernel,
        out_shape=(jax.ShapeDtypeStruct((B * H * W, C), jnp.float32),
                   jax.ShapeDtypeStruct((B, C), jnp.float32)),
        in_specs=[pl.BlockSpec(memory_space=pltpu.MemorySpace.VMEM)] * 6,
        out_specs=(pl.BlockSpec(memory_space=pltpu.MemorySpace.VMEM),
                   pl.BlockSpec(memory_space=pltpu.MemorySpace.VMEM)),
    )(x.reshape(B * H * W, C), w_head, bn2[0], bn2[1], cls_w, cls_b)
    return feats2d.reshape(B, H, W, C), logits


# ----------------------------------------------------------------------------
# Deterministic parameter init (synthetic backbone), padded to kernel layout
# ----------------------------------------------------------------------------
def make_bn(key, c, cpad=CPAD, eps=1e-3):
    k1, k2, k3, k4 = jax.random.split(key, 4)
    gamma = jax.random.uniform(k1, (c,), jnp.float32, 0.5, 1.5)
    beta = jax.random.normal(k2, (c,), jnp.float32) * 0.1
    mean = jax.random.normal(k3, (c,), jnp.float32) * 0.1
    var = jax.random.uniform(k4, (c,), jnp.float32, 0.5, 1.5)
    scale = gamma / jnp.sqrt(var + eps)
    shift = beta - mean * scale
    scale = jnp.pad(scale, (0, cpad - c)).reshape(1, cpad)
    shift = jnp.pad(shift, (0, cpad - c)).reshape(1, cpad)
    return scale, shift


def conv3x3_w(key, cin, cout, cin_pad, cout_pad=CPAD):
    """3x3 conv weights as 9 per-tap [cin_pad, cout_pad] matrices (bf16)."""
    w = jax.random.normal(key, (3, 3, cin, cout),
                          jnp.float32) / jnp.sqrt(float(9 * cin))
    w = jnp.pad(w, ((0, 0), (0, 0), (0, cin_pad - cin), (0, cout_pad - cout)))
    return w.reshape(9, cin_pad, cout_pad).astype(jnp.bfloat16)


def conv1x1_w(key, cin, cout, cin_pad=CPAD, cout_pad=CPAD):
    w = jax.random.normal(key, (cin, cout), jnp.float32) / jnp.sqrt(float(cin))
    w = jnp.pad(w, ((0, cin_pad - cin), (0, cout_pad - cout)))
    return w.astype(jnp.bfloat16)


def init_params(key):
    ks = jax.random.split(key, 20)
    return {
        "stem_w": conv3x3_w(ks[0], 3, 8, cin_pad=8),
        "bn1": make_bn(ks[1], 8),
        "blocks": [
            {   # block 1: stride 1, residual, 8 -> 8 (expand 16)
                "expand_w": conv1x1_w(ks[2], 8, 16),
                "expand_bn": make_bn(ks[3], 16),
                "conv_w": conv3x3_w(ks[4], 16, 16, cin_pad=CPAD),
                "conv_bn": make_bn(ks[5], 16),
                "project_w": conv1x1_w(ks[6], 16, 8),
                "project_bn": make_bn(ks[7], 8),
                "stride": 1, "residual": True,
            },
            {   # block 2: stride 2, no residual, 8 -> 16 (expand 32)
                "expand_w": conv1x1_w(ks[8], 8, 32),
                "expand_bn": make_bn(ks[9], 32),
                "conv_w": conv3x3_w(ks[10], 32, 32, cin_pad=CPAD),
                "conv_bn": make_bn(ks[11], 32),
                "project_w": conv1x1_w(ks[12], 32, 16),
                "project_bn": make_bn(ks[13], 16),
                "stride": 2, "residual": False,
            },
        ],
        "head_w": conv1x1_w(ks[14], 16, 32),
        "bn2": make_bn(ks[15], 32),
        "cls_w": jnp.pad(
            jax.random.normal(ks[16], (32, NUM_CLASSES), jnp.float32)
            / jnp.sqrt(32.0),
            ((0, CPAD - 32), (0, CPAD - NUM_CLASSES))).astype(jnp.bfloat16),
        "cls_b": jnp.pad(
            jax.random.normal(ks[17], (NUM_CLASSES,), jnp.float32) * 0.01,
            (0, CPAD - NUM_CLASSES)).reshape(1, CPAD),
    }


# ----------------------------------------------------------------------------
# Forward pass (mirrors CassavaModel.forward)
# ----------------------------------------------------------------------------
def cassava_forward(params, x_nchw, y=None, rng=None):
    B, Cin, H, W = x_nchw.shape
    x = jnp.transpose(x_nchw, (0, 2, 3, 1))                       # NCHW -> NHWC

    # conv_stem (3x3, stride 2, pad 1) -> bn1 -> act1 (SiLU).  Conv is computed
    # at stride 1 inside the kernel and subsampled here (identical result).
    x = jnp.pad(x, ((0, 0), (0, 0), (0, 0), (0, 8 - Cin)))        # C: 3 -> 8
    wp = _roundup(W + 2, 8)
    xs = jnp.pad(x, ((0, 0), (1, 1), (1, wp - W - 1), (0, 0)))
    h = stem_conv(xs, params["stem_w"], params["bn1"][0], params["bn1"][1],
                  H=H, W=W)                                       # [B*H*W, 128]
    x = h.reshape(B, H, W, CPAD)[:, ::2, ::2, :]                  # stride 2

    target_reweighted = None
    if y is not None:
        target_reweighted = jax.nn.one_hot(y, NUM_CLASSES, dtype=jnp.float32)
        # TODO(synk): PyTorch uses host-side np.random for lam/permutation;
        # replaced with deterministic jax.random draws (same distributions).
        rng, k_lam, k_perm = jax.random.split(rng, 3)
        lam = jax.random.beta(k_lam, 2.0, 2.0)
        indices = jax.random.permutation(k_perm, B)
        x = mixup_blend(x, x[indices], lam)
        target_reweighted = (target_reweighted * lam
                             + target_reweighted[indices] * (1.0 - lam))

    # backbone.blocks — one fused pallas_call per block
    for blk in params["blocks"]:
        x = mbconv_block(x, blk)

    if y is not None:
        rng, k_lam, k_perm = jax.random.split(rng, 3)
        lam = jax.random.beta(k_lam, 2.0, 2.0)
        indices = jax.random.permutation(k_perm, B)
        x = mixup_blend(x, x[indices], lam)
        target_reweighted = (target_reweighted * lam
                             + target_reweighted[indices] * (1.0 - lam))

    # conv_head -> bn2 -> act2 -> AdaptiveAvgPool2d((1,1)) -> classifier, fused.
    feats_pad, logits_pad = head_and_classify(
        x, params["head_w"], params["bn2"], params["cls_w"], params["cls_b"])
    logits = logits_pad[:, :NUM_CLASSES]
    feats = feats_pad[..., :32]                                   # real channels
    feats_nchw = jnp.transpose(feats, (0, 3, 1, 2))               # back to NCHW
    return logits, feats_nchw, target_reweighted


# ----------------------------------------------------------------------------
if __name__ == "__main__":
    key = jax.random.PRNGKey(0)
    kx, ky, kparams, kmix = jax.random.split(key, 4)

    params = init_params(kparams)
    x = jax.random.normal(kx, (2, 3, 16, 16), jnp.float32)        # NCHW like PyTorch
    y = jax.random.randint(ky, (2,), 0, NUM_CLASSES)

    # training path (manifold mixup active)
    logits, feats, tgt = cassava_forward(params, x, y=y, rng=kmix)
    jax.block_until_ready((logits, feats, tgt))
    assert logits.shape == (2, NUM_CLASSES)
    assert feats.shape == (2, 32, 4, 4)
    assert tgt.shape == (2, NUM_CLASSES)

    # inference path (y=None, target_reweighted is None)
    logits2, feats2, tgt2 = cassava_forward(params, x, y=None)
    jax.block_until_ready((logits2, feats2))
    assert tgt2 is None and logits2.shape == (2, NUM_CLASSES)

    print("KERNEL_OK")
</pallas_src>

<mosaic_0001>
module attributes {stable_mosaic.version = 11 : i64} {
  func.func @stem_kernel(%arg0: i32, %arg1: memref<1x18x24x8xf32, #tpu.memory_space<vmem>>, %arg2: memref<9x8x128xbf16, #tpu.memory_space<vmem>>, %arg3: memref<1x128xf32, #tpu.memory_space<vmem>>, %arg4: memref<1x128xf32, #tpu.memory_space<vmem>>, %arg5: memref<256x128xf32, #tpu.memory_space<vmem>>) attributes {dimension_semantics = [#tpu.dimension_semantics<parallel>], iteration_bounds = array<i64: 2>, scalar_prefetch = 0 : i64, scratch_operands = 0 : i64, tpu.core_type = #tpu.core_type<tc>, window_params = [{transform_indices = @transform_0, window_bounds = array<i64: 1, 18, 24, 8>}, {pipeline_mode = #tpu.pipeline_mode<synchronous>, transform_indices = @transform_1, window_bounds = array<i64: 9, 8, 128>}, {pipeline_mode = #tpu.pipeline_mode<synchronous>, transform_indices = @transform_2, window_bounds = array<i64: 1, 128>}, {pipeline_mode = #tpu.pipeline_mode<synchronous>, transform_indices = @transform_3, window_bounds = array<i64: 1, 128>}, {transform_indices = @transform_4, window_bounds = array<i64: 256, 128>}]} {
    %cst = arith.constant 0.000000e+00 : f32
    %0 = vector.broadcast %cst : f32 to vector<256x128xf32>
    %c0 = arith.constant 0 : index
    %c0_0 = arith.constant 0 : index
    %c0_1 = arith.constant 0 : index
    %c0_2 = arith.constant 0 : index
    %1 = vector.load %arg1[%c0, %c0_0, %c0_1, %c0_2] : memref<1x18x24x8xf32, #tpu.memory_space<vmem>>, vector<1x16x16x8xf32>
    %2 = vector.shape_cast %1 : vector<1x16x16x8xf32> to vector<16x16x8xf32>
    %3 = vector.shape_cast %2 : vector<16x16x8xf32> to vector<256x8xf32>
    %4 = arith.truncf %3 : vector<256x8xf32> to vector<256x8xbf16>
    %c0_3 = arith.constant 0 : index
    %c0_4 = arith.constant 0 : index
    %c0_5 = arith.constant 0 : index
    %5 = vector.load %arg2[%c0_3, %c0_4, %c0_5] : memref<9x8x128xbf16, #tpu.memory_space<vmem>>, vector<1x8x128xbf16>
    %6 = vector.shape_cast %5 : vector<1x8x128xbf16> to vector<8x128xbf16>
    %cst_6 = arith.constant dense<0.000000e+00> : vector<256x128xf32>
    %7 = tpu.matmul %4, %6, %cst_6 {dimension_numbers = #tpu.dot_dimension_numbers<[1], [0], [0], [1], [0, 0, 1, 1], [], []>} : vector<256x8xbf16>, vector<8x128xbf16>, vector<256x128xf32> -> vector<256x128xf32>
    %8 = arith.addf %0, %7 : vector<256x128xf32>
    %c0_7 = arith.constant 0 : index
    %c0_8 = arith.constant 0 : index
    %c1 = arith.constant 1 : index
    %c0_9 = arith.constant 0 : index
    %9 = vector.load %arg1[%c0_7, %c0_8, %c1, %c0_9] : memref<1x18x24x8xf32, #tpu.memory_space<vmem>>, vector<1x16x16x8xf32>
    %10 = vector.shape_cast %9 : vector<1x16x16x8xf32> to vector<16x16x8xf32>
    %11 = vector.shape_cast %10 : vector<16x16x8xf32> to vector<256x8xf32>
    %12 = arith.truncf %11 : vector<256x8xf32> to vector<256x8xbf16>
    %c1_10 = arith.constant 1 : index
    %c0_11 = arith.constant 0 : index
    %c0_12 = arith.constant 0 : index
    %13 = vector.load %arg2[%c1_10, %c0_11, %c0_12] : memref<9x8x128xbf16, #tpu.memory_space<vmem>>, vector<1x8x128xbf16>
    %14 = vector.shape_cast %13 : vector<1x8x128xbf16> to vector<8x128xbf16>
    %cst_13 = arith.constant dense<0.000000e+00> : vector<256x128xf32>
    %15 = tpu.matmul %12, %14, %cst_13 {dimension_numbers = #tpu.dot_dimension_numbers<[1], [0], [0], [1], [0, 0, 1, 1], [], []>} : vector<256x8xbf16>, vector<8x128xbf16>, vector<256x128xf32> -> vector<256x128xf32>
    %16 = arith.addf %8, %15 : vector<256x128xf32>
    %c0_14 = arith.constant 0 : index
    %c0_15 = arith.constant 0 : index
    %c2 = arith.constant 2 : index
    %c0_16 = arith.constant 0 : index
    %17 = vector.load %arg1[%c0_14, %c0_15, %c2, %c0_16] : memref<1x18x24x8xf32, #tpu.memory_space<vmem>>, vector<1x16x16x8xf32>
    %18 = vector.shape_cast %17 : vector<1x16x16x8xf32> to vector<16x16x8xf32>
    %19 = vector.shape_cast %18 : vector<16x16x8xf32> to vector<256x8xf32>
    %20 = arith.truncf %19 : vector<256x8xf32> to vector<256x8xbf16>
    %c2_17 = arith.constant 2 : index
    %c0_18 = arith.constant 0 : index
    %c0_19 = arith.constant 0 : index
    %21 = vector.load %arg2[%c2_17, %c0_18, %c0_19] : memref<9x8x128xbf16, #tpu.memory_space<vmem>>, vector<1x8x128xbf16>
    %22 = vector.shape_cast %21 : vector<1x8x128xbf16> to vector<8x128xbf16>
    %cst_20 = arith.constant dense<0.000000e+00> : vector<256x128xf32>
    %23 = tpu.matmul %20, %22, %cst_20 {dimension_numbers = #tpu.dot_dimension_numbers<[1], [0], [0], [1], [0, 0, 1, 1], [], []>} : vector<256x8xbf16>, vector<8x128xbf16>, vector<256x128xf32> -> vector<256x128xf32>
    %24 = arith.addf %16, %23 : vector<256x128xf32>
    %c0_21 = arith.constant 0 : index
    %c1_22 = arith.constant 1 : index
    %c0_23 = arith.constant 0 : index
    %c0_24 = arith.constant 0 : index
    %25 = vector.load %arg1[%c0_21, %c1_22, %c0_23, %c0_24] : memref<1x18x24x8xf32, #tpu.memory_space<vmem>>, vector<1x16x16x8xf32>
    %26 = vector.shape_cast %25 : vector<1x16x16x8xf32> to vector<16x16x8xf32>
    %27 = vector.shape_cast %26 : vector<16x16x8xf32> to vector<256x8xf32>
    %28 = arith.truncf %27 : vector<256x8xf32> to vector<256x8xbf16>
    %c3 = arith.constant 3 : index
    %c0_25 = arith.constant 0 : index
    %c0_26 = arith.constant 0 : index
    %29 = vector.load %arg2[%c3, %c0_25, %c0_26] : memref<9x8x128xbf16, #tpu.memory_space<vmem>>, vector<1x8x128xbf16>
    %30 = vector.shape_cast %29 : vector<1x8x128xbf16> to vector<8x128xbf16>
    %cst_27 = arith.constant dense<0.000000e+00> : vector<256x128xf32>
    %31 = tpu.matmul %28, %30, %cst_27 {dimension_numbers = #tpu.dot_dimension_numbers<[1], [0], [0], [1], [0, 0, 1, 1], [], []>} : vector<256x8xbf16>, vector<8x128xbf16>, vector<256x128xf32> -> vector<256x128xf32>
    %32 = arith.addf %24, %31 : vector<256x128xf32>
    %c0_28 = arith.constant 0 : index
    %c1_29 = arith.constant 1 : index
    %c1_30 = arith.constant 1 : index
    %c0_31 = arith.constant 0 : index
    %33 = vector.load %arg1[%c0_28, %c1_29, %c1_30, %c0_31] : memref<1x18x24x8xf32, #tpu.memory_space<vmem>>, vector<1x16x16x8xf32>
    %34 = vector.shape_cast %33 : vector<1x16x16x8xf32> to vector<16x16x8xf32>
    %35 = vector.shape_cast %34 : vector<16x16x8xf32> to vector<256x8xf32>
    %36 = arith.truncf %35 : vector<256x8xf32> to vector<256x8xbf16>
    %c4 = arith.constant 4 : index
    %c0_32 = arith.constant 0 : index
    %c0_33 = arith.constant 0 : index
    %37 = vector.load %arg2[%c4, %c0_32, %c0_33] : memref<9x8x128xbf16, #tpu.memory_space<vmem>>, vector<1x8x128xbf16>
    %38 = vector.shape_cast %37 : vector<1x8x128xbf16> to vector<8x128xbf16>
    %cst_34 = arith.constant dense<0.000000e+00> : vector<256x128xf32>
    %39 = tpu.matmul %36, %38, %cst_34 {dimension_numbers = #tpu.dot_dimension_numbers<[1], [0], [0], [1], [0, 0, 1, 1], [], []>} : vector<256x8xbf16>, vector<8x128xbf16>, vector<256x128xf32> -> vector<256x128xf32>
    %40 = arith.addf %32, %39 : vector<256x128xf32>
    %c0_35 = arith.constant 0 : index
    %c1_36 = arith.constant 1 : index
    %c2_37 = arith.constant 2 : index
    %c0_38 = arith.constant 0 : index
    %41 = vector.load %arg1[%c0_35, %c1_36, %c2_37, %c0_38] : memref<1x18x24x8xf32, #tpu.memory_space<vmem>>, vector<1x16x16x8xf32>
    %42 = vector.shape_cast %41 : vector<1x16x16x8xf32> to vector<16x16x8xf32>
    %43 = vector.shape_cast %42 : vector<16x16x8xf32> to vector<256x8xf32>
    %44 = arith.truncf %43 : vector<256x8xf32> to vector<256x8xbf16>
    %c5 = arith.constant 5 : index
    %c0_39 = arith.constant 0 : index
    %c0_40 = arith.constant 0 : index
    %45 = vector.load %arg2[%c5, %c0_39, %c0_40] : memref<9x8x128xbf16, #tpu.memory_space<vmem>>, vector<1x8x128xbf16>
    %46 = vector.shape_cast %45 : vector<1x8x128xbf16> to vector<8x128xbf16>
    %cst_41 = arith.constant dense<0.000000e+00> : vector<256x128xf32>
    %47 = tpu.matmul %44, %46, %cst_41 {dimension_numbers = #tpu.dot_dimension_numbers<[1], [0], [0], [1], [0, 0, 1, 1], [], []>} : vector<256x8xbf16>, vector<8x128xbf16>, vector<256x128xf32> -> vector<256x128xf32>
    %48 = arith.addf %40, %47 : vector<256x128xf32>
    %c0_42 = arith.constant 0 : index
    %c2_43 = arith.constant 2 : index
    %c0_44 = arith.constant 0 : index
    %c0_45 = arith.constant 0 : index
    %49 = vector.load %arg1[%c0_42, %c2_43, %c0_44, %c0_45] : memref<1x18x24x8xf32, #tpu.memory_space<vmem>>, vector<1x16x16x8xf32>
    %50 = vector.shape_cast %49 : vector<1x16x16x8xf32> to vector<16x16x8xf32>
    %51 = vector.shape_cast %50 : vector<16x16x8xf32> to vector<256x8xf32>
    %52 = arith.truncf %51 : vector<256x8xf32> to vector<256x8xbf16>
    %c6 = arith.constant 6 : index
    %c0_46 = arith.constant 0 : index
    %c0_47 = arith.constant 0 : index
    %53 = vector.load %arg2[%c6, %c0_46, %c0_47] : memref<9x8x128xbf16, #tpu.memory_space<vmem>>, vector<1x8x128xbf16>
    %54 = vector.shape_cast %53 : vector<1x8x128xbf16> to vector<8x128xbf16>
    %cst_48 = arith.constant dense<0.000000e+00> : vector<256x128xf32>
    %55 = tpu.matmul %52, %54, %cst_48 {dimension_numbers = #tpu.dot_dimension_numbers<[1], [0], [0], [1], [0, 0, 1, 1], [], []>} : vector<256x8xbf16>, vector<8x128xbf16>, vector<256x128xf32> -> vector<256x128xf32>
    %56 = arith.addf %48, %55 : vector<256x128xf32>
    %c0_49 = arith.constant 0 : index
    %c2_50 = arith.constant 2 : index
    %c1_51 = arith.constant 1 : index
    %c0_52 = arith.constant 0 : index
    %57 = vector.load %arg1[%c0_49, %c2_50, %c1_51, %c0_52] : memref<1x18x24x8xf32, #tpu.memory_space<vmem>>, vector<1x16x16x8xf32>
    %58 = vector.shape_cast %57 : vector<1x16x16x8xf32> to vector<16x16x8xf32>
    %59 = vector.shape_cast %58 : vector<16x16x8xf32> to vector<256x8xf32>
    %60 = arith.truncf %59 : vector<256x8xf32> to vector<256x8xbf16>
    %c7 = arith.constant 7 : index
    %c0_53 = arith.constant 0 : index
    %c0_54 = arith.constant 0 : index
    %61 = vector.load %arg2[%c7, %c0_53, %c0_54] : memref<9x8x128xbf16, #tpu.memory_space<vmem>>, vector<1x8x128xbf16>
    %62 = vector.shape_cast %61 : vector<1x8x128xbf16> to vector<8x128xbf16>
    %cst_55 = arith.constant dense<0.000000e+00> : vector<256x128xf32>
    %63 = tpu.matmul %60, %62, %cst_55 {dimension_numbers = #tpu.dot_dimension_numbers<[1], [0], [0], [1], [0, 0, 1, 1], [], []>} : vector<256x8xbf16>, vector<8x128xbf16>, vector<256x128xf32> -> vector<256x128xf32>
    %64 = arith.addf %56, %63 : vector<256x128xf32>
    %c0_56 = arith.constant 0 : index
    %c2_57 = arith.constant 2 : index
    %c2_58 = arith.constant 2 : index
    %c0_59 = arith.constant 0 : index
    %65 = vector.load %arg1[%c0_56, %c2_57, %c2_58, %c0_59] : memref<1x18x24x8xf32, #tpu.memory_space<vmem>>, vector<1x16x16x8xf32>
    %66 = vector.shape_cast %65 : vector<1x16x16x8xf32> to vector<16x16x8xf32>
    %67 = vector.shape_cast %66 : vector<16x16x8xf32> to vector<256x8xf32>
    %68 = arith.truncf %67 : vector<256x8xf32> to vector<256x8xbf16>
    %c8 = arith.constant 8 : index
    %c0_60 = arith.constant 0 : index
    %c0_61 = arith.constant 0 : index
    %69 = vector.load %arg2[%c8, %c0_60, %c0_61] : memref<9x8x128xbf16, #tpu.memory_space<vmem>>, vector<1x8x128xbf16>
    %70 = vector.shape_cast %69 : vector<1x8x128xbf16> to vector<8x128xbf16>
    %cst_62 = arith.constant dense<0.000000e+00> : vector<256x128xf32>
    %71 = tpu.matmul %68, %70, %cst_62 {dimension_numbers = #tpu.dot_dimension_numbers<[1], [0], [0], [1], [0, 0, 1, 1], [], []>} : vector<256x8xbf16>, vector<8x128xbf16>, vector<256x128xf32> -> vector<256x128xf32>
    %72 = arith.addf %64, %71 : vector<256x128xf32>
    %c0_63 = arith.constant 0 : index
    %c0_64 = arith.constant 0 : index
    %73 = vector.load %arg3[%c0_63, %c0_64] : memref<1x128xf32, #tpu.memory_space<vmem>>, vector<1x128xf32>
    %74 = vector.broadcast %73 : vector<1x128xf32> to vector<256x128xf32>
    %75 = arith.mulf %72, %74 : vector<256x128xf32>
    %c0_65 = arith.constant 0 : index
    %c0_66 = arith.constant 0 : index
    %76 = vector.load %arg4[%c0_65, %c0_66] : memref<1x128xf32, #tpu.memory_space<vmem>>, vector<1x128xf32>
    %77 = vector.broadcast %76 : vector<1x128xf32> to vector<256x128xf32>
    %78 = arith.addf %75, %77 : vector<256x128xf32>
    %79 = arith.negf %78 : vector<256x128xf32>
    %80 = math.exp %79 : vector<256x128xf32>
    %cst_67 = arith.constant 1.000000e+00 : f32
    %81 = vector.broadcast %cst_67 : f32 to vector<256x128xf32>
    %82 = arith.addf %81, %80 : vector<256x128xf32>
    %83 = arith.divf %81, %82 : vector<256x128xf32>
    %84 = arith.mulf %78, %83 : vector<256x128xf32>
    %c0_68 = arith.constant 0 : index
    %c0_69 = arith.constant 0 : index
    %85 = vector.load %arg5[%c0_68, %c0_69] : memref<256x128xf32, #tpu.memory_space<vmem>>, vector<256x128xf32>
    tpu.vector_store %arg5[%c0_68, %c0_69], %84 {strides = array<i32>} : memref<256x128xf32, #tpu.memory_space<vmem>>, vector<256x128xf32>,
    return
  }
  func.func @transform_0(%arg0: i32) -> (i32, i32, i32, i32) {
    %c0_i32 = arith.constant 0 : i32
    %c0_i32_0 = arith.constant 0 : i32
    %c0_i32_1 = arith.constant 0 : i32
    %c0_i32_2 = arith.constant 0 : i32
    return %arg0, %c0_i32, %c0_i32_0, %c0_i32_1 : i32, i32, i32, i32
  }
  func.func @transform_1(%arg0: i32) -> (i32, i32, i32) {
    %c0_i32 = arith.constant 0 : i32
    %c0_i32_0 = arith.constant 0 : i32
    %c0_i32_1 = arith.constant 0 : i32
    %c0_i32_2 = arith.constant 0 : i32
    return %c0_i32, %c0_i32_0, %c0_i32_1 : i32, i32, i32
  }
  func.func @transform_2(%arg0: i32) -> (i32, i32) {
    %c0_i32 = arith.constant 0 : i32
    %c0_i32_0 = arith.constant 0 : i32
    %c0_i32_1 = arith.constant 0 : i32
    return %c0_i32, %c0_i32_0 : i32, i32
  }
  func.func @transform_3(%arg0: i32) -> (i32, i32) {
    %c0_i32 = arith.constant 0 : i32
    %c0_i32_0 = arith.constant 0 : i32
    %c0_i32_1 = arith.constant 0 : i32
    return %c0_i32, %c0_i32_0 : i32, i32
  }
  func.func @transform_4(%arg0: i32) -> (i32, i32) {
    %c0_i32 = arith.constant 0 : i32
    %c0_i32_0 = arith.constant 0 : i32
    return %arg0, %c0_i32 : i32, i32
  }
}

</mosaic_0001>

<llo_original>
// kernel: tpu_custom_call.1
$region0: #{tpu_custom_call.1}
  #allocation0 [shape = 'u32[]', space=smem, size = 0x4, offset = 0x4, fixed_abs, tag = 'smem constant byte address 0x4 - core index']
  #allocation1 [shape = 'u32[144,128]{1,0:T(1,128)}', space=vmem, size = 0x12000, scoped, tag = 'internal scratch']
  %s0 = inlined_call_operand.vmem [shape: f32[2,18,24,8], index: 0, kind: input, shape index: {}]
  %s1 = inlined_call_operand.vmem [shape: bf16[9,8,128], index: 1, kind: input, shape index: {}]
  %s2 = inlined_call_operand.vmem [shape: f32[1,128], index: 2, kind: input, shape index: {}]
  %s3 = inlined_call_operand.vmem [shape: f32[1,128], index: 3, kind: input, shape index: {}]
  %s4 = inlined_call_operand.hbm [shape: f32[512,128], index: 4, kind: output, shape index: {}]
  %s5 = sld [smem:[#allocation0]]
  $region49: #{tpu_custom_call.1} parent=0
    _
  %s7 = ssub.s32 1, %s5
  %s8 = scalar_select 0, %s7, %s5
  $region1: #{tpu_custom_call.1} parent=0
    #allocation2 [shape = 'u8[262144]{0}', space=vmem, size = 0x40000, scoped, tag = 'output window, operand 0']
    #allocation3 [shape = 's32[2]{0}', space=sflag, size = 0x8, scoped, tag = 'scoped memory for tpu_custom_call.1']
    %9 = vsyncpa [#allocation3], 0
    %s10 = scalar_lea.sflag [#allocation3], 1
    %11 = vsyncpa %s10, 0
    loop: start=0, step=1, limit=4
    $region2: #{tpu_custom_call.1} parent=1 // loop_pre_header
      _
    $region3: #{tpu_custom_call.1} parent=1 // loop_header
      %s13 = sphi 0, %s17
      %p14 = scmp.ge.s32.totalorder %s13, 4
      %s23 = sphi 0, %s25
      %s26 = sphi 0, %s23
      %s27 = sphi 0, %s26
      %s43 = sphi 0, %s27
      %s47 = sphi 0, %s47
      %s49 = sphi 0, %s47
      %s50 = sphi 0, %s49
      %s64 = sphi 0, %s50
      %s68 = sphi 0, %s68
      %s70 = sphi 0, %s68
      %s71 = sphi 0, %s70
      %s85 = sphi 0, %s71
      %s89 = sphi 0, %s89
      %s91 = sphi 0, %s89
      %s92 = sphi 0, %s91
      %s106 = sphi 0, %s92
      %s112 = sphi 0, %s114
      %s115 = sphi 0, %s112
      %s116 = sphi 0, %s115
      %s132 = sphi 0, %s116
    $region4: #{tpu_custom_call.1} parent=1 // loop_header_branch
      %16 = sbr.rel (%p14) target = $region8
    $region5: #{tpu_custom_call.1} parent=1 // loop_body
      %s18 = ssub.s32 %s13, 1
      %s19 = ssub.s32 %s13, 2
      %s20 = sadd.s32 %s13, 1
      %s21 = ssub.s32 %s13, %s20
      %p22 = scmp.eq.s32.totalorder %s21, 0
      %s24 = sadd.s32 %s23, 1
      %s25 = scalar_select %p22, %s23, %s24
      %p28 = pneg %p22
      %p29 = scmp.eq.s32.totalorder %s13, 1
      %p30 = por %p28, %p29
      %p31 = scmp.ne.s32.totalorder %s23, %s26
      %p32 = scmp.eq.s32.totalorder %s13, 0
      %p33 = por %p31, %p32
      %p34 = scmp.ne.s32.totalorder %s23, %s26
      %p35 = scmp.eq.s32.totalorder %s18, 1
      %p36 = por %p34, %p35
      %p37 = scmp.ne.s32.totalorder %s26, %s27
      %p38 = scmp.eq.s32.totalorder %s18, 0
      %p39 = por %p37, %p38
      %p40 = scmp.ne.s32.totalorder %s26, %s27
      %p41 = scmp.eq.s32.totalorder %s19, 1
      %p42 = por %p40, %p41
      %p44 = scmp.ne.s32.totalorder %s27, %s43
      %p45 = scmp.eq.s32.totalorder %s19, 0
      %p46 = por %p44, %p45
      %s48 = sadd.s32 %s47, 1
      %p51 = scmp.eq.s32.totalorder %s13, 1
      %p52 = scmp.ne.s32.totalorder %s47, %s49
      %p53 = scmp.eq.s32.totalorder %s13, 0
      %p54 = por %p52, %p53
      %p55 = scmp.ne.s32.totalorder %s47, %s49
      %p56 = scmp.eq.s32.totalorder %s18, 1
      %p57 = por %p55, %p56
      %p58 = scmp.ne.s32.totalorder %s49, %s50
      %p59 = scmp.eq.s32.totalorder %s18, 0
      %p60 = por %p58, %p59
      %p61 = scmp.ne.s32.totalorder %s49, %s50
      %p62 = scmp.eq.s32.totalorder %s19, 1
      %p63 = por %p61, %p62
      %p65 = scmp.ne.s32.totalorder %s50, %s64
      %p66 = scmp.eq.s32.totalorder %s19, 0
      %p67 = por %p65, %p66
      %s69 = sadd.s32 %s68, 1
      %p72 = scmp.eq.s32.totalorder %s13, 1
      %p73 = scmp.ne.s32.totalorder %s68, %s70
      %p74 = scmp.eq.s32.totalorder %s13, 0
      %p75 = por %p73, %p74
      %p76 = scmp.ne.s32.totalorder %s68, %s70
      %p77 = scmp.eq.s32.totalorder %s18, 1
      %p78 = por %p76, %p77
      %p79 = scmp.ne.s32.totalorder %s70, %s71
      %p80 = scmp.eq.s32.totalorder %s18, 0
      %p81 = por %p79, %p80
      %p82 = scmp.ne.s32.totalorder %s70, %s71
      %p83 = scmp.eq.s32.totalorder %s19, 1
      %p84 = por %p82, %p83
      %p86 = scmp.ne.s32.totalorder %s71, %s85
      %p87 = scmp.eq.s32.totalorder %s19, 0
      %p88 = por %p86, %p87
      %s90 = sadd.s32 %s89, 1
      %p93 = scmp.eq.s32.totalorder %s13, 1
      %p94 = scmp.ne.s32.totalorder %s89, %s91
      %p95 = scmp.eq.s32.totalorder %s13, 0
      %p96 = por %p94, %p95
      %p97 = scmp.ne.s32.totalorder %s89, %s91
      %p98 = scmp.eq.s32.totalorder %s18, 1
      %p99 = por %p97, %p98
      %p100 = scmp.ne.s32.totalorder %s91, %s92
      %p101 = scmp.eq.s32.totalorder %s18, 0
      %p102 = por %p100, %p101
      %p103 = scmp.ne.s32.totalorder %s91, %s92
      %p104 = scmp.eq.s32.totalorder %s19, 1
      %p105 = por %p103, %p104
      %p107 = scmp.ne.s32.totalorder %s92, %s106
      %p108 = scmp.eq.s32.totalorder %s19, 0
      %p109 = por %p107, %p108
      %s110 = ssub.s32 %s13, %s20
      %p111 = scmp.eq.s32.totalorder %s110, 0
      %s113 = sadd.s32 %s112, 1
      %s114 = scalar_select %p111, %s112, %s113
      %p117 = pneg %p111
      %p118 = scmp.eq.s32.totalorder %s13, 1
      %p119 = por %p117, %p118
      %p120 = scmp.ne.s32.totalorder %s112, %s115
      %p121 = scmp.eq.s32.totalorder %s13, 0
      %p122 = por %p120, %p121
      %p123 = scmp.ne.s32.totalorder %s112, %s115
      %p124 = scmp.eq.s32.totalorder %s18, 1
      %p125 = por %p123, %p124
      %p126 = scmp.ne.s32.totalorder %s115, %s116
      %p127 = scmp.eq.s32.totalorder %s18, 0
      %p128 = por %p126, %p127
      %p129 = scmp.ne.s32.totalorder %s115, %s116
      %p130 = scmp.eq.s32.totalorder %s19, 1
      %p131 = por %p129, %p130
      %p133 = scmp.ne.s32.totalorder %s116, %s132
      %p134 = scmp.eq.s32.totalorder %s19, 0
      %p135 = por %p133, %p134
      %p136 = scmp.le.s32.totalorder 1, %s13
      %p137 = scmp.lt.s32.totalorder %s13, 3
      %p138 = pnand %p136, %p137
      %p139 = pneg %p138
      // Predicated region
      $region9: #{tpu_custom_call.1} parent=5 // pred_check
        _
      $region10: #{tpu_custom_call.1} parent=5 // pred_check_branch
        %141 = sbr.rel (%p138) target = $region12
      $region11: #{tpu_custom_call.1} parent=5 // pred_region
        %s142 = ssub.s32 %s13, 1
        // Predicated region
        $region13: #{tpu_custom_call.1} parent=11 // pred_check
          %p143 = pneg %p60
        $region14: #{tpu_custom_call.1} parent=11 // pred_check_branch
          %145 = sbr.rel (%p143) target = $region16
        $region15: #{tpu_custom_call.1} parent=11 // pred_region
          _
        $region16: #{tpu_custom_call.1} parent=11 // pred_fallthru
          _
        // Predicated region
        $region17: #{tpu_custom_call.1} parent=11 // pred_check
          %p146 = pneg %p81
        $region18: #{tpu_custom_call.1} parent=11 // pred_check_branch
          %148 = sbr.rel (%p146) target = $region20
        $region19: #{tpu_custom_call.1} parent=11 // pred_region
          _
        $region20: #{tpu_custom_call.1} parent=11 // pred_fallthru
          _
        // Predicated region
        $region21: #{tpu_custom_call.1} parent=11 // pred_check
          %p149 = pneg %p102
        $region22: #{tpu_custom_call.1} parent=11 // pred_check_branch
          %151 = sbr.rel (%p149) target = $region24
        $region23: #{tpu_custom_call.1} parent=11 // pred_region
          _
        $region24: #{tpu_custom_call.1} parent=11 // pred_fallthru
          _
      $region12: #{tpu_custom_call.1} parent=5 // pred_fallthru
        _
      %p152 = scmp.lt.s32.totalorder %s13, 2
      // Predicated region
      $region25: #{tpu_custom_call.1} parent=5 // pred_check
        %p153 = pneg %p152
      $region26: #{tpu_custom_call.1} parent=5 // pred_check_branch
        %155 = sbr.rel (%p153) target = $region28
      $region27: #{tpu_custom_call.1} parent=5 // pred_region
        // Predicated region
        $region29: #{tpu_custom_call.1} parent=27 // pred_check
          %p156 = pneg %p33
        $region30: #{tpu_custom_call.1} parent=27 // pred_check_branch
          %158 = sbr.rel (%p156) target = $region32
        $region31: #{tpu_custom_call.1} parent=27 // pred_region
          %p159 = scmp.lt.s32.totalorder %s13, 1
          %s160 = scalar_select %p159, %s13, 1
          %s161 = smul.addr %s160, 54
          %s162 = smul.addr %s161, 8
          %s163 = scalar_lea.vmem %s0, %s162
        $region32: #{tpu_custom_call.1} parent=27 // pred_fallthru
          _
      $region28: #{tpu_custom_call.1} parent=5 // pred_fallthru
        _
      %p164 = scmp.le.s32.totalorder 1, %s13
      %p165 = scmp.lt.s32.totalorder %s13, 3
      %p166 = pnand %p164, %p165
      %p167 = pneg %p166
      // Predicated region
      $region33: #{tpu_custom_call.1} parent=5 // pred_check
        _
      $region34: #{tpu_custom_call.1} parent=5 // pred_check_branch
        %169 = sbr.rel (%p166) target = $region36
      $region35: #{tpu_custom_call.1} parent=5 // pred_region
        %s170 = ssub.s32 %s13, 1
        %p171 = scmp.lt.s32.totalorder %s18, 1
        %s172 = scalar_select %p171, %s18, 1
        %s173 = smul.addr %s172, 54
        %s174 = smul.addr %s173, 8
        %s175 = scalar_lea.vmem %s0, %s174
        %p176 = pneg %p39
        %p177 = pneg %p36
        %p178 = pneg %p60
        %p179 = pneg %p57
        %p180 = pneg %p81
        %p181 = pneg %p78
        %p182 = pneg %p102
        %p183 = pneg %p99
        %p184 = pneg %p128
        %p185 = pneg %p125
        %s186 = sand.u32 %s115, 1
        %s187 = scalar_lea.sflag [#allocation3], %s186
        %s188 = sand.u32 %s115, 1
        %s189 = smul.addr %s188, 256
        %s190 = scalar_lea.vmem [#allocation2], %s189
        %p191 = scmp.lt.s32.totalorder %s18, 1
        %s192 = scalar_select %p191, %s18, 1
        %s193 = smul.addr %s192, 54
        %s194 = smul.addr %s193, 8
        %s195 = scalar_lea.vmem %s0, %s194
        %s196 = smul.u32 32, %s18
        %v198 = vld [vmem:[%s195] sm:$0xff]
        %v199 = vld [vmem:[%s195 + $0x8] sm:$0xff]
        %v200 = vld [vmem:[%s195 + $0x18] sm:$0xff]
        %v201 = vld [vmem:[%s195 + $0x20] sm:$0xff]
        %v202 = vld [vmem:[%s195 + $0x30] sm:$0xff]
        %v203 = vld [vmem:[%s195 + $0x38] sm:$0xff]
        %v204 = vld [vmem:[%s195 + $0x48] sm:$0xff]
        %v205 = vld [vmem:[%s195 + $0x50] sm:$0xff]
        %v206 = vld [vmem:[%s195 + $0x60] sm:$0xff]
        %v207 = vld [vmem:[%s195 + $0x68] sm:$0xff]
        %v208 = vld [vmem:[%s195 + $0x78] sm:$0xff]
        %v209 = vld [vmem:[%s195 + $0x80] sm:$0xff]
        %v210 = vld [vmem:[%s195 + $0x90] sm:$0xff]
        %v211 = vld [vmem:[%s195 + $0x98] sm:$0xff]
        %v212 = vld [vmem:[%s195 + $0xa8] sm:$0xff]
        %v213 = vld [vmem:[%s195 + $0xb0] sm:$0xff]
        %v214 = vld [vmem:[%s195 + $0xc0] sm:$0xff]
        %v215 = vld [vmem:[%s195 + $0xc8] sm:$0xff]
        %v216 = vld [vmem:[%s195 + $0xd8] sm:$0xff]
        %v217 = vld [vmem:[%s195 + $0xe0] sm:$0xff]
        %v218 = vld [vmem:[%s195 + $0xf0] sm:$0xff]
        %v219 = vld [vmem:[%s195 + $0xf8] sm:$0xff]
        %v220 = vld [vmem:[%s195 + $0x108] sm:$0xff]
        %v221 = vld [vmem:[%s195 + $0x110] sm:$0xff]
        %v222 = vld [vmem:[%s195 + $0x120] sm:$0xff]
        %v223 = vld [vmem:[%s195 + $0x128] sm:$0xff]
        %v224 = vld [vmem:[%s195 + $0x138] sm:$0xff]
        %v225 = vld [vmem:[%s195 + $0x140] sm:$0xff]
        %v226 = vld [vmem:[%s195 + $0x150] sm:$0xff]
        %v227 = vld [vmem:[%s195 + $0x158] sm:$0xff]
        %v228 = vld [vmem:[%s195 + $0x168] sm:$0xff]
        %v229 = vld [vmem:[%s195 + $0x170] sm:$0xff]
        %v230 = vpack.c.bf16 %v199, %v198
        %v231 = vpack.c.bf16 %v201, %v200
        %v232 = vpack.c.bf16 %v203, %v202
        %v233 = vpack.c.bf16 %v205, %v204
        %v234 = vpack.c.bf16 %v207, %v206
        %v235 = vpack.c.bf16 %v209, %v208
        %v236 = vpack.c.bf16 %v211, %v210
        %v237 = vpack.c.bf16 %v213, %v212
        %v238 = vpack.c.bf16 %v215, %v214
        %v239 = vpack.c.bf16 %v217, %v216
        %v240 = vpack.c.bf16 %v219, %v218
        %v241 = vpack.c.bf16 %v221, %v220
        %v242 = vpack.c.bf16 %v223, %v222
        %v243 = vpack.c.bf16 %v225, %v224
        %v244 = vpack.c.bf16 %v227, %v226
        %v245 = vpack.c.bf16 %v229, %v228
        %v246 = vld [vmem:[%s1] sm:$0xf]
        %v247 = vld [vmem:[%s195 + $0x1] sm:$0xff]
        %v248 = vld [vmem:[%s195 + $0x9] sm:$0xff]
        %v249 = vld [vmem:[%s195 + $0x19] sm:$0xff]
        %v250 = vld [vmem:[%s195 + $0x21] sm:$0xff]
        %v251 = vld [vmem:[%s195 + $0x31] sm:$0xff]
        %v252 = vld [vmem:[%s195 + $0x39] sm:$0xff]
        %v253 = vld [vmem:[%s195 + $0x49] sm:$0xff]
        %v254 = vld [vmem:[%s195 + $0x51] sm:$0xff]
        %v255 = vld [vmem:[%s195 + $0x61] sm:$0xff]
        %v256 = vld [vmem:[%s195 + $0x69] sm:$0xff]
        %v257 = vld [vmem:[%s195 + $0x79] sm:$0xff]
        %v258 = vld [vmem:[%s195 + $0x81] sm:$0xff]
        %v259 = vld [vmem:[%s195 + $0x91] sm:$0xff]
        %v260 = vld [vmem:[%s195 + $0x99] sm:$0xff]
        %v261 = vld [vmem:[%s195 + $0xa9] sm:$0xff]
        %v262 = vld [vmem:[%s195 + $0xb1] sm:$0xff]
        %v263 = vld [vmem:[%s195 + $0xc1] sm:$0xff]
        %v264 = vld [vmem:[%s195 + $0xc9] sm:$0xff]
        %v265 = vld [vmem:[%s195 + $0xd9] sm:$0xff]
        %v266 = vld [vmem:[%s195 + $0xe1] sm:$0xff]
        %v267 = vld [vmem:[%s195 + $0xf1] sm:$0xff]
        %v268 = vld [vmem:[%s195 + $0xf9] sm:$0xff]
        %v269 = vld [vmem:[%s195 + $0x109] sm:$0xff]
        %v270 = vld [vmem:[%s195 + $0x111] sm:$0xff]
        %v271 = vld [vmem:[%s195 + $0x121] sm:$0xff]
        %v272 = vld [vmem:[%s195 + $0x129] sm:$0xff]
        %v273 = vld [vmem:[%s195 + $0x139] sm:$0xff]
        %v274 = vld [vmem:[%s195 + $0x141] sm:$0xff]
        %v275 = vld [vmem:[%s195 + $0x151] sm:$0xff]
        %v276 = vld [vmem:[%s195 + $0x159] sm:$0xff]
        %v277 = vld [vmem:[%s195 + $0x169] sm:$0xff]
        %v278 = vld [vmem:[%s195 + $0x171] sm:$0xff]
        %v279 = vpack.c.bf16 %v248, %v247
        %v280 = vpack.c.bf16 %v250, %v249
        %v281 = vpack.c.bf16 %v252, %v251
        %v282 = vpack.c.bf16 %v254, %v253
        %v283 = vpack.c.bf16 %v256, %v255
        %v284 = vpack.c.bf16 %v258, %v257
        %v285 = vpack.c.bf16 %v260, %v259
        %v286 = vpack.c.bf16 %v262, %v261
        %v287 = vpack.c.bf16 %v264, %v263
        %v288 = vpack.c.bf16 %v266, %v265
        %v289 = vpack.c.bf16 %v268, %v267
        %v290 = vpack.c.bf16 %v270, %v269
        %v291 = vpack.c.bf16 %v272, %v271
        %v292 = vpack.c.bf16 %v274, %v273
        %v293 = vpack.c.bf16 %v276, %v275
        %v294 = vpack.c.bf16 %v278, %v277
        %s295 = scalar_lea.vmem %s1, 4
        %v296 = vld [vmem:[%s295] sm:$0xf]
        %vm297 = vcmask 64512
        %v299 = vsel %vm297, %v279, 0
        %v302 = vsel %vm297, %v280, 0
        %v305 = vsel %vm297, %v281, 0
        %v308 = vsel %vm297, %v282, 0
        %v311 = vsel %vm297, %v283, 0
        %v314 = vsel %vm297, %v284, 0
        %v317 = vsel %vm297, %v285, 0
        %v320 = vsel %vm297, %v286, 0
        %v323 = vsel %vm297, %v287, 0
        %v326 = vsel %vm297, %v288, 0
        %v329 = vsel %vm297, %v289, 0
        %v332 = vsel %vm297, %v290, 0
        %v335 = vsel %vm297, %v291, 0
        %v338 = vsel %vm297, %v292, 0
        %v341 = vsel %vm297, %v293, 0
        %v344 = vsel %vm297, %v294, 0
        %vm346 = vcmask 1043456
        %v348 = vsel %vm346, %v296, 0
        %350 = vmatprep.subr.bf16.mxu0 0
        %351 = vmatpush1.bf16.msra.mxu0 0
        %352 = vmatprep.subr.bf16.mxu0 0
        %353 = vmatpush1.bf16.msra.mxu0 0
        %354 = vmatprep.subr.bf16.mxu0 0
        %355 = vmatpush1.bf16.msra.mxu0 0
        %356 = vmatprep.subr.bf16.mxu0 0
        %357 = vmatpush1.bf16.msra.mxu0 0
        %358 = vmatprep.subr.bf16.mxu0 0
        %359 = vmatpush1.bf16.msra.mxu0 0
        %360 = vmatprep.subr.bf16.mxu0 0
        %361 = vmatpush1.bf16.msra.mxu0 0
        %362 = vmatprep.subr.bf16.mxu0 0
        %363 = vmatpush1.bf16.msra.mxu0 0
        %364 = vmatprep.subr.bf16.mxu0 0
        %365 = vmatpush1.bf16.msra.mxu0 %v348
        %366 = vmatprep.subr.bf16.mxu0 0
        %367 = vmatpush2.bf16.msra.mxu0 0
        %368 = vmatprep.subr.bf16.mxu0 0
        %369 = vmatpush2.bf16.msra.mxu0 0
        %370 = vmatprep.subr.bf16.mxu0 0
        %371 = vmatpush2.bf16.msra.mxu0 0
        %372 = vmatprep.subr.bf16.mxu0 0
        %373 = vmatpush2.bf16.msra.mxu0 0
        %374 = vmatprep.subr.bf16.mxu0 0
        %375 = vmatpush2.bf16.msra.mxu0 0
        %376 = vmatprep.subr.bf16.mxu0 0
        %377 = vmatpush2.bf16.msra.mxu0 0
        %378 = vmatprep.subr.bf16.mxu0 0
        %379 = vmatpush2.bf16.msra.mxu0 0
        %380 = vmatprep.subr.bf16.mxu0 0
        %381 = vmatpush2.bf16.msra.mxu0 0
        %382 = vmatprep.mubr.bf16.mxu0 0
        %383 = vmatmul.mubr.bf16.gmra.mxu0 %v299
        %v384 = vpop.f32.mrf.mxu0
        %v385 = vadd.f32 0.0, %v384
        %v386 = vpop.f32.mrf.mxu0
        %v387 = vpop.f32.mrf.mxu0
        %v388 = vadd.f32 0.0, %v387
        %v389 = vpop.f32.mrf.mxu0
        %390 = vmatprep.mubr.bf16.mxu0 0
        %391 = vmatmul.mubr.bf16.gmra.mxu0 %v302
        %v392 = vpop.f32.mrf.mxu0
        %v393 = vadd.f32 0.0, %v392
        %v394 = vpop.f32.mrf.mxu0
        %v395 = vpop.f32.mrf.mxu0
        %v396 = vadd.f32 0.0, %v395
        %v397 = vpop.f32.mrf.mxu0
        %398 = vmatprep.mubr.bf16.mxu0 0
        %399 = vmatmul.mubr.bf16.gmra.mxu0 %v305
        %v400 = vpop.f32.mrf.mxu0
        %v401 = vadd.f32 0.0, %v400
        %v402 = vpop.f32.mrf.mxu0
        %v403 = vpop.f32.mrf.mxu0
        %v404 = vadd.f32 0.0, %v403
        %v405 = vpop.f32.mrf.mxu0
        %406 = vmatprep.mubr.bf16.mxu0 0
        %407 = vmatmul.mubr.bf16.gmra.mxu0 %v308
        %v408 = vpop.f32.mrf.mxu0
        %v409 = vadd.f32 0.0, %v408
        %v410 = vpop.f32.mrf.mxu0
        %v411 = vpop.f32.mrf.mxu0
        %v412 = vadd.f32 0.0, %v411
        %v413 = vpop.f32.mrf.mxu0
        %414 = vmatprep.mubr.bf16.mxu0 0
        %415 = vmatmul.mubr.bf16.gmra.mxu0 %v311
        %v416 = vpop.f32.mrf.mxu0
        %v417 = vadd.f32 0.0, %v416
        %v418 = vpop.f32.mrf.mxu0
        %v419 = vpop.f32.mrf.mxu0
        %v420 = vadd.f32 0.0, %v419
        %v421 = vpop.f32.mrf.mxu0
        %422 = vmatprep.mubr.bf16.mxu0 0
        %423 = vmatmul.mubr.bf16.gmra.mxu0 %v314
        %v424 = vpop.f32.mrf.mxu0
        %v425 = vadd.f32 0.0, %v424
        %v426 = vpop.f32.mrf.mxu0
        %v427 = vpop.f32.mrf.mxu0
        %v428 = vadd.f32 0.0, %v427
        %v429 = vpop.f32.mrf.mxu0
        %430 = vmatprep.mubr.bf16.mxu0 0
        %431 = vmatmul.mubr.bf16.gmra.mxu0 %v317
        %v432 = vpop.f32.mrf.mxu0
        %v433 = vadd.f32 0.0, %v432
        %v434 = vpop.f32.mrf.mxu0
        %v435 = vpop.f32.mrf.mxu0
        %v436 = vadd.f32 0.0, %v435
        %v437 = vpop.f32.mrf.mxu0
        %438 = vmatprep.mubr.bf16.mxu0 0
        %439 = vmatmul.mubr.bf16.gmra.mxu0 %v320
        %v440 = vpop.f32.mrf.mxu0
        %v441 = vadd.f32 0.0, %v440
        %v442 = vpop.f32.mrf.mxu0
        %v443 = vpop.f32.mrf.mxu0
        %v444 = vadd.f32 0.0, %v443
        %v445 = vpop.f32.mrf.mxu0
        %446 = vmatprep.mubr.bf16.mxu0 0
        %447 = vmatmul.mubr.bf16.gmra.mxu0 %v323
        %v448 = vpop.f32.mrf.mxu0
        %v449 = vadd.f32 0.0, %v448
        %v450 = vpop.f32.mrf.mxu0
        %v451 = vpop.f32.mrf.mxu0
        %v452 = vadd.f32 0.0, %v451
        %v453 = vpop.f32.mrf.mxu0
        %454 = vmatprep.mubr.bf16.mxu0 0
        %455 = vmatmul.mubr.bf16.gmra.mxu0 %v326
        %v456 = vpop.f32.mrf.mxu0
        %v457 = vadd.f32 0.0, %v456
        %v458 = vpop.f32.mrf.mxu0
        %v459 = vpop.f32.mrf.mxu0
        %v460 = vadd.f32 0.0, %v459
        %v461 = vpop.f32.mrf.mxu0
        %462 = vmatprep.mubr.bf16.mxu0 0
        %463 = vmatmul.mubr.bf16.gmra.mxu0 %v329
        %v464 = vpop.f32.mrf.mxu0
        %v465 = vadd.f32 0.0, %v464
        %v466 = vpop.f32.mrf.mxu0
        %v467 = vpop.f32.mrf.mxu0
        %v468 = vadd.f32 0.0, %v467
        %v469 = vpop.f32.mrf.mxu0
        %470 = vmatprep.mubr.bf16.mxu0 0
        %471 = vmatmul.mubr.bf16.gmra.mxu0 %v332
        %v472 = vpop.f32.mrf.mxu0
        %v473 = vadd.f32 0.0, %v472
        %v474 = vpop.f32.mrf.mxu0
        %v475 = vpop.f32.mrf.mxu0
        %v476 = vadd.f32 0.0, %v475
        %v477 = vpop.f32.mrf.mxu0
        %478 = vmatprep.mubr.bf16.mxu0 0
        %479 = vmatmul.mubr.bf16.gmra.mxu0 %v335
        %v480 = vpop.f32.mrf.mxu0
        %v481 = vadd.f32 0.0, %v480
        %v482 = vpop.f32.mrf.mxu0
        %v483 = vpop.f32.mrf.mxu0
        %v484 = vadd.f32 0.0, %v483
        %v485 = vpop.f32.mrf.mxu0
        %486 = vmatprep.mubr.bf16.mxu0 0
        %487 = vmatmul.mubr.bf16.gmra.mxu0 %v338
        %v488 = vpop.f32.mrf.mxu0
        %v489 = vadd.f32 0.0, %v488
        %v490 = vpop.f32.mrf.mxu0
        %v491 = vpop.f32.mrf.mxu0
        %v492 = vadd.f32 0.0, %v491
        %v493 = vpop.f32.mrf.mxu0
        %494 = vmatprep.mubr.bf16.mxu0 0
        %495 = vmatmul.mubr.bf16.gmra.mxu0 %v341
        %v496 = vpop.f32.mrf.mxu0
        %v497 = vadd.f32 0.0, %v496
        %v498 = vpop.f32.mrf.mxu0
        %v499 = vpop.f32.mrf.mxu0
        %v500 = vadd.f32 0.0, %v499
        %v501 = vpop.f32.mrf.mxu0
        %502 = vmatprep.mubr.bf16.mxu0 0
        %503 = vmatmul.mubr.bf16.gmra.mxu0 %v344
        %v504 = vpop.f32.mrf.mxu0
        %v505 = vadd.f32 0.0, %v504
        %v506 = vpop.f32.mrf.mxu0
        %v507 = vpop.f32.mrf.mxu0
        %v508 = vadd.f32 0.0, %v507
        %v509 = vpop.f32.mrf.mxu0
        %510 = vdwg.mxu0
        %v512 = vsel %vm297, %v230, 0
        %v515 = vsel %vm297, %v231, 0
        %v518 = vsel %vm297, %v232, 0
        %v521 = vsel %vm297, %v233, 0
        %v524 = vsel %vm297, %v234, 0
        %v527 = vsel %vm297, %v235, 0
        %v530 = vsel %vm297, %v236, 0
        %v533 = vsel %vm297, %v237, 0
        %v536 = vsel %vm297, %v238, 0
        %v539 = vsel %vm297, %v239, 0
        %v542 = vsel %vm297, %v240, 0
        %v545 = vsel %vm297, %v241, 0
        %v548 = vsel %vm297, %v242, 0
        %v551 = vsel %vm297, %v243, 0
        %v554 = vsel %vm297, %v244, 0
        %v557 = vsel %vm297, %v245, 0
        %v560 = vsel %vm346, %v246, 0
        %562 = vmatprep.subr.bf16.mxu0 0
        %563 = vmatpush1.bf16.msra.mxu0 0
        %564 = vmatprep.subr.bf16.mxu0 0
        %565 = vmatpush1.bf16.msra.mxu0 0
        %566 = vmatprep.subr.bf16.mxu0 0
        %567 = vmatpush1.bf16.msra.mxu0 0
        %568 = vmatprep.subr.bf16.mxu0 0
        %569 = vmatpush1.bf16.msra.mxu0 0
        %570 = vmatprep.subr.bf16.mxu0 0
        %571 = vmatpush1.bf16.msra.mxu0 0
        %572 = vmatprep.subr.bf16.mxu0 0
        %573 = vmatpush1.bf16.msra.mxu0 0
        %574 = vmatprep.subr.bf16.mxu0 0
        %575 = vmatpush1.bf16.msra.mxu0 0
        %576 = vmatprep.subr.bf16.mxu0 0
        %577 = vmatpush1.bf16.msra.mxu0 %v560
        %578 = vmatprep.subr.bf16.mxu0 0
        %579 = vmatpush2.bf16.msra.mxu0 0
        %580 = vmatprep.subr.bf16.mxu0 0
        %581 = vmatpush2.bf16.msra.mxu0 0
        %582 = vmatprep.subr.bf16.mxu0 0
        %583 = vmatpush2.bf16.msra.mxu0 0
        %584 = vmatprep.subr.bf16.mxu0 0
        %585 = vmatpush2.bf16.msra.mxu0 0
        %586 = vmatprep.subr.bf16.mxu0 0
        %587 = vmatpush2.bf16.msra.mxu0 0
        %588 = vmatprep.subr.bf16.mxu0 0
        %589 = vmatpush2.bf16.msra.mxu0 0
        %590 = vmatprep.subr.bf16.mxu0 0
        %591 = vmatpush2.bf16.msra.mxu0 0
        %592 = vmatprep.subr.bf16.mxu0 0
        %593 = vmatpush2.bf16.msra.mxu0 0
        %594 = vmatprep.mubr.bf16.mxu0 0
        %595 = vmatmul.mubr.bf16.gmra.mxu0 %v512
        %v596 = vpop.f32.mrf.mxu0
        %v597 = vadd.f32 %v385, %v596
        %v598 = vpop.f32.mrf.mxu0
        %v599 = vpop.f32.mrf.mxu0
        %v600 = vadd.f32 %v388, %v599
        %v601 = vpop.f32.mrf.mxu0
        %602 = vmatprep.mubr.bf16.mxu0 0
        %603 = vmatmul.mubr.bf16.gmra.mxu0 %v515
        %v604 = vpop.f32.mrf.mxu0
        %v605 = vadd.f32 %v393, %v604
        %v606 = vpop.f32.mrf.mxu0
        %v607 = vpop.f32.mrf.mxu0
        %v608 = vadd.f32 %v396, %v607
        %v609 = vpop.f32.mrf.mxu0
        %610 = vmatprep.mubr.bf16.mxu0 0
        %611 = vmatmul.mubr.bf16.gmra.mxu0 %v518
        %v612 = vpop.f32.mrf.mxu0
        %v613 = vadd.f32 %v401, %v612
        %v614 = vpop.f32.mrf.mxu0
        %v615 = vpop.f32.mrf.mxu0
        %v616 = vadd.f32 %v404, %v615
        %v617 = vpop.f32.mrf.mxu0
        %618 = vmatprep.mubr.bf16.mxu0 0
        %619 = vmatmul.mubr.bf16.gmra.mxu0 %v521
        %v620 = vpop.f32.mrf.mxu0
        %v621 = vadd.f32 %v409, %v620
        %v622 = vpop.f32.mrf.mxu0
        %v623 = vpop.f32.mrf.mxu0
        %v624 = vadd.f32 %v412, %v623
        %v625 = vpop.f32.mrf.mxu0
        %626 = vmatprep.mubr.bf16.mxu0 0
        %627 = vmatmul.mubr.bf16.gmra.mxu0 %v524
        %v628 = vpop.f32.mrf.mxu0
        %v629 = vadd.f32 %v417, %v628
        %v630 = vpop.f32.mrf.mxu0
        %v631 = vpop.f32.mrf.mxu0
        %v632 = vadd.f32 %v420, %v631
        %v633 = vpop.f32.mrf.mxu0
        %634 = vmatprep.mubr.bf16.mxu0 0
        %635 = vmatmul.mubr.bf16.gmra.mxu0 %v527
        %v636 = vpop.f32.mrf.mxu0
        %v637 = vadd.f32 %v425, %v636
        %v638 = vpop.f32.mrf.mxu0
        %v639 = vpop.f32.mrf.mxu0
        %v640 = vadd.f32 %v428, %v639
        %v641 = vpop.f32.mrf.mxu0
        %642 = vmatprep.mubr.bf16.mxu0 0
        %643 = vmatmul.mubr.bf16.gmra.mxu0 %v530
        %v644 = vpop.f32.mrf.mxu0
        %v645 = vadd.f32 %v433, %v644
        %v646 = vpop.f32.mrf.mxu0
        %v647 = vpop.f32.mrf.mxu0
        %v648 = vadd.f32 %v436, %v647
        %v649 = vpop.f32.mrf.mxu0
        %650 = vmatprep.mubr.bf16.mxu0 0
        %651 = vmatmul.mubr.bf16.gmra.mxu0 %v533
        %v652 = vpop.f32.mrf.mxu0
        %v653 = vadd.f32 %v441, %v652
        %v654 = vpop.f32.mrf.mxu0
        %v655 = vpop.f32.mrf.mxu0
        %v656 = vadd.f32 %v444, %v655
        %v657 = vpop.f32.mrf.mxu0
        %658 = vmatprep.mubr.bf16.mxu0 0
        %659 = vmatmul.mubr.bf16.gmra.mxu0 %v536
        %v660 = vpop.f32.mrf.mxu0
        %v661 = vadd.f32 %v449, %v660
        %v662 = vpop.f32.mrf.mxu0
        %v663 = vpop.f32.mrf.mxu0
        %v664 = vadd.f32 %v452, %v663
        %v665 = vpop.f32.mrf.mxu0
        %666 = vmatprep.mubr.bf16.mxu0 0
        %667 = vmatmul.mubr.bf16.gmra.mxu0 %v539
        %v668 = vpop.f32.mrf.mxu0
        %v669 = vadd.f32 %v457, %v668
        %v670 = vpop.f32.mrf.mxu0
        %v671 = vpop.f32.mrf.mxu0
        %v672 = vadd.f32 %v460, %v671
        %v673 = vpop.f32.mrf.mxu0
        %674 = vmatprep.mubr.bf16.mxu0 0
        %675 = vmatmul.mubr.bf16.gmra.mxu0 %v542
        %v676 = vpop.f32.mrf.mxu0
        %v677 = vadd.f32 %v465, %v676
        %v678 = vpop.f32.mrf.mxu0
        %v679 = vpop.f32.mrf.mxu0
        %v680 = vadd.f32 %v468, %v679
        %v681 = vpop.f32.mrf.mxu0
        %682 = vmatprep.mubr.bf16.mxu0 0
        %683 = vmatmul.mubr.bf16.gmra.mxu0 %v545
        %v684 = vpop.f32.mrf.mxu0
        %v685 = vadd.f32 %v473, %v684
        %v686 = vpop.f32.mrf.mxu0
        %v687 = vpop.f32.mrf.mxu0
        %v688 = vadd.f32 %v476, %v687
        %v689 = vpop.f32.mrf.mxu0
        %690 = vmatprep.mubr.bf16.mxu0 0
        %691 = vmatmul.mubr.bf16.gmra.mxu0 %v548
        %v692 = vpop.f32.mrf.mxu0
        %v693 = vadd.f32 %v481, %v692
        %v694 = vpop.f32.mrf.mxu0
        %v695 = vpop.f32.mrf.mxu0
        %v696 = vadd.f32 %v484, %v695
        %v697 = vpop.f32.mrf.mxu0
        %698 = vmatprep.mubr.bf16.mxu0 0
        %699 = vmatmul.mubr.bf16.gmra.mxu0 %v551
        %v700 = vpop.f32.mrf.mxu0
        %v701 = vadd.f32 %v489, %v700
        %v702 = vpop.f32.mrf.mxu0
        %v703 = vpop.f32.mrf.mxu0
        %v704 = vadd.f32 %v492, %v703
        %v705 = vpop.f32.mrf.mxu0
        %706 = vmatprep.mubr.bf16.mxu0 0
        %707 = vmatmul.mubr.bf16.gmra.mxu0 %v554
        %v708 = vpop.f32.mrf.mxu0
        %v709 = vadd.f32 %v497, %v708
        %v710 = vpop.f32.mrf.mxu0
        %v711 = vpop.f32.mrf.mxu0
        %v712 = vadd.f32 %v500, %v711
        %v713 = vpop.f32.mrf.mxu0
        %714 = vmatprep.mubr.bf16.mxu0 0
        %715 = vmatmul.mubr.bf16.gmra.mxu0 %v557
        %v716 = vpop.f32.mrf.mxu0
        %v717 = vadd.f32 %v505, %v716
        %v718 = vpop.f32.mrf.mxu0
        %v719 = vpop.f32.mrf.mxu0
        %v720 = vadd.f32 %v508, %v719
        %v721 = vpop.f32.mrf.mxu0
        %722 = vdwg.mxu0
        %v723 = vld [vmem:[%s195 + $0x2] sm:$0xff]
        %v724 = vld [vmem:[%s195 + $0xa] sm:$0xff]
        %v725 = vld [vmem:[%s195 + $0x1a] sm:$0xff]
        %v726 = vld [vmem:[%s195 + $0x22] sm:$0xff]
        %v727 = vld [vmem:[%s195 + $0x32] sm:$0xff]
        %v728 = vld [vmem:[%s195 + $0x3a] sm:$0xff]
        %v729 = vld [vmem:[%s195 + $0x4a] sm:$0xff]
        %v730 = vld [vmem:[%s195 + $0x52] sm:$0xff]
        %v731 = vld [vmem:[%s195 + $0x62] sm:$0xff]
        %v732 = vld [vmem:[%s195 + $0x6a] sm:$0xff]
        %v733 = vld [vmem:[%s195 + $0x7a] sm:$0xff]
        %v734 = vld [vmem:[%s195 + $0x82] sm:$0xff]
        %v735 = vld [vmem:[%s195 + $0x92] sm:$0xff]
        %v736 = vld [vmem:[%s195 + $0x9a] sm:$0xff]
        %v737 = vld [vmem:[%s195 + $0xaa] sm:$0xff]
        %v738 = vld [vmem:[%s195 + $0xb2] sm:$0xff]
        %v739 = vld [vmem:[%s195 + $0xc2] sm:$0xff]
        %v740 = vld [vmem:[%s195 + $0xca] sm:$0xff]
        %v741 = vld [vmem:[%s195 + $0xda] sm:$0xff]
        %v742 = vld [vmem:[%s195 + $0xe2] sm:$0xff]
        %v743 = vld [vmem:[%s195 + $0xf2] sm:$0xff]
        %v744 = vld [vmem:[%s195 + $0xfa] sm:$0xff]
        %v745 = vld [vmem:[%s195 + $0x10a] sm:$0xff]
        %v746 = vld [vmem:[%s195 + $0x112] sm:$0xff]
        %v747 = vld [vmem:[%s195 + $0x122] sm:$0xff]
        %v748 = vld [vmem:[%s195 + $0x12a] sm:$0xff]
        %v749 = vld [vmem:[%s195 + $0x13a] sm:$0xff]
        %v750 = vld [vmem:[%s195 + $0x142] sm:$0xff]
        %v751 = vld [vmem:[%s195 + $0x152] sm:$0xff]
        %v752 = vld [vmem:[%s195 + $0x15a] sm:$0xff]
        %v753 = vld [vmem:[%s195 + $0x16a] sm:$0xff]
        %v754 = vld [vmem:[%s195 + $0x172] sm:$0xff]
        %v755 = vpack.c.bf16 %v724, %v723
        %v756 = vpack.c.bf16 %v726, %v725
        %v757 = vpack.c.bf16 %v728, %v727
        %v758 = vpack.c.bf16 %v730, %v729
        %v759 = vpack.c.bf16 %v732, %v731
        %v760 = vpack.c.bf16 %v734, %v733
        %v761 = vpack.c.bf16 %v736, %v735
        %v762 = vpack.c.bf16 %v738, %v737
        %v763 = vpack.c.bf16 %v740, %v739
        %v764 = vpack.c.bf16 %v742, %v741
        %v765 = vpack.c.bf16 %v744, %v743
        %v766 = vpack.c.bf16 %v746, %v745
        %v767 = vpack.c.bf16 %v748, %v747
        %v768 = vpack.c.bf16 %v750, %v749
        %v769 = vpack.c.bf16 %v752, %v751
        %v770 = vpack.c.bf16 %v754, %v753
        %s771 = scalar_lea.vmem %s1, 8
        %v772 = vld [vmem:[%s771] sm:$0xf]
        %v774 = vsel %vm297, %v755, 0
        %v777 = vsel %vm297, %v756, 0
        %v780 = vsel %vm297, %v757, 0
        %v783 = vsel %vm297, %v758, 0
        %v786 = vsel %vm297, %v759, 0
        %v789 = vsel %vm297, %v760, 0
        %v792 = vsel %vm297, %v761, 0
        %v795 = vsel %vm297, %v762, 0
        %v798 = vsel %vm297, %v763, 0
        %v801 = vsel %vm297, %v764, 0
        %v804 = vsel %vm297, %v765, 0
        %v807 = vsel %vm297, %v766, 0
        %v810 = vsel %vm297, %v767, 0
        %v813 = vsel %vm297, %v768, 0
        %v816 = vsel %vm297, %v769, 0
        %v819 = vsel %vm297, %v770, 0
        %v822 = vsel %vm346, %v772, 0
        %824 = vmatprep.subr.bf16.mxu0 0
        %825 = vmatpush1.bf16.msra.mxu0 0
        %826 = vmatprep.subr.bf16.mxu0 0
        %827 = vmatpush1.bf16.msra.mxu0 0
        %828 = vmatprep.subr.bf16.mxu0 0
        %829 = vmatpush1.bf16.msra.mxu0 0
        %830 = vmatprep.subr.bf16.mxu0 0
        %831 = vmatpush1.bf16.msra.mxu0 0
        %832 = vmatprep.subr.bf16.mxu0 0
        %833 = vmatpush1.bf16.msra.mxu0 0
        %834 = vmatprep.subr.bf16.mxu0 0
        %835 = vmatpush1.bf16.msra.mxu0 0
        %836 = vmatprep.subr.bf16.mxu0 0
        %837 = vmatpush1.bf16.msra.mxu0 0
        %838 = vmatprep.subr.bf16.mxu0 0
        %839 = vmatpush1.bf16.msra.mxu0 %v822
        %840 = vmatprep.subr.bf16.mxu0 0
        %841 = vmatpush2.bf16.msra.mxu0 0
        %842 = vmatprep.subr.bf16.mxu0 0
        %843 = vmatpush2.bf16.msra.mxu0 0
        %844 = vmatprep.subr.bf16.mxu0 0
        %845 = vmatpush2.bf16.msra.mxu0 0
        %846 = vmatprep.subr.bf16.mxu0 0
        %847 = vmatpush2.bf16.msra.mxu0 0
        %848 = vmatprep.subr.bf16.mxu0 0
        %849 = vmatpush2.bf16.msra.mxu0 0
        %850 = vmatprep.subr.bf16.mxu0 0
        %851 = vmatpush2.bf16.msra.mxu0 0
        %852 = vmatprep.subr.bf16.mxu0 0
        %853 = vmatpush2.bf16.msra.mxu0 0
        %854 = vmatprep.subr.bf16.mxu0 0
        %855 = vmatpush2.bf16.msra.mxu0 0
        %856 = vmatprep.mubr.bf16.mxu0 0
        %857 = vmatmul.mubr.bf16.gmra.mxu0 %v774
        %v858 = vpop.f32.mrf.mxu0
        %v859 = vadd.f32 0.0, %v858
        %v860 = vpop.f32.mrf.mxu0
        %v861 = vpop.f32.mrf.mxu0
        %v862 = vadd.f32 0.0, %v861
        %v863 = vpop.f32.mrf.mxu0
        %864 = vmatprep.mubr.bf16.mxu0 0
        %865 = vmatmul.mubr.bf16.gmra.mxu0 %v777
        %v866 = vpop.f32.mrf.mxu0
        %v867 = vadd.f32 0.0, %v866
        %v868 = vpop.f32.mrf.mxu0
        %v869 = vpop.f32.mrf.mxu0
        %v870 = vadd.f32 0.0, %v869
        %v871 = vpop.f32.mrf.mxu0
        %872 = vmatprep.mubr.bf16.mxu0 0
        %873 = vmatmul.mubr.bf16.gmra.mxu0 %v780
        %v874 = vpop.f32.mrf.mxu0
        %v875 = vadd.f32 0.0, %v874
        %v876 = vpop.f32.mrf.mxu0
        %v877 = vpop.f32.mrf.mxu0
        %v878 = vadd.f32 0.0, %v877
        %v879 = vpop.f32.mrf.mxu0
        %880 = vmatprep.mubr.bf16.mxu0 0
        %881 = vmatmul.mubr.bf16.gmra.mxu0 %v783
        %v882 = vpop.f32.mrf.mxu0
        %v883 = vadd.f32 0.0, %v882
        %v884 = vpop.f32.mrf.mxu0
        %v885 = vpop.f32.mrf.mxu0
        %v886 = vadd.f32 0.0, %v885
        %v887 = vpop.f32.mrf.mxu0
        %888 = vmatprep.mubr.bf16.mxu0 0
        %889 = vmatmul.mubr.bf16.gmra.mxu0 %v786
        %v890 = vpop.f32.mrf.mxu0
        %v891 = vadd.f32 0.0, %v890
        %v892 = vpop.f32.mrf.mxu0
        %v893 = vpop.f32.mrf.mxu0
        %v894 = vadd.f32 0.0, %v893
        %v895 = vpop.f32.mrf.mxu0
        %896 = vmatprep.mubr.bf16.mxu0 0
        %897 = vmatmul.mubr.bf16.gmra.mxu0 %v789
        %v898 = vpop.f32.mrf.mxu0
        %v899 = vadd.f32 0.0, %v898
        %v900 = vpop.f32.mrf.mxu0
        %v901 = vpop.f32.mrf.mxu0
        %v902 = vadd.f32 0.0, %v901
        %v903 = vpop.f32.mrf.mxu0
        %904 = vmatprep.mubr.bf16.mxu0 0
        %905 = vmatmul.mubr.bf16.gmra.mxu0 %v792
        %v906 = vpop.f32.mrf.mxu0
        %v907 = vadd.f32 0.0, %v906
        %v908 = vpop.f32.mrf.mxu0
        %v909 = vpop.f32.mrf.mxu0
        %v910 = vadd.f32 0.0, %v909
        %v911 = vpop.f32.mrf.mxu0
        %912 = vmatprep.mubr.bf16.mxu0 0
        %913 = vmatmul.mubr.bf16.gmra.mxu0 %v795
        %v914 = vpop.f32.mrf.mxu0
        %v915 = vadd.f32 0.0, %v914
        %v916 = vpop.f32.mrf.mxu0
        %v917 = vpop.f32.mrf.mxu0
        %v918 = vadd.f32 0.0, %v917
        %v919 = vpop.f32.mrf.mxu0
        %920 = vmatprep.mubr.bf16.mxu0 0
        %921 = vmatmul.mubr.bf16.gmra.mxu0 %v798
        %v922 = vpop.f32.mrf.mxu0
        %v923 = vadd.f32 0.0, %v922
        %v924 = vpop.f32.mrf.mxu0
        %v925 = vpop.f32.mrf.mxu0
        %v926 = vadd.f32 0.0, %v925
        %v927 = vpop.f32.mrf.mxu0
        %928 = vmatprep.mubr.bf16.mxu0 0
        %929 = vmatmul.mubr.bf16.gmra.mxu0 %v801
        %v930 = vpop.f32.mrf.mxu0
        %v931 = vadd.f32 0.0, %v930
        %v932 = vpop.f32.mrf.mxu0
        %v933 = vpop.f32.mrf.mxu0
        %v934 = vadd.f32 0.0, %v933
        %v935 = vpop.f32.mrf.mxu0
        %936 = vmatprep.mubr.bf16.mxu0 0
        %937 = vmatmul.mubr.bf16.gmra.mxu0 %v804
        %v938 = vpop.f32.mrf.mxu0
        %v939 = vadd.f32 0.0, %v938
        %v940 = vpop.f32.mrf.mxu0
        %v941 = vpop.f32.mrf.mxu0
        %v942 = vadd.f32 0.0, %v941
        %v943 = vpop.f32.mrf.mxu0
        %944 = vmatprep.mubr.bf16.mxu0 0
        %945 = vmatmul.mubr.bf16.gmra.mxu0 %v807
        %v946 = vpop.f32.mrf.mxu0
        %v947 = vadd.f32 0.0, %v946
        %v948 = vpop.f32.mrf.mxu0
        %v949 = vpop.f32.mrf.mxu0
        %v950 = vadd.f32 0.0, %v949
        %v951 = vpop.f32.mrf.mxu0
        %952 = vmatprep.mubr.bf16.mxu0 0
        %953 = vmatmul.mubr.bf16.gmra.mxu0 %v810
        %v954 = vpop.f32.mrf.mxu0
        %v955 = vadd.f32 0.0, %v954
        %v956 = vpop.f32.mrf.mxu0
        %v957 = vpop.f32.mrf.mxu0
        %v958 = vadd.f32 0.0, %v957
        %v959 = vpop.f32.mrf.mxu0
        %960 = vmatprep.mubr.bf16.mxu0 0
        %961 = vmatmul.mubr.bf16.gmra.mxu0 %v813
        %v962 = vpop.f32.mrf.mxu0
        %v963 = vadd.f32 0.0, %v962
        %v964 = vpop.f32.mrf.mxu0
        %v965 = vpop.f32.mrf.mxu0
        %v966 = vadd.f32 0.0, %v965
        %v967 = vpop.f32.mrf.mxu0
        %968 = vmatprep.mubr.bf16.mxu0 0
        %969 = vmatmul.mubr.bf16.gmra.mxu0 %v816
        %v970 = vpop.f32.mrf.mxu0
        %v971 = vadd.f32 0.0, %v970
        %v972 = vpop.f32.mrf.mxu0
        %v973 = vpop.f32.mrf.mxu0
        %v974 = vadd.f32 0.0, %v973
        %v975 = vpop.f32.mrf.mxu0
        %976 = vmatprep.mubr.bf16.mxu0 0
        %977 = vmatmul.mubr.bf16.gmra.mxu0 %v819
        %v978 = vpop.f32.mrf.mxu0
        %v979 = vadd.f32 0.0, %v978
        %v980 = vpop.f32.mrf.mxu0
        %v981 = vpop.f32.mrf.mxu0
        %v982 = vadd.f32 0.0, %v981
        %v983 = vpop.f32.mrf.mxu0
        %984 = vdwg.mxu0
        %v985 = vadd.f32 %v597, %v859
        %v986 = vadd.f32 %v600, %v862
        %v987 = vadd.f32 %v605, %v867
        %v988 = vadd.f32 %v608, %v870
        %v989 = vadd.f32 %v613, %v875
        %v990 = vadd.f32 %v616, %v878
        %v991 = vadd.f32 %v621, %v883
        %v992 = vadd.f32 %v624, %v886
        %v993 = vadd.f32 %v629, %v891
        %v994 = vadd.f32 %v632, %v894
        %v995 = vadd.f32 %v637, %v899
        %v996 = vadd.f32 %v640, %v902
        %v997 = vadd.f32 %v645, %v907
        %v998 = vadd.f32 %v648, %v910
        %v999 = vadd.f32 %v653, %v915
        %v1000 = vadd.f32 %v656, %v918
        %v1001 = vadd.f32 %v661, %v923
        %v1002 = vadd.f32 %v664, %v926
        %v1003 = vadd.f32 %v669, %v931
        %v1004 = vadd.f32 %v672, %v934
        %v1005 = vadd.f32 %v677, %v939
        %v1006 = vadd.f32 %v680, %v942
        %v1007 = vadd.f32 %v685, %v947
        %v1008 = vadd.f32 %v688, %v950
        %v1009 = vadd.f32 %v693, %v955
        %v1010 = vadd.f32 %v696, %v958
        %v1011 = vadd.f32 %v701, %v963
        %v1012 = vadd.f32 %v704, %v966
        %v1013 = vadd.f32 %v709, %v971
        %v1014 = vadd.f32 %v712, %v974
        %v1015 = vadd.f32 %v717, %v979
        %v1016 = vadd.f32 %v720, %v982
        %s1017 = scalar_lea.vmem %s195, 24
        %v1018 = vld [vmem:[%s1017] sm:$0xff]
        %v1019 = vld [vmem:[%s1017 + $0x8] sm:$0xff]
        %v1020 = vld [vmem:[%s1017 + $0x18] sm:$0xff]
        %v1021 = vld [vmem:[%s1017 + $0x20] sm:$0xff]
        %v1022 = vld [vmem:[%s1017 + $0x30] sm:$0xff]
        %v1023 = vld [vmem:[%s1017 + $0x38] sm:$0xff]
        %v1024 = vld [vmem:[%s1017 + $0x48] sm:$0xff]
        %v1025 = vld [vmem:[%s1017 + $0x50] sm:$0xff]
        %v1026 = vld [vmem:[%s1017 + $0x60] sm:$0xff]
        %v1027 = vld [vmem:[%s1017 + $0x68] sm:$0xff]
        %v1028 = vld [vmem:[%s1017 + $0x78] sm:$0xff]
        %v1029 = vld [vmem:[%s1017 + $0x80] sm:$0xff]
        %v1030 = vld [vmem:[%s1017 + $0x90] sm:$0xff]
        %v1031 = vld [vmem:[%s1017 + $0x98] sm:$0xff]
        %v1032 = vld [vmem:[%s1017 + $0xa8] sm:$0xff]
        %v1033 = vld [vmem:[%s1017 + $0xb0] sm:$0xff]
        %v1034 = vld [vmem:[%s1017 + $0xc0] sm:$0xff]
        %v1035 = vld [vmem:[%s1017 + $0xc8] sm:$0xff]
        %v1036 = vld [vmem:[%s1017 + $0xd8] sm:$0xff]
        %v1037 = vld [vmem:[%s1017 + $0xe0] sm:$0xff]
        %v1038 = vld [vmem:[%s1017 + $0xf0] sm:$0xff]
        %v1039 = vld [vmem:[%s1017 + $0xf8] sm:$0xff]
        %v1040 = vld [vmem:[%s1017 + $0x108] sm:$0xff]
        %v1041 = vld [vmem:[%s1017 + $0x110] sm:$0xff]
        %v1042 = vld [vmem:[%s1017 + $0x120] sm:$0xff]
        %v1043 = vld [vmem:[%s1017 + $0x128] sm:$0xff]
        %v1044 = vld [vmem:[%s1017 + $0x138] sm:$0xff]
        %v1045 = vld [vmem:[%s1017 + $0x140] sm:$0xff]
        %v1046 = vld [vmem:[%s1017 + $0x150] sm:$0xff]
        %v1047 = vld [vmem:[%s1017 + $0x158] sm:$0xff]
        %v1048 = vld [vmem:[%s1017 + $0x168] sm:$0xff]
        %v1049 = vld [vmem:[%s1017 + $0x170] sm:$0xff]
        %v1050 = vpack.c.bf16 %v1019, %v1018
        %v1051 = vpack.c.bf16 %v1021, %v1020
        %v1052 = vpack.c.bf16 %v1023, %v1022
        %v1053 = vpack.c.bf16 %v1025, %v1024
        %v1054 = vpack.c.bf16 %v1027, %v1026
        %v1055 = vpack.c.bf16 %v1029, %v1028
        %v1056 = vpack.c.bf16 %v1031, %v1030
        %v1057 = vpack.c.bf16 %v1033, %v1032
        %v1058 = vpack.c.bf16 %v1035, %v1034
        %v1059 = vpack.c.bf16 %v1037, %v1036
        %v1060 = vpack.c.bf16 %v1039, %v1038
        %v1061 = vpack.c.bf16 %v1041, %v1040
        %v1062 = vpack.c.bf16 %v1043, %v1042
        %v1063 = vpack.c.bf16 %v1045, %v1044
        %v1064 = vpack.c.bf16 %v1047, %v1046
        %v1065 = vpack.c.bf16 %v1049, %v1048
        %s1066 = scalar_lea.vmem %s1, 12
        %v1067 = vld [vmem:[%s1066] sm:$0xf]
        %v1069 = vsel %vm297, %v1050, 0
        %v1072 = vsel %vm297, %v1051, 0
        %v1075 = vsel %vm297, %v1052, 0
        %v1078 = vsel %vm297, %v1053, 0
        %v1081 = vsel %vm297, %v1054, 0
        %v1084 = vsel %vm297, %v1055, 0
        %v1087 = vsel %vm297, %v1056, 0
        %v1090 = vsel %vm297, %v1057, 0
        %v1093 = vsel %vm297, %v1058, 0
        %v1096 = vsel %vm297, %v1059, 0
        %v1099 = vsel %vm297, %v1060, 0
        %v1102 = vsel %vm297, %v1061, 0
        %v1105 = vsel %vm297, %v1062, 0
        %v1108 = vsel %vm297, %v1063, 0
        %v1111 = vsel %vm297, %v1064, 0
        %v1114 = vsel %vm297, %v1065, 0
        %v1117 = vsel %vm346, %v1067, 0
        %1119 = vmatprep.subr.bf16.mxu0 0
        %1120 = vmatpush1.bf16.msra.mxu0 0
        %1121 = vmatprep.subr.bf16.mxu0 0
        %1122 = vmatpush1.bf16.msra.mxu0 0
        %1123 = vmatprep.subr.bf16.mxu0 0
        %1124 = vmatpush1.bf16.msra.mxu0 0
        %1125 = vmatprep.subr.bf16.mxu0 0
        %1126 = vmatpush1.bf16.msra.mxu0 0
        %1127 = vmatprep.subr.bf16.mxu0 0
        %1128 = vmatpush1.bf16.msra.mxu0 0
        %1129 = vmatprep.subr.bf16.mxu0 0
        %1130 = vmatpush1.bf16.msra.mxu0 0
        %1131 = vmatprep.subr.bf16.mxu0 0
        %1132 = vmatpush1.bf16.msra.mxu0 0
        %1133 = vmatprep.subr.bf16.mxu0 0
        %1134 = vmatpush1.bf16.msra.mxu0 %v1117
        %1135 = vmatprep.subr.bf16.mxu0 0
        %1136 = vmatpush2.bf16.msra.mxu0 0
        %1137 = vmatprep.subr.bf16.mxu0 0
        %1138 = vmatpush2.bf16.msra.mxu0 0
        %1139 = vmatprep.subr.bf16.mxu0 0
        %1140 = vmatpush2.bf16.msra.mxu0 0
        %1141 = vmatprep.subr.bf16.mxu0 0
        %1142 = vmatpush2.bf16.msra.mxu0 0
        %1143 = vmatprep.subr.bf16.mxu0 0
        %1144 = vmatpush2.bf16.msra.mxu0 0
        %1145 = vmatprep.subr.bf16.mxu0 0
        %1146 = vmatpush2.bf16.msra.mxu0 0
        %1147 = vmatprep.subr.bf16.mxu0 0
        %1148 = vmatpush2.bf16.msra.mxu0 0
        %1149 = vmatprep.subr.bf16.mxu0 0
        %1150 = vmatpush2.bf16.msra.mxu0 0
        %1151 = vmatprep.mubr.bf16.mxu0 0
        %1152 = vmatmul.mubr.bf16.gmra.mxu0 %v1069
        %v1153 = vpop.f32.mrf.mxu0
        %v1154 = vadd.f32 0.0, %v1153
        %v1155 = vpop.f32.mrf.mxu0
        %v1156 = vpop.f32.mrf.mxu0
        %v1157 = vadd.f32 0.0, %v1156
        %v1158 = vpop.f32.mrf.mxu0
        %1159 = vmatprep.mubr.bf16.mxu0 0
        %1160 = vmatmul.mubr.bf16.gmra.mxu0 %v1072
        %v1161 = vpop.f32.mrf.mxu0
        %v1162 = vadd.f32 0.0, %v1161
        %v1163 = vpop.f32.mrf.mxu0
        %v1164 = vpop.f32.mrf.mxu0
        %v1165 = vadd.f32 0.0, %v1164
        %v1166 = vpop.f32.mrf.mxu0
        %1167 = vmatprep.mubr.bf16.mxu0 0
        %1168 = vmatmul.mubr.bf16.gmra.mxu0 %v1075
        %v1169 = vpop.f32.mrf.mxu0
        %v1170 = vadd.f32 0.0, %v1169
        %v1171 = vpop.f32.mrf.mxu0
        %v1172 = vpop.f32.mrf.mxu0
        %v1173 = vadd.f32 0.0, %v1172
        %v1174 = vpop.f32.mrf.mxu0
        %1175 = vmatprep.mubr.bf16.mxu0 0
        %1176 = vmatmul.mubr.bf16.gmra.mxu0 %v1078
        %v1177 = vpop.f32.mrf.mxu0
        %v1178 = vadd.f32 0.0, %v1177
        %v1179 = vpop.f32.mrf.mxu0
        %v1180 = vpop.f32.mrf.mxu0
        %v1181 = vadd.f32 0.0, %v1180
        %v1182 = vpop.f32.mrf.mxu0
        %1183 = vmatprep.mubr.bf16.mxu0 0
        %1184 = vmatmul.mubr.bf16.gmra.mxu0 %v1081
        %v1185 = vpop.f32.mrf.mxu0
        %v1186 = vadd.f32 0.0, %v1185
        %v1187 = vpop.f32.mrf.mxu0
        %v1188 = vpop.f32.mrf.mxu0
        %v1189 = vadd.f32 0.0, %v1188
        %v1190 = vpop.f32.mrf.mxu0
        %1191 = vmatprep.mubr.bf16.mxu0 0
        %1192 = vmatmul.mubr.bf16.gmra.mxu0 %v1084
        %v1193 = vpop.f32.mrf.mxu0
        %v1194 = vadd.f32 0.0, %v1193
        %v1195 = vpop.f32.mrf.mxu0
        %v1196 = vpop.f32.mrf.mxu0
        %v1197 = vadd.f32 0.0, %v1196
        %v1198 = vpop.f32.mrf.mxu0
        %1199 = vmatprep.mubr.bf16.mxu0 0
        %1200 = vmatmul.mubr.bf16.gmra.mxu0 %v1087
        %v1201 = vpop.f32.mrf.mxu0
        %v1202 = vadd.f32 0.0, %v1201
        %v1203 = vpop.f32.mrf.mxu0
        %v1204 = vpop.f32.mrf.mxu0
        %v1205 = vadd.f32 0.0, %v1204
        %v1206 = vpop.f32.mrf.mxu0
        %1207 = vmatprep.mubr.bf16.mxu0 0
        %1208 = vmatmul.mubr.bf16.gmra.mxu0 %v1090
        %v1209 = vpop.f32.mrf.mxu0
        %v1210 = vadd.f32 0.0, %v1209
        %v1211 = vpop.f32.mrf.mxu0
        %v1212 = vpop.f32.mrf.mxu0
        %v1213 = vadd.f32 0.0, %v1212
        %v1214 = vpop.f32.mrf.mxu0
        %1215 = vmatprep.mubr.bf16.mxu0 0
        %1216 = vmatmul.mubr.bf16.gmra.mxu0 %v1093
        %v1217 = vpop.f32.mrf.mxu0
        %v1218 = vadd.f32 0.0, %v1217
        %v1219 = vpop.f32.mrf.mxu0
        %v1220 = vpop.f32.mrf.mxu0
        %v1221 = vadd.f32 0.0, %v1220
        %v1222 = vpop.f32.mrf.mxu0
        %1223 = vmatprep.mubr.bf16.mxu0 0
        %1224 = vmatmul.mubr.bf16.gmra.mxu0 %v1096
        %v1225 = vpop.f32.mrf.mxu0
        %v1226 = vadd.f32 0.0, %v1225
        %v1227 = vpop.f32.mrf.mxu0
        %v1228 = vpop.f32.mrf.mxu0
        %v1229 = vadd.f32 0.0, %v1228
        %v1230 = vpop.f32.mrf.mxu0
        %1231 = vmatprep.mubr.bf16.mxu0 0
        %1232 = vmatmul.mubr.bf16.gmra.mxu0 %v1099
        %v1233 = vpop.f32.mrf.mxu0
        %v1234 = vadd.f32 0.0, %v1233
        %v1235 = vpop.f32.mrf.mxu0
        %v1236 = vpop.f32.mrf.mxu0
        %v1237 = vadd.f32 0.0, %v1236
        %v1238 = vpop.f32.mrf.mxu0
        %1239 = vmatprep.mubr.bf16.mxu0 0
        %1240 = vmatmul.mubr.bf16.gmra.mxu0 %v1102
        %v1241 = vpop.f32.mrf.mxu0
        %v1242 = vadd.f32 0.0, %v1241
        %v1243 = vpop.f32.mrf.mxu0
        %v1244 = vpop.f32.mrf.mxu0
        %v1245 = vadd.f32 0.0, %v1244
        %v1246 = vpop.f32.mrf.mxu0
        %1247 = vmatprep.mubr.bf16.mxu0 0
        %1248 = vmatmul.mubr.bf16.gmra.mxu0 %v1105
        %v1249 = vpop.f32.mrf.mxu0
        %v1250 = vadd.f32 0.0, %v1249
        %v1251 = vpop.f32.mrf.mxu0
        %v1252 = vpop.f32.mrf.mxu0
        %v1253 = vadd.f32 0.0, %v1252
        %v1254 = vpop.f32.mrf.mxu0
        %1255 = vmatprep.mubr.bf16.mxu0 0
        %1256 = vmatmul.mubr.bf16.gmra.mxu0 %v1108
        %v1257 = vpop.f32.mrf.mxu0
        %v1258 = vadd.f32 0.0, %v1257
        %v1259 = vpop.f32.mrf.mxu0
        %v1260 = vpop.f32.mrf.mxu0
        %v1261 = vadd.f32 0.0, %v1260
        %v1262 = vpop.f32.mrf.mxu0
        %1263 = vmatprep.mubr.bf16.mxu0 0
        %1264 = vmatmul.mubr.bf16.gmra.mxu0 %v1111
        %v1265 = vpop.f32.mrf.mxu0
        %v1266 = vadd.f32 0.0, %v1265
        %v1267 = vpop.f32.mrf.mxu0
        %v1268 = vpop.f32.mrf.mxu0
        %v1269 = vadd.f32 0.0, %v1268
        %v1270 = vpop.f32.mrf.mxu0
        %1271 = vmatprep.mubr.bf16.mxu0 0
        %1272 = vmatmul.mubr.bf16.gmra.mxu0 %v1114
        %v1273 = vpop.f32.mrf.mxu0
        %v1274 = vadd.f32 0.0, %v1273
        %v1275 = vpop.f32.mrf.mxu0
        %v1276 = vpop.f32.mrf.mxu0
        %v1277 = vadd.f32 0.0, %v1276
        %v1278 = vpop.f32.mrf.mxu0
        %1279 = vdwg.mxu0
        %v1280 = vadd.f32 %v985, %v1154
        %v1281 = vadd.f32 %v986, %v1157
        %v1282 = vadd.f32 %v987, %v1162
        %v1283 = vadd.f32 %v988, %v1165
        %v1284 = vadd.f32 %v989, %v1170
        %v1285 = vadd.f32 %v990, %v1173
        %v1286 = vadd.f32 %v991, %v1178
        %v1287 = vadd.f32 %v992, %v1181
        %v1288 = vadd.f32 %v993, %v1186
        %v1289 = vadd.f32 %v994, %v1189
        %v1290 = vadd.f32 %v995, %v1194
        %v1291 = vadd.f32 %v996, %v1197
        %v1292 = vadd.f32 %v997, %v1202
        %v1293 = vadd.f32 %v998, %v1205
        %v1294 = vadd.f32 %v999, %v1210
        %v1295 = vadd.f32 %v1000, %v1213
        %v1296 = vadd.f32 %v1001, %v1218
        %v1297 = vadd.f32 %v1002, %v1221
        %v1298 = vadd.f32 %v1003, %v1226
        %v1299 = vadd.f32 %v1004, %v1229
        %v1300 = vadd.f32 %v1005, %v1234
        %v1301 = vadd.f32 %v1006, %v1237
        %v1302 = vadd.f32 %v1007, %v1242
        %v1303 = vadd.f32 %v1008, %v1245
        %v1304 = vadd.f32 %v1009, %v1250
        %v1305 = vadd.f32 %v1010, %v1253
        %v1306 = vadd.f32 %v1011, %v1258
        %v1307 = vadd.f32 %v1012, %v1261
        %v1308 = vadd.f32 %v1013, %v1266
        %v1309 = vadd.f32 %v1014, %v1269
        %v1310 = vadd.f32 %v1015, %v1274
        %v1311 = vadd.f32 %v1016, %v1277
        %v1312 = vld [vmem:[%s1017 + $0x1] sm:$0xff]
        %v1313 = vld [vmem:[%s1017 + $0x9] sm:$0xff]
        %v1314 = vld [vmem:[%s1017 + $0x19] sm:$0xff]
        %v1315 = vld [vmem:[%s1017 + $0x21] sm:$0xff]
        %v1316 = vld [vmem:[%s1017 + $0x31] sm:$0xff]
        %v1317 = vld [vmem:[%s1017 + $0x39] sm:$0xff]
        %v1318 = vld [vmem:[%s1017 + $0x49] sm:$0xff]
        %v1319 = vld [vmem:[%s1017 + $0x51] sm:$0xff]
        %v1320 = vld [vmem:[%s1017 + $0x61] sm:$0xff]
        %v1321 = vld [vmem:[%s1017 + $0x69] sm:$0xff]
        %v1322 = vld [vmem:[%s1017 + $0x79] sm:$0xff]
        %v1323 = vld [vmem:[%s1017 + $0x81] sm:$0xff]
        %v1324 = vld [vmem:[%s1017 + $0x91] sm:$0xff]
        %v1325 = vld [vmem:[%s1017 + $0x99] sm:$0xff]
        %v1326 = vld [vmem:[%s1017 + $0xa9] sm:$0xff]
        %v1327 = vld [vmem:[%s1017 + $0xb1] sm:$0xff]
        %v1328 = vld [vmem:[%s1017 + $0xc1] sm:$0xff]
        %v1329 = vld [vmem:[%s1017 + $0xc9] sm:$0xff]
        %v1330 = vld [vmem:[%s1017 + $0xd9] sm:$0xff]
        %v1331 = vld [vmem:[%s1017 + $0xe1] sm:$0xff]
        %v1332 = vld [vmem:[%s1017 + $0xf1] sm:$0xff]
        %v1333 = vld [vmem:[%s1017 + $0xf9] sm:$0xff]
        %v1334 = vld [vmem:[%s1017 + $0x109] sm:$0xff]
        %v1335 = vld [vmem:[%s1017 + $0x111] sm:$0xff]
        %v1336 = vld [vmem:[%s1017 + $0x121] sm:$0xff]
        %v1337 = vld [vmem:[%s1017 + $0x129] sm:$0xff]
        %v1338 = vld [vmem:[%s1017 + $0x139] sm:$0xff]
        %v1339 = vld [vmem:[%s1017 + $0x141] sm:$0xff]
        %v1340 = vld [vmem:[%s1017 + $0x151] sm:$0xff]
        %v1341 = vld [vmem:[%s1017 + $0x159] sm:$0xff]
        %v1342 = vld [vmem:[%s1017 + $0x169] sm:$0xff]
        %v1343 = vld [vmem:[%s1017 + $0x171] sm:$0xff]
        %v1344 = vpack.c.bf16 %v1313, %v1312
        %v1345 = vpack.c.bf16 %v1315, %v1314
        %v1346 = vpack.c.bf16 %v1317, %v1316
        %v1347 = vpack.c.bf16 %v1319, %v1318
        %v1348 = vpack.c.bf16 %v1321, %v1320
        %v1349 = vpack.c.bf16 %v1323, %v1322
        %v1350 = vpack.c.bf16 %v1325, %v1324
        %v1351 = vpack.c.bf16 %v1327, %v1326
        %v1352 = vpack.c.bf16 %v1329, %v1328
        %v1353 = vpack.c.bf16 %v1331, %v1330
        %v1354 = vpack.c.bf16 %v1333, %v1332
        %v1355 = vpack.c.bf16 %v1335, %v1334
        %v1356 = vpack.c.bf16 %v1337, %v1336
        %v1357 = vpack.c.bf16 %v1339, %v1338
        %v1358 = vpack.c.bf16 %v1341, %v1340
        %v1359 = vpack.c.bf16 %v1343, %v1342
        %s1360 = scalar_lea.vmem %s1, 16
        %v1361 = vld [vmem:[%s1360] sm:$0xf]
        %v1363 = vsel %vm297, %v1344, 0
        %v1366 = vsel %vm297, %v1345, 0
        %v1369 = vsel %vm297, %v1346, 0
        %v1372 = vsel %vm297, %v1347, 0
        %v1375 = vsel %vm297, %v1348, 0
        %v1378 = vsel %vm297, %v1349, 0
        %v1381 = vsel %vm297, %v1350, 0
        %v1384 = vsel %vm297, %v1351, 0
        %v1387 = vsel %vm297, %v1352, 0
        %v1390 = vsel %vm297, %v1353, 0
        %v1393 = vsel %vm297, %v1354, 0
        %v1396 = vsel %vm297, %v1355, 0
        %v1399 = vsel %vm297, %v1356, 0
        %v1402 = vsel %vm297, %v1357, 0
        %v1405 = vsel %vm297, %v1358, 0
        %v1408 = vsel %vm297, %v1359, 0
        %v1411 = vsel %vm346, %v1361, 0
        %1413 = vmatprep.subr.bf16.mxu0 0
        %1414 = vmatpush1.bf16.msra.mxu0 0
        %1415 = vmatprep.subr.bf16.mxu0 0
        %1416 = vmatpush1.bf16.msra.mxu0 0
        %1417 = vmatprep.subr.bf16.mxu0 0
        %1418 = vmatpush1.bf16.msra.mxu0 0
        %1419 = vmatprep.subr.bf16.mxu0 0
        %1420 = vmatpush1.bf16.msra.mxu0 0
        %1421 = vmatprep.subr.bf16.mxu0 0
        %1422 = vmatpush1.bf16.msra.mxu0 0
        %1423 = vmatprep.subr.bf16.mxu0 0
        %1424 = vmatpush1.bf16.msra.mxu0 0
        %1425 = vmatprep.subr.bf16.mxu0 0
        %1426 = vmatpush1.bf16.msra.mxu0 0
        %1427 = vmatprep.subr.bf16.mxu0 0
        %1428 = vmatpush1.bf16.msra.mxu0 %v1411
        %1429 = vmatprep.subr.bf16.mxu0 0
        %1430 = vmatpush2.bf16.msra.mxu0 0
        %1431 = vmatprep.subr.bf16.mxu0 0
        %1432 = vmatpush2.bf16.msra.mxu0 0
        %1433 = vmatprep.subr.bf16.mxu0 0
        %1434 = vmatpush2.bf16.msra.mxu0 0
        %1435 = vmatprep.subr.bf16.mxu0 0
        %1436 = vmatpush2.bf16.msra.mxu0 0
        %1437 = vmatprep.subr.bf16.mxu0 0
        %1438 = vmatpush2.bf16.msra.mxu0 0
        %1439 = vmatprep.subr.bf16.mxu0 0
        %1440 = vmatpush2.bf16.msra.mxu0 0
        %1441 = vmatprep.subr.bf16.mxu0 0
        %1442 = vmatpush2.bf16.msra.mxu0 0
        %1443 = vmatprep.subr.bf16.mxu0 0
        %1444 = vmatpush2.bf16.msra.mxu0 0
        %1445 = vmatprep.mubr.bf16.mxu0 0
        %1446 = vmatmul.mubr.bf16.gmra.mxu0 %v1363
        %v1447 = vpop.f32.mrf.mxu0
        %v1448 = vadd.f32 0.0, %v1447
        %v1449 = vpop.f32.mrf.mxu0
        %v1450 = vpop.f32.mrf.mxu0
        %v1451 = vadd.f32 0.0, %v1450
        %v1452 = vpop.f32.mrf.mxu0
        %1453 = vmatprep.mubr.bf16.mxu0 0
        %1454 = vmatmul.mubr.bf16.gmra.mxu0 %v1366
        %v1455 = vpop.f32.mrf.mxu0
        %v1456 = vadd.f32 0.0, %v1455
        %v1457 = vpop.f32.mrf.mxu0
        %v1458 = vpop.f32.mrf.mxu0
        %v1459 = vadd.f32 0.0, %v1458
        %v1460 = vpop.f32.mrf.mxu0
        %1461 = vmatprep.mubr.bf16.mxu0 0
        %1462 = vmatmul.mubr.bf16.gmra.mxu0 %v1369
        %v1463 = vpop.f32.mrf.mxu0
        %v1464 = vadd.f32 0.0, %v1463
        %v1465 = vpop.f32.mrf.mxu0
        %v1466 = vpop.f32.mrf.mxu0
        %v1467 = vadd.f32 0.0, %v1466
        %v1468 = vpop.f32.mrf.mxu0
        %1469 = vmatprep.mubr.bf16.mxu0 0
        %1470 = vmatmul.mubr.bf16.gmra.mxu0 %v1372
        %v1471 = vpop.f32.mrf.mxu0
        %v1472 = vadd.f32 0.0, %v1471
        %v1473 = vpop.f32.mrf.mxu0
        %v1474 = vpop.f32.mrf.mxu0
        %v1475 = vadd.f32 0.0, %v1474
        %v1476 = vpop.f32.mrf.mxu0
        %1477 = vmatprep.mubr.bf16.mxu0 0
        %1478 = vmatmul.mubr.bf16.gmra.mxu0 %v1375
        %v1479 = vpop.f32.mrf.mxu0
        %v1480 = vadd.f32 0.0, %v1479
        %v1481 = vpop.f32.mrf.mxu0
        %v1482 = vpop.f32.mrf.mxu0
        %v1483 = vadd.f32 0.0, %v1482
        %v1484 = vpop.f32.mrf.mxu0
        %1485 = vmatprep.mubr.bf16.mxu0 0
        %1486 = vmatmul.mubr.bf16.gmra.mxu0 %v1378
        %v1487 = vpop.f32.mrf.mxu0
        %v1488 = vadd.f32 0.0, %v1487
        %v1489 = vpop.f32.mrf.mxu0
        %v1490 = vpop.f32.mrf.mxu0
        %v1491 = vadd.f32 0.0, %v1490
        %v1492 = vpop.f32.mrf.mxu0
        %1493 = vmatprep.mubr.bf16.mxu0 0
        %1494 = vmatmul.mubr.bf16.gmra.mxu0 %v1381
        %v1495 = vpop.f32.mrf.mxu0
        %v1496 = vadd.f32 0.0, %v1495
        %v1497 = vpop.f32.mrf.mxu0
        %v1498 = vpop.f32.mrf.mxu0
        %v1499 = vadd.f32 0.0, %v1498
        %v1500 = vpop.f32.mrf.mxu0
        %1501 = vmatprep.mubr.bf16.mxu0 0
        %1502 = vmatmul.mubr.bf16.gmra.mxu0 %v1384
        %v1503 = vpop.f32.mrf.mxu0
        %v1504 = vadd.f32 0.0, %v1503
        %v1505 = vpop.f32.mrf.mxu0
        %v1506 = vpop.f32.mrf.mxu0
        %v1507 = vadd.f32 0.0, %v1506
        %v1508 = vpop.f32.mrf.mxu0
        %1509 = vmatprep.mubr.bf16.mxu0 0
        %1510 = vmatmul.mubr.bf16.gmra.mxu0 %v1387
        %v1511 = vpop.f32.mrf.mxu0
        %v1512 = vadd.f32 0.0, %v1511
        %v1513 = vpop.f32.mrf.mxu0
        %v1514 = vpop.f32.mrf.mxu0
        %v1515 = vadd.f32 0.0, %v1514
        %v1516 = vpop.f32.mrf.mxu0
        %1517 = vmatprep.mubr.bf16.mxu0 0
        %1518 = vmatmul.mubr.bf16.gmra.mxu0 %v1390
        %v1519 = vpop.f32.mrf.mxu0
        %v1520 = vadd.f32 0.0, %v1519
        %v1521 = vpop.f32.mrf.mxu0
        %v1522 = vpop.f32.mrf.mxu0
        %v1523 = vadd.f32 0.0, %v1522
        %v1524 = vpop.f32.mrf.mxu0
        %1525 = vmatprep.mubr.bf16.mxu0 0
        %1526 = vmatmul.mubr.bf16.gmra.mxu0 %v1393
        %v1527 = vpop.f32.mrf.mxu0
        %v1528 = vadd.f32 0.0, %v1527
        %v1529 = vpop.f32.mrf.mxu0
        %v1530 = vpop.f32.mrf.mxu0
        %v1531 = vadd.f32 0.0, %v1530
        %v1532 = vpop.f32.mrf.mxu0
        %1533 = vmatprep.mubr.bf16.mxu0 0
        %1534 = vmatmul.mubr.bf16.gmra.mxu0 %v1396
        %v1535 = vpop.f32.mrf.mxu0
        %v1536 = vadd.f32 0.0, %v1535
        %v1537 = vpop.f32.mrf.mxu0
        %v1538 = vpop.f32.mrf.mxu0
        %v1539 = vadd.f32 0.0, %v1538
        %v1540 = vpop.f32.mrf.mxu0
        %1541 = vmatprep.mubr.bf16.mxu0 0
        %1542 = vmatmul.mubr.bf16.gmra.mxu0 %v1399
        %v1543 = vpop.f32.mrf.mxu0
        %v1544 = vadd.f32 0.0, %v1543
        %v1545 = vpop.f32.mrf.mxu0
        %v1546 = vpop.f32.mrf.mxu0
        %v1547 = vadd.f32 0.0, %v1546
        %v1548 = vpop.f32.mrf.mxu0
        %1549 = vmatprep.mubr.bf16.mxu0 0
        %1550 = vmatmul.mubr.bf16.gmra.mxu0 %v1402
        %v1551 = vpop.f32.mrf.mxu0
        %v1552 = vadd.f32 0.0, %v1551
        %v1553 = vpop.f32.mrf.mxu0
        %v1554 = vpop.f32.mrf.mxu0
        %v1555 = vadd.f32 0.0, %v1554
        %v1556 = vpop.f32.mrf.mxu0
        %1557 = vmatprep.mubr.bf16.mxu0 0
        %1558 = vmatmul.mubr.bf16.gmra.mxu0 %v1405
        %v1559 = vpop.f32.mrf.mxu0
        %v1560 = vadd.f32 0.0, %v1559
        %v1561 = vpop.f32.mrf.mxu0
        %v1562 = vpop.f32.mrf.mxu0
        %v1563 = vadd.f32 0.0, %v1562
        %v1564 = vpop.f32.mrf.mxu0
        %1565 = vmatprep.mubr.bf16.mxu0 0
        %1566 = vmatmul.mubr.bf16.gmra.mxu0 %v1408
        %v1567 = vpop.f32.mrf.mxu0
        %v1568 = vadd.f32 0.0, %v1567
        %v1569 = vpop.f32.mrf.mxu0
        %v1570 = vpop.f32.mrf.mxu0
        %v1571 = vadd.f32 0.0, %v1570
        %v1572 = vpop.f32.mrf.mxu0
        %1573 = vdwg.mxu0
        %v1574 = vadd.f32 %v1280, %v1448
        %v1575 = vadd.f32 %v1281, %v1451
        %v1576 = vadd.f32 %v1282, %v1456
        %v1577 = vadd.f32 %v1283, %v1459
        %v1578 = vadd.f32 %v1284, %v1464
        %v1579 = vadd.f32 %v1285, %v1467
        %v1580 = vadd.f32 %v1286, %v1472
        %v1581 = vadd.f32 %v1287, %v1475
        %v1582 = vadd.f32 %v1288, %v1480
        %v1583 = vadd.f32 %v1289, %v1483
        %v1584 = vadd.f32 %v1290, %v1488
        %v1585 = vadd.f32 %v1291, %v1491
        %v1586 = vadd.f32 %v1292, %v1496
        %v1587 = vadd.f32 %v1293, %v1499
        %v1588 = vadd.f32 %v1294, %v1504
        %v1589 = vadd.f32 %v1295, %v1507
        %v1590 = vadd.f32 %v1296, %v1512
        %v1591 = vadd.f32 %v1297, %v1515
        %v1592 = vadd.f32 %v1298, %v1520
        %v1593 = vadd.f32 %v1299, %v1523
        %v1594 = vadd.f32 %v1300, %v1528
        %v1595 = vadd.f32 %v1301, %v1531
        %v1596 = vadd.f32 %v1302, %v1536
        %v1597 = vadd.f32 %v1303, %v1539
        %v1598 = vadd.f32 %v1304, %v1544
        %v1599 = vadd.f32 %v1305, %v1547
        %v1600 = vadd.f32 %v1306, %v1552
        %v1601 = vadd.f32 %v1307, %v1555
        %v1602 = vadd.f32 %v1308, %v1560
        %v1603 = vadd.f32 %v1309, %v1563
        %v1604 = vadd.f32 %v1310, %v1568
        %v1605 = vadd.f32 %v1311, %v1571
        %v1606 = vld [vmem:[%s1017 + $0x2] sm:$0xff]
        %v1607 = vld [vmem:[%s1017 + $0xa] sm:$0xff]
        %v1608 = vld [vmem:[%s1017 + $0x1a] sm:$0xff]
        %v1609 = vld [vmem:[%s1017 + $0x22] sm:$0xff]
        %v1610 = vld [vmem:[%s1017 + $0x32] sm:$0xff]
        %v1611 = vld [vmem:[%s1017 + $0x3a] sm:$0xff]
        %v1612 = vld [vmem:[%s1017 + $0x4a] sm:$0xff]
        %v1613 = vld [vmem:[%s1017 + $0x52] sm:$0xff]
        %v1614 = vld [vmem:[%s1017 + $0x62] sm:$0xff]
        %v1615 = vld [vmem:[%s1017 + $0x6a] sm:$0xff]
        %v1616 = vld [vmem:[%s1017 + $0x7a] sm:$0xff]
        %v1617 = vld [vmem:[%s1017 + $0x82] sm:$0xff]
        %v1618 = vld [vmem:[%s1017 + $0x92] sm:$0xff]
        %v1619 = vld [vmem:[%s1017 + $0x9a] sm:$0xff]
        %v1620 = vld [vmem:[%s1017 + $0xaa] sm:$0xff]
        %v1621 = vld [vmem:[%s1017 + $0xb2] sm:$0xff]
        %v1622 = vld [vmem:[%s1017 + $0xc2] sm:$0xff]
        %v1623 = vld [vmem:[%s1017 + $0xca] sm:$0xff]
        %v1624 = vld [vmem:[%s1017 + $0xda] sm:$0xff]
        %v1625 = vld [vmem:[%s1017 + $0xe2] sm:$0xff]
        %v1626 = vld [vmem:[%s1017 + $0xf2] sm:$0xff]
        %v1627 = vld [vmem:[%s1017 + $0xfa] sm:$0xff]
        %v1628 = vld [vmem:[%s1017 + $0x10a] sm:$0xff]
        %v1629 = vld [vmem:[%s1017 + $0x112] sm:$0xff]
        %v1630 = vld [vmem:[%s1017 + $0x122] sm:$0xff]
        %v1631 = vld [vmem:[%s1017 + $0x12a] sm:$0xff]
        %v1632 = vld [vmem:[%s1017 + $0x13a] sm:$0xff]
        %v1633 = vld [vmem:[%s1017 + $0x142] sm:$0xff]
        %v1634 = vld [vmem:[%s1017 + $0x152] sm:$0xff]
        %v1635 = vld [vmem:[%s1017 + $0x15a] sm:$0xff]
        %v1636 = vld [vmem:[%s1017 + $0x16a] sm:$0xff]
        %v1637 = vld [vmem:[%s1017 + $0x172] sm:$0xff]
        %v1638 = vpack.c.bf16 %v1607, %v1606
        %v1639 = vpack.c.bf16 %v1609, %v1608
        %v1640 = vpack.c.bf16 %v1611, %v1610
        %v1641 = vpack.c.bf16 %v1613, %v1612
        %v1642 = vpack.c.bf16 %v1615, %v1614
        %v1643 = vpack.c.bf16 %v1617, %v1616
        %v1644 = vpack.c.bf16 %v1619, %v1618
        %v1645 = vpack.c.bf16 %v1621, %v1620
        %v1646 = vpack.c.bf16 %v1623, %v1622
        %v1647 = vpack.c.bf16 %v1625, %v1624
        %v1648 = vpack.c.bf16 %v1627, %v1626
        %v1649 = vpack.c.bf16 %v1629, %v1628
        %v1650 = vpack.c.bf16 %v1631, %v1630
        %v1651 = vpack.c.bf16 %v1633, %v1632
        %v1652 = vpack.c.bf16 %v1635, %v1634
        %v1653 = vpack.c.bf16 %v1637, %v1636
        %s1654 = scalar_lea.vmem %s1, 20
        %v1655 = vld [vmem:[%s1654] sm:$0xf]
        %v1657 = vsel %vm297, %v1638, 0
        %v1660 = vsel %vm297, %v1639, 0
        %v1663 = vsel %vm297, %v1640, 0
        %v1666 = vsel %vm297, %v1641, 0
        %v1669 = vsel %vm297, %v1642, 0
        %v1672 = vsel %vm297, %v1643, 0
        %v1675 = vsel %vm297, %v1644, 0
        %v1678 = vsel %vm297, %v1645, 0
        %v1681 = vsel %vm297, %v1646, 0
        %v1684 = vsel %vm297, %v1647, 0
        %v1687 = vsel %vm297, %v1648, 0
        %v1690 = vsel %vm297, %v1649, 0
        %v1693 = vsel %vm297, %v1650, 0
        %v1696 = vsel %vm297, %v1651, 0
        %v1699 = vsel %vm297, %v1652, 0
        %v1702 = vsel %vm297, %v1653, 0
        %v1705 = vsel %vm346, %v1655, 0
        %1707 = vmatprep.subr.bf16.mxu0 0
        %1708 = vmatpush1.bf16.msra.mxu0 0
        %1709 = vmatprep.subr.bf16.mxu0 0
        %1710 = vmatpush1.bf16.msra.mxu0 0
        %1711 = vmatprep.subr.bf16.mxu0 0
        %1712 = vmatpush1.bf16.msra.mxu0 0
        %1713 = vmatprep.subr.bf16.mxu0 0
        %1714 = vmatpush1.bf16.msra.mxu0 0
        %1715 = vmatprep.subr.bf16.mxu0 0
        %1716 = vmatpush1.bf16.msra.mxu0 0
        %1717 = vmatprep.subr.bf16.mxu0 0
        %1718 = vmatpush1.bf16.msra.mxu0 0
        %1719 = vmatprep.subr.bf16.mxu0 0
        %1720 = vmatpush1.bf16.msra.mxu0 0
        %1721 = vmatprep.subr.bf16.mxu0 0
        %1722 = vmatpush1.bf16.msra.mxu0 %v1705
        %1723 = vmatprep.subr.bf16.mxu0 0
        %1724 = vmatpush2.bf16.msra.mxu0 0
        %1725 = vmatprep.subr.bf16.mxu0 0
        %1726 = vmatpush2.bf16.msra.mxu0 0
        %1727 = vmatprep.subr.bf16.mxu0 0
        %1728 = vmatpush2.bf16.msra.mxu0 0
        %1729 = vmatprep.subr.bf16.mxu0 0
        %1730 = vmatpush2.bf16.msra.mxu0 0
        %1731 = vmatprep.subr.bf16.mxu0 0
        %1732 = vmatpush2.bf16.msra.mxu0 0
        %1733 = vmatprep.subr.bf16.mxu0 0
        %1734 = vmatpush2.bf16.msra.mxu0 0
        %1735 = vmatprep.subr.bf16.mxu0 0
        %1736 = vmatpush2.bf16.msra.mxu0 0
        %1737 = vmatprep.subr.bf16.mxu0 0
        %1738 = vmatpush2.bf16.msra.mxu0 0
        %1739 = vmatprep.mubr.bf16.mxu0 0
        %1740 = vmatmul.mubr.bf16.gmra.mxu0 %v1657
        %v1741 = vpop.f32.mrf.mxu0
        %v1742 = vadd.f32 0.0, %v1741
        %v1743 = vpop.f32.mrf.mxu0
        %v1744 = vpop.f32.mrf.mxu0
        %v1745 = vadd.f32 0.0, %v1744
        %v1746 = vpop.f32.mrf.mxu0
        %1747 = vmatprep.mubr.bf16.mxu0 0
        %1748 = vmatmul.mubr.bf16.gmra.mxu0 %v1660
        %v1749 = vpop.f32.mrf.mxu0
        %v1750 = vadd.f32 0.0, %v1749
        %v1751 = vpop.f32.mrf.mxu0
        %v1752 = vpop.f32.mrf.mxu0
        %v1753 = vadd.f32 0.0, %v1752
        %v1754 = vpop.f32.mrf.mxu0
        %1755 = vmatprep.mubr.bf16.mxu0 0
        %1756 = vmatmul.mubr.bf16.gmra.mxu0 %v1663
        %v1757 = vpop.f32.mrf.mxu0
        %v1758 = vadd.f32 0.0, %v1757
        %v1759 = vpop.f32.mrf.mxu0
        %v1760 = vpop.f32.mrf.mxu0
        %v1761 = vadd.f32 0.0, %v1760
        %v1762 = vpop.f32.mrf.mxu0
        %1763 = vmatprep.mubr.bf16.mxu0 0
        %1764 = vmatmul.mubr.bf16.gmra.mxu0 %v1666
        %v1765 = vpop.f32.mrf.mxu0
        %v1766 = vadd.f32 0.0, %v1765
        %v1767 = vpop.f32.mrf.mxu0
        %v1768 = vpop.f32.mrf.mxu0
        %v1769 = vadd.f32 0.0, %v1768
        %v1770 = vpop.f32.mrf.mxu0
        %1771 = vmatprep.mubr.bf16.mxu0 0
        %1772 = vmatmul.mubr.bf16.gmra.mxu0 %v1669
        %v1773 = vpop.f32.mrf.mxu0
        %v1774 = vadd.f32 0.0, %v1773
        %v1775 = vpop.f32.mrf.mxu0
        %v1776 = vpop.f32.mrf.mxu0
        %v1777 = vadd.f32 0.0, %v1776
        %v1778 = vpop.f32.mrf.mxu0
        %1779 = vmatprep.mubr.bf16.mxu0 0
        %1780 = vmatmul.mubr.bf16.gmra.mxu0 %v1672
        %v1781 = vpop.f32.mrf.mxu0
        %v1782 = vadd.f32 0.0, %v1781
        %v1783 = vpop.f32.mrf.mxu0
        %v1784 = vpop.f32.mrf.mxu0
        %v1785 = vadd.f32 0.0, %v1784
        %v1786 = vpop.f32.mrf.mxu0
        %1787 = vmatprep.mubr.bf16.mxu0 0
        %1788 = vmatmul.mubr.bf16.gmra.mxu0 %v1675
        %v1789 = vpop.f32.mrf.mxu0
        %v1790 = vadd.f32 0.0, %v1789
        %v1791 = vpop.f32.mrf.mxu0
        %v1792 = vpop.f32.mrf.mxu0
        %v1793 = vadd.f32 0.0, %v1792
        %v1794 = vpop.f32.mrf.mxu0
        %1795 = vmatprep.mubr.bf16.mxu0 0
        %1796 = vmatmul.mubr.bf16.gmra.mxu0 %v1678
        %v1797 = vpop.f32.mrf.mxu0
        %v1798 = vadd.f32 0.0, %v1797
        %v1799 = vpop.f32.mrf.mxu0
        %v1800 = vpop.f32.mrf.mxu0
        %v1801 = vadd.f32 0.0, %v1800
        %v1802 = vpop.f32.mrf.mxu0
        %1803 = vmatprep.mubr.bf16.mxu0 0
        %1804 = vmatmul.mubr.bf16.gmra.mxu0 %v1681
        %v1805 = vpop.f32.mrf.mxu0
        %v1806 = vadd.f32 0.0, %v1805
        %v1807 = vpop.f32.mrf.mxu0
        %v1808 = vpop.f32.mrf.mxu0
        %v1809 = vadd.f32 0.0, %v1808
        %v1810 = vpop.f32.mrf.mxu0
        %1811 = vmatprep.mubr.bf16.mxu0 0
        %1812 = vmatmul.mubr.bf16.gmra.mxu0 %v1684
        %v1813 = vpop.f32.mrf.mxu0
        %v1814 = vadd.f32 0.0, %v1813
        %v1815 = vpop.f32.mrf.mxu0
        %v1816 = vpop.f32.mrf.mxu0
        %v1817 = vadd.f32 0.0, %v1816
        %v1818 = vpop.f32.mrf.mxu0
        %1819 = vmatprep.mubr.bf16.mxu0 0
        %1820 = vmatmul.mubr.bf16.gmra.mxu0 %v1687
        %v1821 = vpop.f32.mrf.mxu0
        %v1822 = vadd.f32 0.0, %v1821
        %v1823 = vpop.f32.mrf.mxu0
        %v1824 = vpop.f32.mrf.mxu0
        %v1825 = vadd.f32 0.0, %v1824
        %v1826 = vpop.f32.mrf.mxu0
        %1827 = vmatprep.mubr.bf16.mxu0 0
        %1828 = vmatmul.mubr.bf16.gmra.mxu0 %v1690
        %v1829 = vpop.f32.mrf.mxu0
        %v1830 = vadd.f32 0.0, %v1829
        %v1831 = vpop.f32.mrf.mxu0
        %v1832 = vpop.f32.mrf.mxu0
        %v1833 = vadd.f32 0.0, %v1832
        %v1834 = vpop.f32.mrf.mxu0
        %1835 = vmatprep.mubr.bf16.mxu0 0
        %1836 = vmatmul.mubr.bf16.gmra.mxu0 %v1693
        %v1837 = vpop.f32.mrf.mxu0
        %v1838 = vadd.f32 0.0, %v1837
        %v1839 = vpop.f32.mrf.mxu0
        %v1840 = vpop.f32.mrf.mxu0
        %v1841 = vadd.f32 0.0, %v1840
        %v1842 = vpop.f32.mrf.mxu0
        %1843 = vmatprep.mubr.bf16.mxu0 0
        %1844 = vmatmul.mubr.bf16.gmra.mxu0 %v1696
        %v1845 = vpop.f32.mrf.mxu0
        %v1846 = vadd.f32 0.0, %v1845
        %v1847 = vpop.f32.mrf.mxu0
        %v1848 = vpop.f32.mrf.mxu0
        %v1849 = vadd.f32 0.0, %v1848
        %v1850 = vpop.f32.mrf.mxu0
        %1851 = vmatprep.mubr.bf16.mxu0 0
        %1852 = vmatmul.mubr.bf16.gmra.mxu0 %v1699
        %v1853 = vpop.f32.mrf.mxu0
        %v1854 = vadd.f32 0.0, %v1853
        %v1855 = vpop.f32.mrf.mxu0
        %v1856 = vpop.f32.mrf.mxu0
        %v1857 = vadd.f32 0.0, %v1856
        %v1858 = vpop.f32.mrf.mxu0
        %1859 = vmatprep.mubr.bf16.mxu0 0
        %1860 = vmatmul.mubr.bf16.gmra.mxu0 %v1702
        %v1861 = vpop.f32.mrf.mxu0
        %v1862 = vadd.f32 0.0, %v1861
        %v1863 = vpop.f32.mrf.mxu0
        %v1864 = vpop.f32.mrf.mxu0
        %v1865 = vadd.f32 0.0, %v1864
        %v1866 = vpop.f32.mrf.mxu0
        %1867 = vdwg.mxu0
        %v1868 = vadd.f32 %v1574, %v1742
        %v1869 = vadd.f32 %v1575, %v1745
        %v1870 = vadd.f32 %v1576, %v1750
        %v1871 = vadd.f32 %v1577, %v1753
        %v1872 = vadd.f32 %v1578, %v1758
        %v1873 = vadd.f32 %v1579, %v1761
        %v1874 = vadd.f32 %v1580, %v1766
        %v1875 = vadd.f32 %v1581, %v1769
        %v1876 = vadd.f32 %v1582, %v1774
        %v1877 = vadd.f32 %v1583, %v1777
        %v1878 = vadd.f32 %v1584, %v1782
        %v1879 = vadd.f32 %v1585, %v1785
        %v1880 = vadd.f32 %v1586, %v1790
        %v1881 = vadd.f32 %v1587, %v1793
        %v1882 = vadd.f32 %v1588, %v1798
        %v1883 = vadd.f32 %v1589, %v1801
        %v1884 = vadd.f32 %v1590, %v1806
        %v1885 = vadd.f32 %v1591, %v1809
        %v1886 = vadd.f32 %v1592, %v1814
        %v1887 = vadd.f32 %v1593, %v1817
        %v1888 = vadd.f32 %v1594, %v1822
        %v1889 = vadd.f32 %v1595, %v1825
        %v1890 = vadd.f32 %v1596, %v1830
        %v1891 = vadd.f32 %v1597, %v1833
        %v1892 = vadd.f32 %v1598, %v1838
        %v1893 = vadd.f32 %v1599, %v1841
        %v1894 = vadd.f32 %v1600, %v1846
        %v1895 = vadd.f32 %v1601, %v1849
        %v1896 = vadd.f32 %v1602, %v1854
        %v1897 = vadd.f32 %v1603, %v1857
        %v1898 = vadd.f32 %v1604, %v1862
        %v1899 = vadd.f32 %v1605, %v1865
        %s1900 = scalar_lea.vmem %s195, 48
        %v1901 = vld [vmem:[%s1900] sm:$0xff]
        %v1902 = vld [vmem:[%s1900 + $0x8] sm:$0xff]
        %v1903 = vld [vmem:[%s1900 + $0x18] sm:$0xff]
        %v1904 = vld [vmem:[%s1900 + $0x20] sm:$0xff]
        %v1905 = vld [vmem:[%s1900 + $0x30] sm:$0xff]
        %v1906 = vld [vmem:[%s1900 + $0x38] sm:$0xff]
        %v1907 = vld [vmem:[%s1900 + $0x48] sm:$0xff]
        %v1908 = vld [vmem:[%s1900 + $0x50] sm:$0xff]
        %v1909 = vld [vmem:[%s1900 + $0x60] sm:$0xff]
        %v1910 = vld [vmem:[%s1900 + $0x68] sm:$0xff]
        %v1911 = vld [vmem:[%s1900 + $0x78] sm:$0xff]
        %v1912 = vld [vmem:[%s1900 + $0x80] sm:$0xff]
        %v1913 = vld [vmem:[%s1900 + $0x90] sm:$0xff]
        %v1914 = vld [vmem:[%s1900 + $0x98] sm:$0xff]
        %v1915 = vld [vmem:[%s1900 + $0xa8] sm:$0xff]
        %v1916 = vld [vmem:[%s1900 + $0xb0] sm:$0xff]
        %v1917 = vld [vmem:[%s1900 + $0xc0] sm:$0xff]
        %v1918 = vld [vmem:[%s1900 + $0xc8] sm:$0xff]
        %v1919 = vld [vmem:[%s1900 + $0xd8] sm:$0xff]
        %v1920 = vld [vmem:[%s1900 + $0xe0] sm:$0xff]
        %v1921 = vld [vmem:[%s1900 + $0xf0] sm:$0xff]
        %v1922 = vld [vmem:[%s1900 + $0xf8] sm:$0xff]
        %v1923 = vld [vmem:[%s1900 + $0x108] sm:$0xff]
        %v1924 = vld [vmem:[%s1900 + $0x110] sm:$0xff]
        %v1925 = vld [vmem:[%s1900 + $0x120] sm:$0xff]
        %v1926 = vld [vmem:[%s1900 + $0x128] sm:$0xff]
        %v1927 = vld [vmem:[%s1900 + $0x138] sm:$0xff]
        %v1928 = vld [vmem:[%s1900 + $0x140] sm:$0xff]
        %v1929 = vld [vmem:[%s1900 + $0x150] sm:$0xff]
        %v1930 = vld [vmem:[%s1900 + $0x158] sm:$0xff]
        %v1931 = vld [vmem:[%s1900 + $0x168] sm:$0xff]
        %v1932 = vld [vmem:[%s1900 + $0x170] sm:$0xff]
        %v1933 = vpack.c.bf16 %v1902, %v1901
        %v1934 = vpack.c.bf16 %v1904, %v1903
        %v1935 = vpack.c.bf16 %v1906, %v1905
        %v1936 = vpack.c.bf16 %v1908, %v1907
        %v1937 = vpack.c.bf16 %v1910, %v1909
        %v1938 = vpack.c.bf16 %v1912, %v1911
        %v1939 = vpack.c.bf16 %v1914, %v1913
        %v1940 = vpack.c.bf16 %v1916, %v1915
        %v1941 = vpack.c.bf16 %v1918, %v1917
        %v1942 = vpack.c.bf16 %v1920, %v1919
        %v1943 = vpack.c.bf16 %v1922, %v1921
        %v1944 = vpack.c.bf16 %v1924, %v1923
        %v1945 = vpack.c.bf16 %v1926, %v1925
        %v1946 = vpack.c.bf16 %v1928, %v1927
        %v1947 = vpack.c.bf16 %v1930, %v1929
        %v1948 = vpack.c.bf16 %v1932, %v1931
        %s1949 = scalar_lea.vmem %s1, 24
        %v1950 = vld [vmem:[%s1949] sm:$0xf]
        %v1952 = vsel %vm297, %v1933, 0
        %v1955 = vsel %vm297, %v1934, 0
        %v1958 = vsel %vm297, %v1935, 0
        %v1961 = vsel %vm297, %v1936, 0
        %v1964 = vsel %vm297, %v1937, 0
        %v1967 = vsel %vm297, %v1938, 0
        %v1970 = vsel %vm297, %v1939, 0
        %v1973 = vsel %vm297, %v1940, 0
        %v1976 = vsel %vm297, %v1941, 0
        %v1979 = vsel %vm297, %v1942, 0
        %v1982 = vsel %vm297, %v1943, 0
        %v1985 = vsel %vm297, %v1944, 0
        %v1988 = vsel %vm297, %v1945, 0
        %v1991 = vsel %vm297, %v1946, 0
        %v1994 = vsel %vm297, %v1947, 0
        %v1997 = vsel %vm297, %v1948, 0
        %v2000 = vsel %vm346, %v1950, 0
        %2002 = vmatprep.subr.bf16.mxu0 0
        %2003 = vmatpush1.bf16.msra.mxu0 0
        %2004 = vmatprep.subr.bf16.mxu0 0
        %2005 = vmatpush1.bf16.msra.mxu0 0
        %2006 = vmatprep.subr.bf16.mxu0 0
        %2007 = vmatpush1.bf16.msra.mxu0 0
        %2008 = vmatprep.subr.bf16.mxu0 0
        %2009 = vmatpush1.bf16.msra.mxu0 0
        %2010 = vmatprep.subr.bf16.mxu0 0
        %2011 = vmatpush1.bf16.msra.mxu0 0
        %2012 = vmatprep.subr.bf16.mxu0 0
        %2013 = vmatpush1.bf16.msra.mxu0 0
        %2014 = vmatprep.subr.bf16.mxu0 0
        %2015 = vmatpush1.bf16.msra.mxu0 0
        %2016 = vmatprep.subr.bf16.mxu0 0
        %2017 = vmatpush1.bf16.msra.mxu0 %v2000
        %2018 = vmatprep.subr.bf16.mxu0 0
        %2019 = vmatpush2.bf16.msra.mxu0 0
        %2020 = vmatprep.subr.bf16.mxu0 0
        %2021 = vmatpush2.bf16.msra.mxu0 0
        %2022 = vmatprep.subr.bf16.mxu0 0
        %2023 = vmatpush2.bf16.msra.mxu0 0
        %2024 = vmatprep.subr.bf16.mxu0 0
        %2025 = vmatpush2.bf16.msra.mxu0 0
        %2026 = vmatprep.subr.bf16.mxu0 0
        %2027 = vmatpush2.bf16.msra.mxu0 0
        %2028 = vmatprep.subr.bf16.mxu0 0
        %2029 = vmatpush2.bf16.msra.mxu0 0
        %2030 = vmatprep.subr.bf16.mxu0 0
        %2031 = vmatpush2.bf16.msra.mxu0 0
        %2032 = vmatprep.subr.bf16.mxu0 0
        %2033 = vmatpush2.bf16.msra.mxu0 0
        %2034 = vmatprep.mubr.bf16.mxu0 0
        %2035 = vmatmul.mubr.bf16.gmra.mxu0 %v1952
        %v2036 = vpop.f32.mrf.mxu0
        %v2037 = vadd.f32 0.0, %v2036
        %v2038 = vpop.f32.mrf.mxu0
        %v2039 = vpop.f32.mrf.mxu0
        %v2040 = vadd.f32 0.0, %v2039
        %v2041 = vpop.f32.mrf.mxu0
        %2042 = vmatprep.mubr.bf16.mxu0 0
        %2043 = vmatmul.mubr.bf16.gmra.mxu0 %v1955
        %v2044 = vpop.f32.mrf.mxu0
        %v2045 = vadd.f32 0.0, %v2044
        %v2046 = vpop.f32.mrf.mxu0
        %v2047 = vpop.f32.mrf.mxu0
        %v2048 = vadd.f32 0.0, %v2047
        %v2049 = vpop.f32.mrf.mxu0
        %2050 = vmatprep.mubr.bf16.mxu0 0
        %2051 = vmatmul.mubr.bf16.gmra.mxu0 %v1958
        %v2052 = vpop.f32.mrf.mxu0
        %v2053 = vadd.f32 0.0, %v2052
        %v2054 = vpop.f32.mrf.mxu0
        %v2055 = vpop.f32.mrf.mxu0
        %v2056 = vadd.f32 0.0, %v2055
        %v2057 = vpop.f32.mrf.mxu0
        %2058 = vmatprep.mubr.bf16.mxu0 0
        %2059 = vmatmul.mubr.bf16.gmra.mxu0 %v1961
        %v2060 = vpop.f32.mrf.mxu0
        %v2061 = vadd.f32 0.0, %v2060
        %v2062 = vpop.f32.mrf.mxu0
        %v2063 = vpop.f32.mrf.mxu0
        %v2064 = vadd.f32 0.0, %v2063
        %v2065 = vpop.f32.mrf.mxu0
        %2066 = vmatprep.mubr.bf16.mxu0 0
        %2067 = vmatmul.mubr.bf16.gmra.mxu0 %v1964
        %v2068 = vpop.f32.mrf.mxu0
        %v2069 = vadd.f32 0.0, %v2068
        %v2070 = vpop.f32.mrf.mxu0
        %v2071 = vpop.f32.mrf.mxu0
        %v2072 = vadd.f32 0.0, %v2071
        %v2073 = vpop.f32.mrf.mxu0
        %2074 = vmatprep.mubr.bf16.mxu0 0
        %2075 = vmatmul.mubr.bf16.gmra.mxu0 %v1967
        %v2076 = vpop.f32.mrf.mxu0
        %v2077 = vadd.f32 0.0, %v2076
        %v2078 = vpop.f32.mrf.mxu0
        %v2079 = vpop.f32.mrf.mxu0
        %v2080 = vadd.f32 0.0, %v2079
        %v2081 = vpop.f32.mrf.mxu0
        %2082 = vmatprep.mubr.bf16.mxu0 0
        %2083 = vmatmul.mubr.bf16.gmra.mxu0 %v1970
        %v2084 = vpop.f32.mrf.mxu0
        %v2085 = vadd.f32 0.0, %v2084
        %v2086 = vpop.f32.mrf.mxu0
        %v2087 = vpop.f32.mrf.mxu0
        %v2088 = vadd.f32 0.0, %v2087
        %v2089 = vpop.f32.mrf.mxu0
        %2090 = vmatprep.mubr.bf16.mxu0 0
        %2091 = vmatmul.mubr.bf16.gmra.mxu0 %v1973
        %v2092 = vpop.f32.mrf.mxu0
        %v2093 = vadd.f32 0.0, %v2092
        %v2094 = vpop.f32.mrf.mxu0
        %v2095 = vpop.f32.mrf.mxu0
        %v2096 = vadd.f32 0.0, %v2095
        %v2097 = vpop.f32.mrf.mxu0
        %2098 = vmatprep.mubr.bf16.mxu0 0
        %2099 = vmatmul.mubr.bf16.gmra.mxu0 %v1976
        %v2100 = vpop.f32.mrf.mxu0
        %v2101 = vadd.f32 0.0, %v2100
        %v2102 = vpop.f32.mrf.mxu0
        %v2103 = vpop.f32.mrf.mxu0
        %v2104 = vadd.f32 0.0, %v2103
        %v2105 = vpop.f32.mrf.mxu0
        %2106 = vmatprep.mubr.bf16.mxu0 0
        %2107 = vmatmul.mubr.bf16.gmra.mxu0 %v1979
        %v2108 = vpop.f32.mrf.mxu0
        %v2109 = vadd.f32 0.0, %v2108
        %v2110 = vpop.f32.mrf.mxu0
        %v2111 = vpop.f32.mrf.mxu0
        %v2112 = vadd.f32 0.0, %v2111
        %v2113 = vpop.f32.mrf.mxu0
        %2114 = vmatprep.mubr.bf16.mxu0 0
        %2115 = vmatmul.mubr.bf16.gmra.mxu0 %v1982
        %v2116 = vpop.f32.mrf.mxu0
        %v2117 = vadd.f32 0.0, %v2116
        %v2118 = vpop.f32.mrf.mxu0
        %v2119 = vpop.f32.mrf.mxu0
        %v2120 = vadd.f32 0.0, %v2119
        %v2121 = vpop.f32.mrf.mxu0
        %2122 = vmatprep.mubr.bf16.mxu0 0
        %2123 = vmatmul.mubr.bf16.gmra.mxu0 %v1985
        %v2124 = vpop.f32.mrf.mxu0
        %v2125 = vadd.f32 0.0, %v2124
        %v2126 = vpop.f32.mrf.mxu0
        %v2127 = vpop.f32.mrf.mxu0
        %v2128 = vadd.f32 0.0, %v2127
        %v2129 = vpop.f32.mrf.mxu0
        %2130 = vmatprep.mubr.bf16.mxu0 0
        %2131 = vmatmul.mubr.bf16.gmra.mxu0 %v1988
        %v2132 = vpop.f32.mrf.mxu0
        %v2133 = vadd.f32 0.0, %v2132
        %v2134 = vpop.f32.mrf.mxu0
        %v2135 = vpop.f32.mrf.mxu0
        %v2136 = vadd.f32 0.0, %v2135
        %v2137 = vpop.f32.mrf.mxu0
        %2138 = vmatprep.mubr.bf16.mxu0 0
        %2139 = vmatmul.mubr.bf16.gmra.mxu0 %v1991
        %v2140 = vpop.f32.mrf.mxu0
        %v2141 = vadd.f32 0.0, %v2140
        %v2142 = vpop.f32.mrf.mxu0
        %v2143 = vpop.f32.mrf.mxu0
        %v2144 = vadd.f32 0.0, %v2143
        %v2145 = vpop.f32.mrf.mxu0
        %2146 = vmatprep.mubr.bf16.mxu0 0
        %2147 = vmatmul.mubr.bf16.gmra.mxu0 %v1994
        %v2148 = vpop.f32.mrf.mxu0
        %v2149 = vadd.f32 0.0, %v2148
        %v2150 = vpop.f32.mrf.mxu0
        %v2151 = vpop.f32.mrf.mxu0
        %v2152 = vadd.f32 0.0, %v2151
        %v2153 = vpop.f32.mrf.mxu0
        %2154 = vmatprep.mubr.bf16.mxu0 0
        %2155 = vmatmul.mubr.bf16.gmra.mxu0 %v1997
        %v2156 = vpop.f32.mrf.mxu0
        %v2157 = vadd.f32 0.0, %v2156
        %v2158 = vpop.f32.mrf.mxu0
        %v2159 = vpop.f32.mrf.mxu0
        %v2160 = vadd.f32 0.0, %v2159
        %v2161 = vpop.f32.mrf.mxu0
        %2162 = vdwg.mxu0
        %v2163 = vadd.f32 %v1868, %v2037
        %v2164 = vadd.f32 %v1869, %v2040
        %v2165 = vadd.f32 %v1870, %v2045
        %v2166 = vadd.f32 %v1871, %v2048
        %v2167 = vadd.f32 %v1872, %v2053
        %v2168 = vadd.f32 %v1873, %v2056
        %v2169 = vadd.f32 %v1874, %v2061
        %v2170 = vadd.f32 %v1875, %v2064
        %v2171 = vadd.f32 %v1876, %v2069
        %v2172 = vadd.f32 %v1877, %v2072
        %v2173 = vadd.f32 %v1878, %v2077
        %v2174 = vadd.f32 %v1879, %v2080
        %v2175 = vadd.f32 %v1880, %v2085
        %v2176 = vadd.f32 %v1881, %v2088
        %v2177 = vadd.f32 %v1882, %v2093
        %v2178 = vadd.f32 %v1883, %v2096
        %v2179 = vadd.f32 %v1884, %v2101
        %v2180 = vadd.f32 %v1885, %v2104
        %v2181 = vadd.f32 %v1886, %v2109
        %v2182 = vadd.f32 %v1887, %v2112
        %v2183 = vadd.f32 %v1888, %v2117
        %v2184 = vadd.f32 %v1889, %v2120
        %v2185 = vadd.f32 %v1890, %v2125
        %v2186 = vadd.f32 %v1891, %v2128
        %v2187 = vadd.f32 %v1892, %v2133
        %v2188 = vadd.f32 %v1893, %v2136
        %v2189 = vadd.f32 %v1894, %v2141
        %v2190 = vadd.f32 %v1895, %v2144
        %v2191 = vadd.f32 %v1896, %v2149
        %v2192 = vadd.f32 %v1897, %v2152
        %v2193 = vadd.f32 %v1898, %v2157
        %v2194 = vadd.f32 %v1899, %v2160
        %v2195 = vld [vmem:[%s1900 + $0x1] sm:$0xff]
        %v2196 = vld [vmem:[%s1900 + $0x9] sm:$0xff]
        %v2197 = vld [vmem:[%s1900 + $0x19] sm:$0xff]
        %v2198 = vld [vmem:[%s1900 + $0x21] sm:$0xff]
        %v2199 = vld [vmem:[%s1900 + $0x31] sm:$0xff]
        %v2200 = vld [vmem:[%s1900 + $0x39] sm:$0xff]
        %v2201 = vld [vmem:[%s1900 + $0x49] sm:$0xff]
        %v2202 = vld [vmem:[%s1900 + $0x51] sm:$0xff]
        %v2203 = vld [vmem:[%s1900 + $0x61] sm:$0xff]
        %v2204 = vld [vmem:[%s1900 + $0x69] sm:$0xff]
        %v2205 = vld [vmem:[%s1900 + $0x79] sm:$0xff]
        %v2206 = vld [vmem:[%s1900 + $0x81] sm:$0xff]
        %v2207 = vld [vmem:[%s1900 + $0x91] sm:$0xff]
        %v2208 = vld [vmem:[%s1900 + $0x99] sm:$0xff]
        %v2209 = vld [vmem:[%s1900 + $0xa9] sm:$0xff]
        %v2210 = vld [vmem:[%s1900 + $0xb1] sm:$0xff]
        %v2211 = vld [vmem:[%s1900 + $0xc1] sm:$0xff]
        %v2212 = vld [vmem:[%s1900 + $0xc9] sm:$0xff]
        %v2213 = vld [vmem:[%s1900 + $0xd9] sm:$0xff]
        %v2214 = vld [vmem:[%s1900 + $0xe1] sm:$0xff]
        %v2215 = vld [vmem:[%s1900 + $0xf1] sm:$0xff]
        %v2216 = vld [vmem:[%s1900 + $0xf9] sm:$0xff]
        %v2217 = vld [vmem:[%s1900 + $0x109] sm:$0xff]
        %v2218 = vld [vmem:[%s1900 + $0x111] sm:$0xff]
        %v2219 = vld [vmem:[%s1900 + $0x121] sm:$0xff]
        %v2220 = vld [vmem:[%s1900 + $0x129] sm:$0xff]
        %v2221 = vld [vmem:[%s1900 + $0x139] sm:$0xff]
        %v2222 = vld [vmem:[%s1900 + $0x141] sm:$0xff]
        %v2223 = vld [vmem:[%s1900 + $0x151] sm:$0xff]
        %v2224 = vld [vmem:[%s1900 + $0x159] sm:$0xff]
        %v2225 = vld [vmem:[%s1900 + $0x169] sm:$0xff]
        %v2226 = vld [vmem:[%s1900 + $0x171] sm:$0xff]
        %v2227 = vpack.c.bf16 %v2196, %v2195
        %v2228 = vpack.c.bf16 %v2198, %v2197
        %v2229 = vpack.c.bf16 %v2200, %v2199
        %v2230 = vpack.c.bf16 %v2202, %v2201
        %v2231 = vpack.c.bf16 %v2204, %v2203
        %v2232 = vpack.c.bf16 %v2206, %v2205
        %v2233 = vpack.c.bf16 %v2208, %v2207
        %v2234 = vpack.c.bf16 %v2210, %v2209
        %v2235 = vpack.c.bf16 %v2212, %v2211
        %v2236 = vpack.c.bf16 %v2214, %v2213
        %v2237 = vpack.c.bf16 %v2216, %v2215
        %v2238 = vpack.c.bf16 %v2218, %v2217
        %v2239 = vpack.c.bf16 %v2220, %v2219
        %v2240 = vpack.c.bf16 %v2222, %v2221
        %v2241 = vpack.c.bf16 %v2224, %v2223
        %v2242 = vpack.c.bf16 %v2226, %v2225
        %s2243 = scalar_lea.vmem %s1, 28
        %v2244 = vld [vmem:[%s2243] sm:$0xf]
        %v2246 = vsel %vm297, %v2227, 0
        %v2249 = vsel %vm297, %v2228, 0
        %v2252 = vsel %vm297, %v2229, 0
        %v2255 = vsel %vm297, %v2230, 0
        %v2258 = vsel %vm297, %v2231, 0
        %v2261 = vsel %vm297, %v2232, 0
        %v2264 = vsel %vm297, %v2233, 0
        %v2267 = vsel %vm297, %v2234, 0
        %v2270 = vsel %vm297, %v2235, 0
        %v2273 = vsel %vm297, %v2236, 0
        %v2276 = vsel %vm297, %v2237, 0
        %v2279 = vsel %vm297, %v2238, 0
        %v2282 = vsel %vm297, %v2239, 0
        %v2285 = vsel %vm297, %v2240, 0
        %v2288 = vsel %vm297, %v2241, 0
        %v2291 = vsel %vm297, %v2242, 0
        %v2294 = vsel %vm346, %v2244, 0
        %2296 = vmatprep.subr.bf16.mxu0 0
        %2297 = vmatpush1.bf16.msra.mxu0 0
        %2298 = vmatprep.subr.bf16.mxu0 0
        %2299 = vmatpush1.bf16.msra.mxu0 0
        %2300 = vmatprep.subr.bf16.mxu0 0
        %2301 = vmatpush1.bf16.msra.mxu0 0
        %2302 = vmatprep.subr.bf16.mxu0 0
        %2303 = vmatpush1.bf16.msra.mxu0 0
        %2304 = vmatprep.subr.bf16.mxu0 0
        %2305 = vmatpush1.bf16.msra.mxu0 0
        %2306 = vmatprep.subr.bf16.mxu0 0
        %2307 = vmatpush1.bf16.msra.mxu0 0
        %2308 = vmatprep.subr.bf16.mxu0 0
        %2309 = vmatpush1.bf16.msra.mxu0 0
        %2310 = vmatprep.subr.bf16.mxu0 0
        %2311 = vmatpush1.bf16.msra.mxu0 %v2294
        %2312 = vmatprep.subr.bf16.mxu0 0
        %2313 = vmatpush2.bf16.msra.mxu0 0
        %2314 = vmatprep.subr.bf16.mxu0 0
        %2315 = vmatpush2.bf16.msra.mxu0 0
        %2316 = vmatprep.subr.bf16.mxu0 0
        %2317 = vmatpush2.bf16.msra.mxu0 0
        %2318 = vmatprep.subr.bf16.mxu0 0
        %2319 = vmatpush2.bf16.msra.mxu0 0
        %2320 = vmatprep.subr.bf16.mxu0 0
        %2321 = vmatpush2.bf16.msra.mxu0 0
        %2322 = vmatprep.subr.bf16.mxu0 0
        %2323 = vmatpush2.bf16.msra.mxu0 0
        %2324 = vmatprep.subr.bf16.mxu0 0
        %2325 = vmatpush2.bf16.msra.mxu0 0
        %2326 = vmatprep.subr.bf16.mxu0 0
        %2327 = vmatpush2.bf16.msra.mxu0 0
        %2328 = vmatprep.mubr.bf16.mxu0 0
        %2329 = vmatmul.mubr.bf16.gmra.mxu0 %v2246
        %v2330 = vpop.f32.mrf.mxu0
        %v2331 = vadd.f32 0.0, %v2330
        %v2332 = vpop.f32.mrf.mxu0
        %v2333 = vpop.f32.mrf.mxu0
        %v2334 = vadd.f32 0.0, %v2333
        %v2335 = vpop.f32.mrf.mxu0
        %2336 = vmatprep.mubr.bf16.mxu0 0
        %2337 = vmatmul.mubr.bf16.gmra.mxu0 %v2249
        %v2338 = vpop.f32.mrf.mxu0
        %v2339 = vadd.f32 0.0, %v2338
        %v2340 = vpop.f32.mrf.mxu0
        %v2341 = vpop.f32.mrf.mxu0
        %v2342 = vadd.f32 0.0, %v2341
        %v2343 = vpop.f32.mrf.mxu0
        %2344 = vmatprep.mubr.bf16.mxu0 0
        %2345 = vmatmul.mubr.bf16.gmra.mxu0 %v2252
        %v2346 = vpop.f32.mrf.mxu0
        %v2347 = vadd.f32 0.0, %v2346
        %v2348 = vpop.f32.mrf.mxu0
        %v2349 = vpop.f32.mrf.mxu0
        %v2350 = vadd.f32 0.0, %v2349
        %v2351 = vpop.f32.mrf.mxu0
        %2352 = vmatprep.mubr.bf16.mxu0 0
        %2353 = vmatmul.mubr.bf16.gmra.mxu0 %v2255
        %v2354 = vpop.f32.mrf.mxu0
        %v2355 = vadd.f32 0.0, %v2354
        %v2356 = vpop.f32.mrf.mxu0
        %v2357 = vpop.f32.mrf.mxu0
        %v2358 = vadd.f32 0.0, %v2357
        %v2359 = vpop.f32.mrf.mxu0
        %2360 = vmatprep.mubr.bf16.mxu0 0
        %2361 = vmatmul.mubr.bf16.gmra.mxu0 %v2258
        %v2362 = vpop.f32.mrf.mxu0
        %v2363 = vadd.f32 0.0, %v2362
        %v2364 = vpop.f32.mrf.mxu0
        %v2365 = vpop.f32.mrf.mxu0
        %v2366 = vadd.f32 0.0, %v2365
        %v2367 = vpop.f32.mrf.mxu0
        %2368 = vmatprep.mubr.bf16.mxu0 0
        %2369 = vmatmul.mubr.bf16.gmra.mxu0 %v2261
        %v2370 = vpop.f32.mrf.mxu0
        %v2371 = vadd.f32 0.0, %v2370
        %v2372 = vpop.f32.mrf.mxu0
        %v2373 = vpop.f32.mrf.mxu0
        %v2374 = vadd.f32 0.0, %v2373
        %v2375 = vpop.f32.mrf.mxu0
        %2376 = vmatprep.mubr.bf16.mxu0 0
        %2377 = vmatmul.mubr.bf16.gmra.mxu0 %v2264
        %v2378 = vpop.f32.mrf.mxu0
        %v2379 = vadd.f32 0.0, %v2378
        %v2380 = vpop.f32.mrf.mxu0
        %v2381 = vpop.f32.mrf.mxu0
        %v2382 = vadd.f32 0.0, %v2381
        %v2383 = vpop.f32.mrf.mxu0
        %2384 = vmatprep.mubr.bf16.mxu0 0
        %2385 = vmatmul.mubr.bf16.gmra.mxu0 %v2267
        %v2386 = vpop.f32.mrf.mxu0
        %v2387 = vadd.f32 0.0, %v2386
        %v2388 = vpop.f32.mrf.mxu0
        %v2389 = vpop.f32.mrf.mxu0
        %v2390 = vadd.f32 0.0, %v2389
        %v2391 = vpop.f32.mrf.mxu0
        %2392 = vmatprep.mubr.bf16.mxu0 0
        %2393 = vmatmul.mubr.bf16.gmra.mxu0 %v2270
        %v2394 = vpop.f32.mrf.mxu0
        %v2395 = vadd.f32 0.0, %v2394
        %v2396 = vpop.f32.mrf.mxu0
        %v2397 = vpop.f32.mrf.mxu0
        %v2398 = vadd.f32 0.0, %v2397
        %v2399 = vpop.f32.mrf.mxu0
        %2400 = vmatprep.mubr.bf16.mxu0 0
        %2401 = vmatmul.mubr.bf16.gmra.mxu0 %v2273
        %v2402 = vpop.f32.mrf.mxu0
        %v2403 = vadd.f32 0.0, %v2402
        %v2404 = vpop.f32.mrf.mxu0
        %v2405 = vpop.f32.mrf.mxu0
        %v2406 = vadd.f32 0.0, %v2405
        %v2407 = vpop.f32.mrf.mxu0
        %2408 = vmatprep.mubr.bf16.mxu0 0
        %2409 = vmatmul.mubr.bf16.gmra.mxu0 %v2276
        %v2410 = vpop.f32.mrf.mxu0
        %v2411 = vadd.f32 0.0, %v2410
        %v2412 = vpop.f32.mrf.mxu0
        %v2413 = vpop.f32.mrf.mxu0
        %v2414 = vadd.f32 0.0, %v2413
        %v2415 = vpop.f32.mrf.mxu0
        %2416 = vmatprep.mubr.bf16.mxu0 0
        %2417 = vmatmul.mubr.bf16.gmra.mxu0 %v2279
        %v2418 = vpop.f32.mrf.mxu0
        %v2419 = vadd.f32 0.0, %v2418
        %v2420 = vpop.f32.mrf.mxu0
        %v2421 = vpop.f32.mrf.mxu0
        %v2422 = vadd.f32 0.0, %v2421
        %v2423 = vpop.f32.mrf.mxu0
        %2424 = vmatprep.mubr.bf16.mxu0 0
        %2425 = vmatmul.mubr.bf16.gmra.mxu0 %v2282
        %v2426 = vpop.f32.mrf.mxu0
        %v2427 = vadd.f32 0.0, %v2426
        %v2428 = vpop.f32.mrf.mxu0
        %v2429 = vpop.f32.mrf.mxu0
        %v2430 = vadd.f32 0.0, %v2429
        %v2431 = vpop.f32.mrf.mxu0
        %2432 = vmatprep.mubr.bf16.mxu0 0
        %2433 = vmatmul.mubr.bf16.gmra.mxu0 %v2285
        %v2434 = vpop.f32.mrf.mxu0
        %v2435 = vadd.f32 0.0, %v2434
        %v2436 = vpop.f32.mrf.mxu0
        %v2437 = vpop.f32.mrf.mxu0
        %v2438 = vadd.f32 0.0, %v2437
        %v2439 = vpop.f32.mrf.mxu0
        %2440 = vmatprep.mubr.bf16.mxu0 0
        %2441 = vmatmul.mubr.bf16.gmra.mxu0 %v2288
        %v2442 = vpop.f32.mrf.mxu0
        %v2443 = vadd.f32 0.0, %v2442
        %v2444 = vpop.f32.mrf.mxu0
        %v2445 = vpop.f32.mrf.mxu0
        %v2446 = vadd.f32 0.0, %v2445
        %v2447 = vpop.f32.mrf.mxu0
        %2448 = vmatprep.mubr.bf16.mxu0 0
        %2449 = vmatmul.mubr.bf16.gmra.mxu0 %v2291
        %v2450 = vpop.f32.mrf.mxu0
        %v2451 = vadd.f32 0.0, %v2450
        %v2452 = vpop.f32.mrf.mxu0
        %v2453 = vpop.f32.mrf.mxu0
        %v2454 = vadd.f32 0.0, %v2453
        %v2455 = vpop.f32.mrf.mxu0
        %2456 = vdwg.mxu0
        %v2457 = vadd.f32 %v2163, %v2331
        %v2458 = vadd.f32 %v2164, %v2334
        %v2459 = vadd.f32 %v2165, %v2339
        %v2460 = vadd.f32 %v2166, %v2342
        %v2461 = vadd.f32 %v2167, %v2347
        %v2462 = vadd.f32 %v2168, %v2350
        %v2463 = vadd.f32 %v2169, %v2355
        %v2464 = vadd.f32 %v2170, %v2358
        %v2465 = vadd.f32 %v2171, %v2363
        %v2466 = vadd.f32 %v2172, %v2366
        %v2467 = vadd.f32 %v2173, %v2371
        %v2468 = vadd.f32 %v2174, %v2374
        %v2469 = vadd.f32 %v2175, %v2379
        %v2470 = vadd.f32 %v2176, %v2382
        %v2471 = vadd.f32 %v2177, %v2387
        %v2472 = vadd.f32 %v2178, %v2390
        %v2473 = vadd.f32 %v2179, %v2395
        %v2474 = vadd.f32 %v2180, %v2398
        %v2475 = vadd.f32 %v2181, %v2403
        %v2476 = vadd.f32 %v2182, %v2406
        %v2477 = vadd.f32 %v2183, %v2411
        %v2478 = vadd.f32 %v2184, %v2414
        %v2479 = vadd.f32 %v2185, %v2419
        %v2480 = vadd.f32 %v2186, %v2422
        %v2481 = vadd.f32 %v2187, %v2427
        %v2482 = vadd.f32 %v2188, %v2430
        %v2483 = vadd.f32 %v2189, %v2435
        %v2484 = vadd.f32 %v2190, %v2438
        %v2485 = vadd.f32 %v2191, %v2443
        %v2486 = vadd.f32 %v2192, %v2446
        %v2487 = vadd.f32 %v2193, %v2451
        %v2488 = vadd.f32 %v2194, %v2454
        %v2489 = vld [vmem:[%s1900 + $0x2] sm:$0xff]
        %v2490 = vld [vmem:[%s1900 + $0xa] sm:$0xff]
        %v2491 = vld [vmem:[%s1900 + $0x1a] sm:$0xff]
        %v2492 = vld [vmem:[%s1900 + $0x22] sm:$0xff]
        %v2493 = vld [vmem:[%s1900 + $0x32] sm:$0xff]
        %v2494 = vld [vmem:[%s1900 + $0x3a] sm:$0xff]
        %v2495 = vld [vmem:[%s1900 + $0x4a] sm:$0xff]
        %v2496 = vld [vmem:[%s1900 + $0x52] sm:$0xff]
        %v2497 = vld [vmem:[%s1900 + $0x62] sm:$0xff]
        %v2498 = vld [vmem:[%s1900 + $0x6a] sm:$0xff]
        %v2499 = vld [vmem:[%s1900 + $0x7a] sm:$0xff]
        %v2500 = vld [vmem:[%s1900 + $0x82] sm:$0xff]
        %v2501 = vld [vmem:[%s1900 + $0x92] sm:$0xff]
        %v2502 = vld [vmem:[%s1900 + $0x9a] sm:$0xff]
        %v2503 = vld [vmem:[%s1900 + $0xaa] sm:$0xff]
        %v2504 = vld [vmem:[%s1900 + $0xb2] sm:$0xff]
        %v2505 = vld [vmem:[%s1900 + $0xc2] sm:$0xff]
        %v2506 = vld [vmem:[%s1900 + $0xca] sm:$0xff]
        %v2507 = vld [vmem:[%s1900 + $0xda] sm:$0xff]
        %v2508 = vld [vmem:[%s1900 + $0xe2] sm:$0xff]
        %v2509 = vld [vmem:[%s1900 + $0xf2] sm:$0xff]
        %v2510 = vld [vmem:[%s1900 + $0xfa] sm:$0xff]
        %v2511 = vld [vmem:[%s1900 + $0x10a] sm:$0xff]
        %v2512 = vld [vmem:[%s1900 + $0x112] sm:$0xff]
        %v2513 = vld [vmem:[%s1900 + $0x122] sm:$0xff]
        %v2514 = vld [vmem:[%s1900 + $0x12a] sm:$0xff]
        %v2515 = vld [vmem:[%s1900 + $0x13a] sm:$0xff]
        %v2516 = vld [vmem:[%s1900 + $0x142] sm:$0xff]
        %v2517 = vld [vmem:[%s1900 + $0x152] sm:$0xff]
        %v2518 = vld [vmem:[%s1900 + $0x15a] sm:$0xff]
        %v2519 = vld [vmem:[%s1900 + $0x16a] sm:$0xff]
        %v2520 = vld [vmem:[%s1900 + $0x172] sm:$0xff]
        %v2521 = vpack.c.bf16 %v2490, %v2489
        %v2522 = vpack.c.bf16 %v2492, %v2491
        %v2523 = vpack.c.bf16 %v2494, %v2493
        %v2524 = vpack.c.bf16 %v2496, %v2495
        %v2525 = vpack.c.bf16 %v2498, %v2497
        %v2526 = vpack.c.bf16 %v2500, %v2499
        %v2527 = vpack.c.bf16 %v2502, %v2501
        %v2528 = vpack.c.bf16 %v2504, %v2503
        %v2529 = vpack.c.bf16 %v2506, %v2505
        %v2530 = vpack.c.bf16 %v2508, %v2507
        %v2531 = vpack.c.bf16 %v2510, %v2509
        %v2532 = vpack.c.bf16 %v2512, %v2511
        %v2533 = vpack.c.bf16 %v2514, %v2513
        %v2534 = vpack.c.bf16 %v2516, %v2515
        %v2535 = vpack.c.bf16 %v2518, %v2517
        %v2536 = vpack.c.bf16 %v2520, %v2519
        %s2537 = scalar_lea.vmem %s1, 32
        %v2538 = vld [vmem:[%s2537] sm:$0xf]
        %v2540 = vsel %vm297, %v2521, 0
        %v2543 = vsel %vm297, %v2522, 0
        %v2546 = vsel %vm297, %v2523, 0
        %v2549 = vsel %vm297, %v2524, 0
        %v2552 = vsel %vm297, %v2525, 0
        %v2555 = vsel %vm297, %v2526, 0
        %v2558 = vsel %vm297, %v2527, 0
        %v2561 = vsel %vm297, %v2528, 0
        %v2564 = vsel %vm297, %v2529, 0
        %v2567 = vsel %vm297, %v2530, 0
        %v2570 = vsel %vm297, %v2531, 0
        %v2573 = vsel %vm297, %v2532, 0
        %v2576 = vsel %vm297, %v2533, 0
        %v2579 = vsel %vm297, %v2534, 0
        %v2582 = vsel %vm297, %v2535, 0
        %v2585 = vsel %vm297, %v2536, 0
        %v2588 = vsel %vm346, %v2538, 0
        %2590 = vmatprep.subr.bf16.mxu0 0
        %2591 = vmatpush1.bf16.msra.mxu0 0
        %2592 = vmatprep.subr.bf16.mxu0 0
        %2593 = vmatpush1.bf16.msra.mxu0 0
        %2594 = vmatprep.subr.bf16.mxu0 0
        %2595 = vmatpush1.bf16.msra.mxu0 0
        %2596 = vmatprep.subr.bf16.mxu0 0
        %2597 = vmatpush1.bf16.msra.mxu0 0
        %2598 = vmatprep.subr.bf16.mxu0 0
        %2599 = vmatpush1.bf16.msra.mxu0 0
        %2600 = vmatprep.subr.bf16.mxu0 0
        %2601 = vmatpush1.bf16.msra.mxu0 0
        %2602 = vmatprep.subr.bf16.mxu0 0
        %2603 = vmatpush1.bf16.msra.mxu0 0
        %2604 = vmatprep.subr.bf16.mxu0 0
        %2605 = vmatpush1.bf16.msra.mxu0 %v2588
        %2606 = vmatprep.subr.bf16.mxu0 0
        %2607 = vmatpush2.bf16.msra.mxu0 0
        %2608 = vmatprep.subr.bf16.mxu0 0
        %2609 = vmatpush2.bf16.msra.mxu0 0
        %2610 = vmatprep.subr.bf16.mxu0 0
        %2611 = vmatpush2.bf16.msra.mxu0 0
        %2612 = vmatprep.subr.bf16.mxu0 0
        %2613 = vmatpush2.bf16.msra.mxu0 0
        %2614 = vmatprep.subr.bf16.mxu0 0
        %2615 = vmatpush2.bf16.msra.mxu0 0
        %2616 = vmatprep.subr.bf16.mxu0 0
        %2617 = vmatpush2.bf16.msra.mxu0 0
        %2618 = vmatprep.subr.bf16.mxu0 0
        %2619 = vmatpush2.bf16.msra.mxu0 0
        %2620 = vmatprep.subr.bf16.mxu0 0
        %2621 = vmatpush2.bf16.msra.mxu0 0
        %2622 = vmatprep.mubr.bf16.mxu0 0
        %2623 = vmatmul.mubr.bf16.gmra.mxu0 %v2540
        %v2624 = vpop.f32.mrf.mxu0
        %v2625 = vadd.f32 0.0, %v2624
        %v2626 = vpop.f32.mrf.mxu0
        %v2627 = vpop.f32.mrf.mxu0
        %v2628 = vadd.f32 0.0, %v2627
        %v2629 = vpop.f32.mrf.mxu0
        %2630 = vmatprep.mubr.bf16.mxu0 0
        %2631 = vmatmul.mubr.bf16.gmra.mxu0 %v2543
        %v2632 = vpop.f32.mrf.mxu0
        %v2633 = vadd.f32 0.0, %v2632
        %v2634 = vpop.f32.mrf.mxu0
        %v2635 = vpop.f32.mrf.mxu0
        %v2636 = vadd.f32 0.0, %v2635
        %v2637 = vpop.f32.mrf.mxu0
        %2638 = vmatprep.mubr.bf16.mxu0 0
        %2639 = vmatmul.mubr.bf16.gmra.mxu0 %v2546
        %v2640 = vpop.f32.mrf.mxu0
        %v2641 = vadd.f32 0.0, %v2640
        %v2642 = vpop.f32.mrf.mxu0
        %v2643 = vpop.f32.mrf.mxu0
        %v2644 = vadd.f32 0.0, %v2643
        %v2645 = vpop.f32.mrf.mxu0
        %2646 = vmatprep.mubr.bf16.mxu0 0
        %2647 = vmatmul.mubr.bf16.gmra.mxu0 %v2549
        %v2648 = vpop.f32.mrf.mxu0
        %v2649 = vadd.f32 0.0, %v2648
        %v2650 = vpop.f32.mrf.mxu0
        %v2651 = vpop.f32.mrf.mxu0
        %v2652 = vadd.f32 0.0, %v2651
        %v2653 = vpop.f32.mrf.mxu0
        %2654 = vmatprep.mubr.bf16.mxu0 0
        %2655 = vmatmul.mubr.bf16.gmra.mxu0 %v2552
        %v2656 = vpop.f32.mrf.mxu0
        %v2657 = vadd.f32 0.0, %v2656
        %v2658 = vpop.f32.mrf.mxu0
        %v2659 = vpop.f32.mrf.mxu0
        %v2660 = vadd.f32 0.0, %v2659
        %v2661 = vpop.f32.mrf.mxu0
        %2662 = vmatprep.mubr.bf16.mxu0 0
        %2663 = vmatmul.mubr.bf16.gmra.mxu0 %v2555
        %v2664 = vpop.f32.mrf.mxu0
        %v2665 = vadd.f32 0.0, %v2664
        %v2666 = vpop.f32.mrf.mxu0
        %v2667 = vpop.f32.mrf.mxu0
        %v2668 = vadd.f32 0.0, %v2667
        %v2669 = vpop.f32.mrf.mxu0
        %2670 = vmatprep.mubr.bf16.mxu0 0
        %2671 = vmatmul.mubr.bf16.gmra.mxu0 %v2558
        %v2672 = vpop.f32.mrf.mxu0
        %v2673 = vadd.f32 0.0, %v2672
        %v2674 = vpop.f32.mrf.mxu0
        %v2675 = vpop.f32.mrf.mxu0
        %v2676 = vadd.f32 0.0, %v2675
        %v2677 = vpop.f32.mrf.mxu0
        %2678 = vmatprep.mubr.bf16.mxu0 0
        %2679 = vmatmul.mubr.bf16.gmra.mxu0 %v2561
        %v2680 = vpop.f32.mrf.mxu0
        %v2681 = vadd.f32 0.0, %v2680
        %v2682 = vpop.f32.mrf.mxu0
        %v2683 = vpop.f32.mrf.mxu0
        %v2684 = vadd.f32 0.0, %v2683
        %v2685 = vpop.f32.mrf.mxu0
        %2686 = vmatprep.mubr.bf16.mxu0 0
        %2687 = vmatmul.mubr.bf16.gmra.mxu0 %v2564
        %v2688 = vpop.f32.mrf.mxu0
        %v2689 = vadd.f32 0.0, %v2688
        %v2690 = vpop.f32.mrf.mxu0
        %v2691 = vpop.f32.mrf.mxu0
        %v2692 = vadd.f32 0.0, %v2691
        %v2693 = vpop.f32.mrf.mxu0
        %2694 = vmatprep.mubr.bf16.mxu0 0
        %2695 = vmatmul.mubr.bf16.gmra.mxu0 %v2567
        %v2696 = vpop.f32.mrf.mxu0
        %v2697 = vadd.f32 0.0, %v2696
        %v2698 = vpop.f32.mrf.mxu0
        %v2699 = vpop.f32.mrf.mxu0
        %v2700 = vadd.f32 0.0, %v2699
        %v2701 = vpop.f32.mrf.mxu0
        %2702 = vmatprep.mubr.bf16.mxu0 0
        %2703 = vmatmul.mubr.bf16.gmra.mxu0 %v2570
        %v2704 = vpop.f32.mrf.mxu0
        %v2705 = vadd.f32 0.0, %v2704
        %v2706 = vpop.f32.mrf.mxu0
        %v2707 = vpop.f32.mrf.mxu0
        %v2708 = vadd.f32 0.0, %v2707
        %v2709 = vpop.f32.mrf.mxu0
        %2710 = vmatprep.mubr.bf16.mxu0 0
        %2711 = vmatmul.mubr.bf16.gmra.mxu0 %v2573
        %v2712 = vpop.f32.mrf.mxu0
        %v2713 = vadd.f32 0.0, %v2712
        %v2714 = vpop.f32.mrf.mxu0
        %v2715 = vpop.f32.mrf.mxu0
        %v2716 = vadd.f32 0.0, %v2715
        %v2717 = vpop.f32.mrf.mxu0
        %2718 = vmatprep.mubr.bf16.mxu0 0
        %2719 = vmatmul.mubr.bf16.gmra.mxu0 %v2576
        %v2720 = vpop.f32.mrf.mxu0
        %v2721 = vadd.f32 0.0, %v2720
        %v2722 = vpop.f32.mrf.mxu0
        %v2723 = vpop.f32.mrf.mxu0
        %v2724 = vadd.f32 0.0, %v2723
        %v2725 = vpop.f32.mrf.mxu0
        %2726 = vmatprep.mubr.bf16.mxu0 0
        %2727 = vmatmul.mubr.bf16.gmra.mxu0 %v2579
        %v2728 = vpop.f32.mrf.mxu0
        %v2729 = vadd.f32 0.0, %v2728
        %v2730 = vpop.f32.mrf.mxu0
        %v2731 = vpop.f32.mrf.mxu0
        %v2732 = vadd.f32 0.0, %v2731
        %v2733 = vpop.f32.mrf.mxu0
        %2734 = vmatprep.mubr.bf16.mxu0 0
        %2735 = vmatmul.mubr.bf16.gmra.mxu0 %v2582
        %v2736 = vpop.f32.mrf.mxu0
        %v2737 = vadd.f32 0.0, %v2736
        %v2738 = vpop.f32.mrf.mxu0
        %v2739 = vpop.f32.mrf.mxu0
        %v2740 = vadd.f32 0.0, %v2739
        %v2741 = vpop.f32.mrf.mxu0
        %2742 = vmatprep.mubr.bf16.mxu0 0
        %2743 = vmatmul.mubr.bf16.gmra.mxu0 %v2585
        %v2744 = vpop.f32.mrf.mxu0
        %v2745 = vadd.f32 0.0, %v2744
        %v2746 = vpop.f32.mrf.mxu0
        %v2747 = vpop.f32.mrf.mxu0
        %v2748 = vadd.f32 0.0, %v2747
        %v2749 = vpop.f32.mrf.mxu0
        %2750 = vdwg.mxu0
        %v2751 = vadd.f32 %v2457, %v2625
        %v2752 = vadd.f32 %v2458, %v2628
        %v2753 = vadd.f32 %v2459, %v2633
        %v2754 = vadd.f32 %v2460, %v2636
        %v2755 = vadd.f32 %v2461, %v2641
        %v2756 = vadd.f32 %v2462, %v2644
        %v2757 = vadd.f32 %v2463, %v2649
        %v2758 = vadd.f32 %v2464, %v2652
        %v2759 = vadd.f32 %v2465, %v2657
        %v2760 = vadd.f32 %v2466, %v2660
        %v2761 = vadd.f32 %v2467, %v2665
        %v2762 = vadd.f32 %v2468, %v2668
        %v2763 = vadd.f32 %v2469, %v2673
        %v2764 = vadd.f32 %v2470, %v2676
        %v2765 = vadd.f32 %v2471, %v2681
        %v2766 = vadd.f32 %v2472, %v2684
        %v2767 = vadd.f32 %v2473, %v2689
        %v2768 = vadd.f32 %v2474, %v2692
        %v2769 = vadd.f32 %v2475, %v2697
        %v2770 = vadd.f32 %v2476, %v2700
        %v2771 = vadd.f32 %v2477, %v2705
        %v2772 = vadd.f32 %v2478, %v2708
        %v2773 = vadd.f32 %v2479, %v2713
        %v2774 = vadd.f32 %v2480, %v2716
        %v2775 = vadd.f32 %v2481, %v2721
        %v2776 = vadd.f32 %v2482, %v2724
        %v2777 = vadd.f32 %v2483, %v2729
        %v2778 = vadd.f32 %v2484, %v2732
        %v2779 = vadd.f32 %v2485, %v2737
        %v2780 = vadd.f32 %v2486, %v2740
        %v2781 = vadd.f32 %v2487, %v2745
        %v2782 = vadd.f32 %v2488, %v2748
        %v2783 = vld [vmem:[%s2] sm:$0x1]
        %v2785 = vlaneseq
        %v2786 = vshrl.u32 %v2785, 7
        %v2787 = vsub.s32 0, %v2786
        %v2788 = vrot.slane %v2783, %v2787
        %v2790 = vmul.f32 %v2751, %v2788
        %v2791 = vmul.f32 %v2752, %v2788
        %v2792 = vmul.f32 %v2753, %v2788
        %v2793 = vmul.f32 %v2754, %v2788
        %v2794 = vmul.f32 %v2755, %v2788
        %v2795 = vmul.f32 %v2756, %v2788
        %v2796 = vmul.f32 %v2757, %v2788
        %v2797 = vmul.f32 %v2758, %v2788
        %v2798 = vmul.f32 %v2759, %v2788
        %v2799 = vmul.f32 %v2760, %v2788
        %v2800 = vmul.f32 %v2761, %v2788
        %v2801 = vmul.f32 %v2762, %v2788
        %v2802 = vmul.f32 %v2763, %v2788
        %v2803 = vmul.f32 %v2764, %v2788
        %v2804 = vmul.f32 %v2765, %v2788
        %v2805 = vmul.f32 %v2766, %v2788
        %v2806 = vmul.f32 %v2767, %v2788
        %v2807 = vmul.f32 %v2768, %v2788
        %v2808 = vmul.f32 %v2769, %v2788
        %v2809 = vmul.f32 %v2770, %v2788
        %v2810 = vmul.f32 %v2771, %v2788
        %v2811 = vmul.f32 %v2772, %v2788
        %v2812 = vmul.f32 %v2773, %v2788
        %v2813 = vmul.f32 %v2774, %v2788
        %v2814 = vmul.f32 %v2775, %v2788
        %v2815 = vmul.f32 %v2776, %v2788
        %v2816 = vmul.f32 %v2777, %v2788
        %v2817 = vmul.f32 %v2778, %v2788
        %v2818 = vmul.f32 %v2779, %v2788
        %v2819 = vmul.f32 %v2780, %v2788
        %v2820 = vmul.f32 %v2781, %v2788
        %v2821 = vmul.f32 %v2782, %v2788
        %v2822 = vld [vmem:[%s3] sm:$0x1]
        %v2824 = vlaneseq
        %v2825 = vshrl.u32 %v2824, 7
        %v2826 = vsub.s32 0, %v2825
        %v2827 = vrot.slane %v2822, %v2826
        %v2829 = vadd.f32 %v2790, %v2827
        %v2830 = vadd.f32 %v2791, %v2827
        %v2831 = vadd.f32 %v2792, %v2827
        %v2832 = vadd.f32 %v2793, %v2827
        %v2833 = vadd.f32 %v2794, %v2827
        %v2834 = vadd.f32 %v2795, %v2827
        %v2835 = vadd.f32 %v2796, %v2827
        %v2836 = vadd.f32 %v2797, %v2827
        %v2837 = vadd.f32 %v2798, %v2827
        %v2838 = vadd.f32 %v2799, %v2827
        %v2839 = vadd.f32 %v2800, %v2827
        %v2840 = vadd.f32 %v2801, %v2827
        %v2841 = vadd.f32 %v2802, %v2827
        %v2842 = vadd.f32 %v2803, %v2827
        %v2843 = vadd.f32 %v2804, %v2827
        %v2844 = vadd.f32 %v2805, %v2827
        %v2845 = vadd.f32 %v2806, %v2827
        %v2846 = vadd.f32 %v2807, %v2827
        %v2847 = vadd.f32 %v2808, %v2827
        %v2848 = vadd.f32 %v2809, %v2827
        %v2849 = vadd.f32 %v2810, %v2827
        %v2850 = vadd.f32 %v2811, %v2827
        %v2851 = vadd.f32 %v2812, %v2827
        %v2852 = vadd.f32 %v2813, %v2827
        %v2853 = vadd.f32 %v2814, %v2827
        %v2854 = vadd.f32 %v2815, %v2827
        %v2855 = vadd.f32 %v2816, %v2827
        %v2856 = vadd.f32 %v2817, %v2827
        %v2857 = vadd.f32 %v2818, %v2827
        %v2858 = vadd.f32 %v2819, %v2827
        %v2859 = vadd.f32 %v2820, %v2827
        %v2860 = vadd.f32 %v2821, %v2827
        %v2861 = vxor.u32 %v2829, 2147483648
        %v2862 = vxor.u32 %v2830, 2147483648
        %v2863 = vxor.u32 %v2831, 2147483648
        %v2864 = vxor.u32 %v2832, 2147483648
        %v2865 = vxor.u32 %v2833, 2147483648
        %v2866 = vxor.u32 %v2834, 2147483648
        %v2867 = vxor.u32 %v2835, 2147483648
        %v2868 = vxor.u32 %v2836, 2147483648
        %v2869 = vxor.u32 %v2837, 2147483648
        %v2870 = vxor.u32 %v2838, 2147483648
        %v2871 = vxor.u32 %v2839, 2147483648
        %v2872 = vxor.u32 %v2840, 2147483648
        %v2873 = vxor.u32 %v2841, 2147483648
        %v2874 = vxor.u32 %v2842, 2147483648
        %v2875 = vxor.u32 %v2843, 2147483648
        %v2876 = vxor.u32 %v2844, 2147483648
        %v2877 = vxor.u32 %v2845, 2147483648
        %v2878 = vxor.u32 %v2846, 2147483648
        %v2879 = vxor.u32 %v2847, 2147483648
        %v2880 = vxor.u32 %v2848, 2147483648
        %v2881 = vxor.u32 %v2849, 2147483648
        %v2882 = vxor.u32 %v2850, 2147483648
        %v2883 = vxor.u32 %v2851, 2147483648
        %v2884 = vxor.u32 %v2852, 2147483648
        %v2885 = vxor.u32 %v2853, 2147483648
        %v2886 = vxor.u32 %v2854, 2147483648
        %v2887 = vxor.u32 %v2855, 2147483648
        %v2888 = vxor.u32 %v2856, 2147483648
        %v2889 = vxor.u32 %v2857, 2147483648
        %v2890 = vxor.u32 %v2858, 2147483648
        %v2891 = vxor.u32 %v2859, 2147483648
        %v2892 = vxor.u32 %v2860, 2147483648
        %v2893 = vmul.f32 %v2861, 1.442695
        %v2894 = vpow.pop %v2893
        %v2895 = vmul.f32 %v2862, 1.442695
        %v2896 = vpow.pop %v2895
        %v2897 = vmul.f32 %v2863, 1.442695
        %v2898 = vpow.pop %v2897
        %v2899 = vmul.f32 %v2864, 1.442695
        %v2900 = vpow.pop %v2899
        %v2901 = vmul.f32 %v2865, 1.442695
        %v2902 = vpow.pop %v2901
        %v2903 = vmul.f32 %v2866, 1.442695
        %v2904 = vpow.pop %v2903
        %v2905 = vmul.f32 %v2867, 1.442695
        %v2906 = vpow.pop %v2905
        %v2907 = vmul.f32 %v2868, 1.442695
        %v2908 = vpow.pop %v2907
        %v2909 = vmul.f32 %v2869, 1.442695
        %v2910 = vpow.pop %v2909
        %v2911 = vmul.f32 %v2870, 1.442695
        %v2912 = vpow.pop %v2911
        %v2913 = vmul.f32 %v2871, 1.442695
        %v2914 = vpow.pop %v2913
        %v2915 = vmul.f32 %v2872, 1.442695
        %v2916 = vpow.pop %v2915
        %v2917 = vmul.f32 %v2873, 1.442695
        %v2918 = vpow.pop %v2917
        %v2919 = vmul.f32 %v2874, 1.442695
        %v2920 = vpow.pop %v2919
        %v2921 = vmul.f32 %v2875, 1.442695
        %v2922 = vpow.pop %v2921
        %v2923 = vmul.f32 %v2876, 1.442695
        %v2924 = vpow.pop %v2923
        %v2925 = vmul.f32 %v2877, 1.442695
        %v2926 = vpow.pop %v2925
        %v2927 = vmul.f32 %v2878, 1.442695
        %v2928 = vpow.pop %v2927
        %v2929 = vmul.f32 %v2879, 1.442695
        %v2930 = vpow.pop %v2929
        %v2931 = vmul.f32 %v2880, 1.442695
        %v2932 = vpow.pop %v2931
        %v2933 = vmul.f32 %v2881, 1.442695
        %v2934 = vpow.pop %v2933
        %v2935 = vmul.f32 %v2882, 1.442695
        %v2936 = vpow.pop %v2935
        %v2937 = vmul.f32 %v2883, 1.442695
        %v2938 = vpow.pop %v2937
        %v2939 = vmul.f32 %v2884, 1.442695
        %v2940 = vpow.pop %v2939
        %v2941 = vmul.f32 %v2885, 1.442695
        %v2942 = vpow.pop %v2941
        %v2943 = vmul.f32 %v2886, 1.442695
        %v2944 = vpow.pop %v2943
        %v2945 = vmul.f32 %v2887, 1.442695
        %v2946 = vpow.pop %v2945
        %v2947 = vmul.f32 %v2888, 1.442695
        %v2948 = vpow.pop %v2947
        %v2949 = vmul.f32 %v2889, 1.442695
        %v2950 = vpow.pop %v2949
        %v2951 = vmul.f32 %v2890, 1.442695
        %v2952 = vpow.pop %v2951
        %v2953 = vmul.f32 %v2891, 1.442695
        %v2954 = vpow.pop %v2953
        %v2955 = vmul.f32 %v2892, 1.442695
        %v2956 = vpow.pop %v2955
        %v2957 = vadd.f32 %v2894, 1.0
        %v2958 = vadd.f32 %v2896, 1.0
        %v2959 = vadd.f32 %v2898, 1.0
        %v2960 = vadd.f32 %v2900, 1.0
        %v2961 = vadd.f32 %v2902, 1.0
        %v2962 = vadd.f32 %v2904, 1.0
        %v2963 = vadd.f32 %v2906, 1.0
        %v2964 = vadd.f32 %v2908, 1.0
        %v2965 = vadd.f32 %v2910, 1.0
        %v2966 = vadd.f32 %v2912, 1.0
        %v2967 = vadd.f32 %v2914, 1.0
        %v2968 = vadd.f32 %v2916, 1.0
        %v2969 = vadd.f32 %v2918, 1.0
        %v2970 = vadd.f32 %v2920, 1.0
        %v2971 = vadd.f32 %v2922, 1.0
        %v2972 = vadd.f32 %v2924, 1.0
        %v2973 = vadd.f32 %v2926, 1.0
        %v2974 = vadd.f32 %v2928, 1.0
        %v2975 = vadd.f32 %v2930, 1.0
        %v2976 = vadd.f32 %v2932, 1.0
        %v2977 = vadd.f32 %v2934, 1.0
        %v2978 = vadd.f32 %v2936, 1.0
        %v2979 = vadd.f32 %v2938, 1.0
        %v2980 = vadd.f32 %v2940, 1.0
        %v2981 = vadd.f32 %v2942, 1.0
        %v2982 = vadd.f32 %v2944, 1.0
        %v2983 = vadd.f32 %v2946, 1.0
        %v2984 = vadd.f32 %v2948, 1.0
        %v2985 = vadd.f32 %v2950, 1.0
        %v2986 = vadd.f32 %v2952, 1.0
        %v2987 = vadd.f32 %v2954, 1.0
        %v2988 = vadd.f32 %v2956, 1.0
        %v2989 = vrcp.pop %v2957
        %v2990 = vmul.f32 1.0, %v2989
        %v2991 = vrcp.pop %v2958
        %v2992 = vmul.f32 1.0, %v2991
        %v2993 = vrcp.pop %v2959
        %v2994 = vmul.f32 1.0, %v2993
        %v2995 = vrcp.pop %v2960
        %v2996 = vmul.f32 1.0, %v2995
        %v2997 = vrcp.pop %v2961
        %v2998 = vmul.f32 1.0, %v2997
        %v2999 = vrcp.pop %v2962
        %v3000 = vmul.f32 1.0, %v2999
        %v3001 = vrcp.pop %v2963
        %v3002 = vmul.f32 1.0, %v3001
        %v3003 = vrcp.pop %v2964
        %v3004 = vmul.f32 1.0, %v3003
        %v3005 = vrcp.pop %v2965
        %v3006 = vmul.f32 1.0, %v3005
        %v3007 = vrcp.pop %v2966
        %v3008 = vmul.f32 1.0, %v3007
        %v3009 = vrcp.pop %v2967
        %v3010 = vmul.f32 1.0, %v3009
        %v3011 = vrcp.pop %v2968
        %v3012 = vmul.f32 1.0, %v3011
        %v3013 = vrcp.pop %v2969
        %v3014 = vmul.f32 1.0, %v3013
        %v3015 = vrcp.pop %v2970
        %v3016 = vmul.f32 1.0, %v3015
        %v3017 = vrcp.pop %v2971
        %v3018 = vmul.f32 1.0, %v3017
        %v3019 = vrcp.pop %v2972
        %v3020 = vmul.f32 1.0, %v3019
        %v3021 = vrcp.pop %v2973
        %v3022 = vmul.f32 1.0, %v3021
        %v3023 = vrcp.pop %v2974
        %v3024 = vmul.f32 1.0, %v3023
        %v3025 = vrcp.pop %v2975
        %v3026 = vmul.f32 1.0, %v3025
        %v3027 = vrcp.pop %v2976
        %v3028 = vmul.f32 1.0, %v3027
        %v3029 = vrcp.pop %v2977
        %v3030 = vmul.f32 1.0, %v3029
        %v3031 = vrcp.pop %v2978
        %v3032 = vmul.f32 1.0, %v3031
        %v3033 = vrcp.pop %v2979
        %v3034 = vmul.f32 1.0, %v3033
        %v3035 = vrcp.pop %v2980
        %v3036 = vmul.f32 1.0, %v3035
        %v3037 = vrcp.pop %v2981
        %v3038 = vmul.f32 1.0, %v3037
        %v3039 = vrcp.pop %v2982
        %v3040 = vmul.f32 1.0, %v3039
        %v3041 = vrcp.pop %v2983
        %v3042 = vmul.f32 1.0, %v3041
        %v3043 = vrcp.pop %v2984
        %v3044 = vmul.f32 1.0, %v3043
        %v3045 = vrcp.pop %v2985
        %v3046 = vmul.f32 1.0, %v3045
        %v3047 = vrcp.pop %v2986
        %v3048 = vmul.f32 1.0, %v3047
        %v3049 = vrcp.pop %v2987
        %v3050 = vmul.f32 1.0, %v3049
        %v3051 = vrcp.pop %v2988
        %v3052 = vmul.f32 1.0, %v3051
        %v3053 = vmul.f32 %v2829, %v2990
        %v3054 = vmul.f32 %v2830, %v2992
        %v3055 = vmul.f32 %v2831, %v2994
        %v3056 = vmul.f32 %v2832, %v2996
        %v3057 = vmul.f32 %v2833, %v2998
        %v3058 = vmul.f32 %v2834, %v3000
        %v3059 = vmul.f32 %v2835, %v3002
        %v3060 = vmul.f32 %v2836, %v3004
        %v3061 = vmul.f32 %v2837, %v3006
        %v3062 = vmul.f32 %v2838, %v3008
        %v3063 = vmul.f32 %v2839, %v3010
        %v3064 = vmul.f32 %v2840, %v3012
        %v3065 = vmul.f32 %v2841, %v3014
        %v3066 = vmul.f32 %v2842, %v3016
        %v3067 = vmul.f32 %v2843, %v3018
        %v3068 = vmul.f32 %v2844, %v3020
        %v3069 = vmul.f32 %v2845, %v3022
        %v3070 = vmul.f32 %v2846, %v3024
        %v3071 = vmul.f32 %v2847, %v3026
        %v3072 = vmul.f32 %v2848, %v3028
        %v3073 = vmul.f32 %v2849, %v3030
        %v3074 = vmul.f32 %v2850, %v3032
        %v3075 = vmul.f32 %v2851, %v3034
        %v3076 = vmul.f32 %v2852, %v3036
        %v3077 = vmul.f32 %v2853, %v3038
        %v3078 = vmul.f32 %v2854, %v3040
        %v3079 = vmul.f32 %v2855, %v3042
        %v3080 = vmul.f32 %v2856, %v3044
        %v3081 = vmul.f32 %v2857, %v3046
        %v3082 = vmul.f32 %v2858, %v3048
        %v3083 = vmul.f32 %v2859, %v3050
        %v3084 = vmul.f32 %v2860, %v3052
        %3085 = vst [vmem:[%s190] sm:$0xff] %v3053
        %3086 = vst [vmem:[%s190 + $0x8] sm:$0xff] %v3054
        %3087 = vst [vmem:[%s190 + $0x10] sm:$0xff] %v3055
        %3088 = vst [vmem:[%s190 + $0x18] sm:$0xff] %v3056
        %3089 = vst [vmem:[%s190 + $0x20] sm:$0xff] %v3057
        %3090 = vst [vmem:[%s190 + $0x28] sm:$0xff] %v3058
        %3091 = vst [vmem:[%s190 + $0x30] sm:$0xff] %v3059
        %3092 = vst [vmem:[%s190 + $0x38] sm:$0xff] %v3060
        %3093 = vst [vmem:[%s190 + $0x40] sm:$0xff] %v3061
        %3094 = vst [vmem:[%s190 + $0x48] sm:$0xff] %v3062
        %3095 = vst [vmem:[%s190 + $0x50] sm:$0xff] %v3063
        %3096 = vst [vmem:[%s190 + $0x58] sm:$0xff] %v3064
        %3097 = vst [vmem:[%s190 + $0x60] sm:$0xff] %v3065
        %3098 = vst [vmem:[%s190 + $0x68] sm:$0xff] %v3066
        %3099 = vst [vmem:[%s190 + $0x70] sm:$0xff] %v3067
        %3100 = vst [vmem:[%s190 + $0x78] sm:$0xff] %v3068
        %3101 = vst [vmem:[%s190 + $0x80] sm:$0xff] %v3069
        %3102 = vst [vmem:[%s190 + $0x88] sm:$0xff] %v3070
        %3103 = vst [vmem:[%s190 + $0x90] sm:$0xff] %v3071
        %3104 = vst [vmem:[%s190 + $0x98] sm:$0xff] %v3072
        %3105 = vst [vmem:[%s190 + $0xa0] sm:$0xff] %v3073
        %3106 = vst [vmem:[%s190 + $0xa8] sm:$0xff] %v3074
        %3107 = vst [vmem:[%s190 + $0xb0] sm:$0xff] %v3075
        %3108 = vst [vmem:[%s190 + $0xb8] sm:$0xff] %v3076
        %3109 = vst [vmem:[%s190 + $0xc0] sm:$0xff] %v3077
        %3110 = vst [vmem:[%s190 + $0xc8] sm:$0xff] %v3078
        %3111 = vst [vmem:[%s190 + $0xd0] sm:$0xff] %v3079
        %3112 = vst [vmem:[%s190 + $0xd8] sm:$0xff] %v3080
        %3113 = vst [vmem:[%s190 + $0xe0] sm:$0xff] %v3081
        %3114 = vst [vmem:[%s190 + $0xe8] sm:$0xff] %v3082
        %3115 = vst [vmem:[%s190 + $0xf0] sm:$0xff] %v3083
        %3116 = vst [vmem:[%s190 + $0xf8] sm:$0xff] %v3084
        %s3117 = sand.u32 %s115, 1
        %s3118 = scalar_lea.sflag [#allocation3], %s3117
        %s3119 = sand.u32 %s115, 1
        %s3120 = smul.addr %s3119, 256
        %s3121 = scalar_lea.vmem [#allocation2], %s3120
        // Predicated region
        $region37: #{tpu_custom_call.1} parent=35 // pred_check
          %p3122 = pneg %p125
        $region38: #{tpu_custom_call.1} parent=35 // pred_check_branch
          %3124 = sbr.rel (%p3122) target = $region40
        $region39: #{tpu_custom_call.1} parent=35 // pred_region
          %s3125 = smul.u32 32, %s18
          %s3127 = ssub.s32 4096, 4096
          %3128 = vsyncadd %s3118, %s3127
          %s3129 = smul.addr %s3125, 128
          %s3130 = scalar_lea.hbm %s4, %s3129
          %s3131 = sshll.u32 %s3121, 4
          %s3132 = int_to_ptr.vmem [resolvable:$true] %s3131
          %3137 = dma.vmem_to_hbm [thread:$0]  %s3132, 4096, %s3130, %s3118, 128, 128, 8
        $region40: #{tpu_custom_call.1} parent=35 // pred_fallthru
          _
      $region36: #{tpu_custom_call.1} parent=5 // pred_fallthru
        _
      %p3138 = scmp.le.s32.totalorder 2, %s13
      // Predicated region
      $region41: #{tpu_custom_call.1} parent=5 // pred_check
        %p3139 = pneg %p3138
      $region42: #{tpu_custom_call.1} parent=5 // pred_check_branch
        %3141 = sbr.rel (%p3139) target = $region44
      $region43: #{tpu_custom_call.1} parent=5 // pred_region
        %s3142 = ssub.s32 %s13, 2
        // Predicated region
        $region45: #{tpu_custom_call.1} parent=43 // pred_check
          %p3143 = pneg %p131
        $region46: #{tpu_custom_call.1} parent=43 // pred_check_branch
          %3145 = sbr.rel (%p3143) target = $region48
        $region47: #{tpu_custom_call.1} parent=43 // pred_region
          %s3146 = sand.u32 %s116, 1
          %s3147 = scalar_lea.sflag [#allocation3], %s3146
          %s3148 = sand.u32 %s116, 1
          %s3149 = smul.addr %s3148, 256
          %s3150 = scalar_lea.vmem [#allocation2], %s3149
          %3151 = dma.done %s3147, 4096
        $region48: #{tpu_custom_call.1} parent=43 // pred_fallthru
          _
      $region44: #{tpu_custom_call.1} parent=5 // pred_fallthru
        _
    $region6: #{tpu_custom_call.1} parent=1 // loop_footer
      %s17 = sadd.s32 1, %s13
    $region7: #{tpu_custom_call.1} parent=1 // loop_footer_branch
      %12 = sbr.rel target = $region3
    $region8: #{tpu_custom_call.1} parent=1 // loop_exit
      _
    %3152 = vsyncpa [#allocation3], 1
    %s3153 = scalar_lea.sflag [#allocation3], 1
    %3154 = vsyncpa %s3153, 1

</llo_original>
